<compile_context>
chip_gen: v6e
topology: v6e:2x2x1
jax: 0.10.0
libtpu: 0.0.40
codegen_flags: <defaults>
</compile_context>

<pallas_src>
import functools

import jax
import jax.numpy as jnp
from jax.experimental import pallas as pl
from jax.experimental.pallas import tpu as pltpu

IN_FEATURES = 1024 * 3     # densenet121 branch of fusionnet
OUT_FEATURES = 14
N_PAD = 128                # lane-dense padded output/weight width
_TB_MAX = 1024             # batch-tile cap (fits v5e/v6e/v7x VMEM comfortably)


def _round_up(x, m):
    return ((x + m - 1) // m) * m


def _choose_tb(B, tb_max):
    """Bucketed batch-tile selection (few recompiles, keeps both v7x TCs busy)."""
    if B <= 256:
        # Bucket small batches to a multiple of 128 -> one compiled variant per
        # bucket instead of per distinct B. (For B below ~64 a plain XLA dot is
        # at parity; Pallas path kept so the kernel is always exercised.)
        return min(tb_max, _round_up(max(B, 1), 128))
    # Aim for >= ~4 grid steps so the "parallel" batch axis can shard across
    # v7x's two TensorCores while tiles stay large enough to hide per-step cost.
    tb = _round_up(pl.cdiv(B, 4), 128)
    return max(128, min(tb, tb_max))


def _fusion_kernel(x_ref, w_ref, b_ref, o_ref):
    # x_ref: (TB, K) native dtype   w_ref: (K, 128) bf16
    # b_ref: (1, 128) f32           o_ref: (TB, 128) f32
    x = x_ref[...].astype(w_ref.dtype)          # in-kernel cast (VPU), no extra HBM pass
    logits = jnp.dot(x, w_ref[...], preferred_element_type=jnp.float32)
    logits = logits + b_ref[...]                # broadcast (1, 128) over the tile
    # exp/reciprocal ride the otherwise-idle EUP slot -> free epilogue.
    o_ref[...] = jax.nn.sigmoid(logits).astype(o_ref.dtype)


def prepare_params(weight, bias, compute_dtype=jnp.bfloat16):
    """One-time parameter prep, hoisted out of the per-call path.

    weight: (14, 3072) PyTorch layout -> (3072, 128) kernel layout
            (transposed, cast, zero-padded to 128 lanes for a contiguous DMA).
    bias:   (14,) -> (1, 128) f32, zero-padded (padded lanes are sliced off).
    """
    w_t = jnp.asarray(weight).T.astype(compute_dtype)            # (K, 14)
    w_pad = jnp.zeros((IN_FEATURES, N_PAD), dtype=compute_dtype)
    w_pad = w_pad.at[:, :OUT_FEATURES].set(w_t)
    b_pad = jnp.zeros((1, N_PAD), dtype=jnp.float32)
    b_pad = b_pad.at[0, :OUT_FEATURES].set(jnp.asarray(bias, dtype=jnp.float32))
    return w_pad, b_pad


@functools.partial(jax.jit, static_argnames=("tb_max",))
def fusionnet_forward(x, w_pad, b_pad, *, tb_max=_TB_MAX):
    """x: (B, ...) with 3072 features/row (any dtype); w_pad: (3072, 128); b_pad: (1, 128)."""
    B = x.shape[0]
    x = x.reshape(B, IN_FEATURES)               # .view(B, -1); NO dtype cast here

    tb = _choose_tb(B, tb_max)
    grid = (pl.cdiv(B, tb),)                    # no jnp.pad; tail tile masked by Pallas

    cost = pl.CostEstimate(
        flops=2 * B * IN_FEATURES * N_PAD,
        transcendentals=B * N_PAD,
        bytes_accessed=(x.size * x.dtype.itemsize
                        + w_pad.size * w_pad.dtype.itemsize
                        + b_pad.size * 4
                        + B * N_PAD * 4),
    )

    y = pl.pallas_call(
        _fusion_kernel,
        out_shape=jax.ShapeDtypeStruct((B, N_PAD), jnp.float32),
        grid_spec=pl.GridSpec(
            grid=grid,
            in_specs=[
                # x: streamed per batch tile (double-buffered by Pallas)
                pl.BlockSpec((tb, IN_FEATURES), lambda i: (i, 0)),
                # weight / bias: same block every step -> VMEM-resident
                pl.BlockSpec((IN_FEATURES, N_PAD), lambda i: (0, 0)),
                pl.BlockSpec((1, N_PAD), lambda i: (0, 0)),
            ],
            # lane-dense (N=128) output -> unmasked vst stores
            out_specs=pl.BlockSpec((tb, N_PAD), lambda i: (i, 0)),
        ),
        compiler_params=pltpu.CompilerParams(
            # batch tiles are independent; shards across TCs on v7x,
            # near-no-op (harmless) on single-TC v5e/v6e.
            dimension_semantics=("parallel",),
            vmem_limit_bytes=48 * 1024 * 1024,  # explicit: v5e default is 16 MiB
        ),
        cost_estimate=cost,
    )(x, w_pad, b_pad)

    y = y[:, :OUT_FEATURES]                     # drop padded lanes (tiny vs x stream)
    # fusionnet returns the same tensor three times.
    return (y, y, y)


if __name__ == "__main__":
    key = jax.random.PRNGKey(0)
    kx, kw, kb = jax.random.split(key, 3)

    # Deterministic Linear(3072, 14) parameters (synthetic, not a checkpoint).
    weight = jax.random.normal(kw, (OUT_FEATURES, IN_FEATURES),
                               dtype=jnp.float32) * 0.02
    bias = jax.random.normal(kb, (OUT_FEATURES,), dtype=jnp.float32) * 0.02

    # One-time param prep (transpose + cast + lane-pad) hoisted out of call path.
    w_pad, b_pad = prepare_params(weight, bias)

    def ref_fn(xf):
        return jax.nn.sigmoid(xf.reshape(xf.shape[0], -1) @ weight.T + bias)

    # --- small batch, unflattened input (exercises .view + bucketed single tile)
    B = 2
    x = jax.random.normal(kx, (B, 3, 1024), dtype=jnp.float32)
    out = jax.block_until_ready(fusionnet_forward(x, w_pad, b_pad))
    assert all(o.shape == (B, OUT_FEATURES) for o in out)
    assert jnp.allclose(out[0], ref_fn(x), atol=2e-2), "mismatch vs f32 reference (B=2)"
    assert jnp.array_equal(out[0], out[1]) and jnp.array_equal(out[0], out[2])

    # --- ragged multi-tile batch (exercises cdiv grid + masked tail writeback)
    B2 = 300
    x2 = jax.random.normal(kx, (B2, IN_FEATURES), dtype=jnp.float32)
    out2 = jax.block_until_ready(fusionnet_forward(x2, w_pad, b_pad))
    assert out2[0].shape == (B2, OUT_FEATURES)
    assert jnp.allclose(out2[0], ref_fn(x2), atol=2e-2), "mismatch vs f32 reference (B=300)"

    print("KERNEL_OK")
</pallas_src>

<mosaic_0001>
module attributes {stable_mosaic.version = 11 : i64} {
  func.func @_fusion_kernel(%arg0: i32, %arg1: memref<128x3072xf32, #tpu.memory_space<vmem>>, %arg2: memref<3072x128xbf16, #tpu.memory_space<vmem>>, %arg3: memref<1x128xf32, #tpu.memory_space<vmem>>, %arg4: memref<128x128xf32, #tpu.memory_space<vmem>>) attributes {dimension_semantics = [#tpu.dimension_semantics<parallel>], iteration_bounds = array<i64: 1>, scalar_prefetch = 0 : i64, scratch_operands = 0 : i64, tpu.core_type = #tpu.core_type<tc>, window_params = [{transform_indices = @transform_0, window_bounds = array<i64: 128, 3072>}, {pipeline_mode = #tpu.pipeline_mode<synchronous>, transform_indices = @transform_1, window_bounds = array<i64: 3072, 128>}, {pipeline_mode = #tpu.pipeline_mode<synchronous>, transform_indices = @transform_2, window_bounds = array<i64: 1, 128>}, {transform_indices = @transform_3, window_bounds = array<i64: 128, 128>}]} {
    %c0 = arith.constant 0 : index
    %c0_0 = arith.constant 0 : index
    %0 = vector.load %arg1[%c0, %c0_0] : memref<128x3072xf32, #tpu.memory_space<vmem>>, vector<128x3072xf32>
    %1 = arith.truncf %0 : vector<128x3072xf32> to vector<128x3072xbf16>
    %c0_1 = arith.constant 0 : index
    %c0_2 = arith.constant 0 : index
    %2 = vector.load %arg2[%c0_1, %c0_2] : memref<3072x128xbf16, #tpu.memory_space<vmem>>, vector<3072x128xbf16>
    %cst = arith.constant dense<0.000000e+00> : vector<128x128xf32>
    %3 = tpu.matmul %1, %2, %cst {dimension_numbers = #tpu.dot_dimension_numbers<[1], [0], [0], [1], [0, 0, 1, 1], [], []>} : vector<128x3072xbf16>, vector<3072x128xbf16>, vector<128x128xf32> -> vector<128x128xf32>
    %c0_3 = arith.constant 0 : index
    %c0_4 = arith.constant 0 : index
    %4 = vector.load %arg3[%c0_3, %c0_4] : memref<1x128xf32, #tpu.memory_space<vmem>>, vector<1x128xf32>
    %5 = vector.broadcast %4 : vector<1x128xf32> to vector<128x128xf32>
    %6 = arith.addf %3, %5 : vector<128x128xf32>
    %7 = arith.negf %6 : vector<128x128xf32>
    %8 = math.exp %7 : vector<128x128xf32>
    %cst_5 = arith.constant 1.000000e+00 : f32
    %9 = vector.broadcast %cst_5 : f32 to vector<128x128xf32>
    %10 = arith.addf %9, %8 : vector<128x128xf32>
    %11 = arith.divf %9, %10 : vector<128x128xf32>
    %c0_6 = arith.constant 0 : index
    %c0_7 = arith.constant 0 : index
    %12 = vector.load %arg4[%c0_6, %c0_7] : memref<128x128xf32, #tpu.memory_space<vmem>>, vector<128x128xf32>
    tpu.vector_store %arg4[%c0_6, %c0_7], %11 {strides = array<i32>} : memref<128x128xf32, #tpu.memory_space<vmem>>, vector<128x128xf32>,
    return
  }
  func.func @transform_0(%arg0: i32) -> (i32, i32) {
    %c0_i32 = arith.constant 0 : i32
    %c0_i32_0 = arith.constant 0 : i32
    return %arg0, %c0_i32 : i32, i32
  }
  func.func @transform_1(%arg0: i32) -> (i32, i32) {
    %c0_i32 = arith.constant 0 : i32
    %c0_i32_0 = arith.constant 0 : i32
    %c0_i32_1 = arith.constant 0 : i32
    return %c0_i32, %c0_i32_0 : i32, i32
  }
  func.func @transform_2(%arg0: i32) -> (i32, i32) {
    %c0_i32 = arith.constant 0 : i32
    %c0_i32_0 = arith.constant 0 : i32
    %c0_i32_1 = arith.constant 0 : i32
    return %c0_i32, %c0_i32_0 : i32, i32
  }
  func.func @transform_3(%arg0: i32) -> (i32, i32) {
    %c0_i32 = arith.constant 0 : i32
    %c0_i32_0 = arith.constant 0 : i32
    return %arg0, %c0_i32 : i32, i32
  }
}

</mosaic_0001>

<llo_original>
// kernel: fusionnet_forward.1
$region0: #{fusionnet_forward.1}
  #allocation0 [shape = 'u32[]', space=smem, size = 0x4, offset = 0x4, fixed_abs, tag = 'smem constant byte address 0x4 - core index']
  #allocation1 [shape = 'u32[144,128]{1,0:T(1,128)}', space=vmem, size = 0x12000, scoped, tag = 'internal scratch']
  %s0 = inlined_call_operand.hbm [shape: f32[2,3072], index: 0, kind: input, shape index: {}]
  %s1 = inlined_call_operand.hbm [shape: bf16[3072,128], index: 1, kind: input, shape index: {}]
  %s2 = inlined_call_operand.vmem [shape: f32[1,128], index: 2, kind: input, shape index: {}]
  %s3 = inlined_call_operand.vmem [shape: f32[2,128], index: 3, kind: output, shape index: {}]
  %s4 = sld [smem:[#allocation0]]
  $region60: #{fusionnet_forward.1} parent=0
    _
  %s6 = ssub.s32 1, %s4
  %s7 = scalar_select 0, %s6, %s4
  $region1: #{fusionnet_forward.1} parent=0
    #allocation2 [shape = 'u8[1572864]{0}', space=vmem, size = 0x180000, scoped, tag = 'input window, operand 0, single buffered']
    #allocation3 [shape = 's32[1]{0}', space=sflag, size = 0x4, scoped, tag = 'scoped memory for fusionnet_forward.1']
    #allocation4 [shape = 'u8[786432]{0}', space=vmem, size = 0xc0000, scoped, tag = 'input window, operand 1, single buffered']
    #allocation5 [shape = 's32[1]{0}', space=sflag, size = 0x4, scoped, tag = 'scoped memory for fusionnet_forward.1']
    #allocation6 [shape = 'u8[65536]{0}', space=vmem, size = 0x10000, scoped, tag = 'output window, operand 0, single buffered']
    %8 = vsyncpa [#allocation3], 0
    %9 = vsyncpa [#allocation5], 0
    // Predicated region
    $region2: #{fusionnet_forward.1} parent=1 // pred_check
      _
    $region3: #{fusionnet_forward.1} parent=1 // pred_check_branch
      %11 = sbr.rel (0) target = $region5
    $region4: #{fusionnet_forward.1} parent=1 // pred_region
      %s13 = ssub.s32 49152, 768
      %14 = vsyncadd [#allocation3], %s13
      %s15 = sshll.u32 [#allocation2], 4
      %s16 = int_to_ptr.vmem [resolvable:$true] %s15
      %21 = dma.hbm_to_vmem [thread:$0]  %s0, 768, %s16, [#allocation3], 768, 768, 48
    $region5: #{fusionnet_forward.1} parent=1 // pred_fallthru
      _
    // Predicated region
    $region6: #{fusionnet_forward.1} parent=1 // pred_check
      _
    $region7: #{fusionnet_forward.1} parent=1 // pred_check_branch
      %23 = sbr.rel (0) target = $region9
    $region8: #{fusionnet_forward.1} parent=1 // pred_region
      %s25 = ssub.s32 24576, 24576
      %26 = vsyncadd [#allocation5], %s25
      %s27 = sshll.u32 [#allocation4], 4
      %s28 = int_to_ptr.vmem [resolvable:$true] %s27
      %33 = dma.hbm_to_vmem [thread:$0]  %s1, 24576, %s28, [#allocation5], 64, 64, 4
    $region9: #{fusionnet_forward.1} parent=1 // pred_fallthru
      _
    // Predicated region
    $region10: #{fusionnet_forward.1} parent=1 // pred_check
      _
    $region11: #{fusionnet_forward.1} parent=1 // pred_check_branch
      %35 = sbr.rel (0) target = $region13
    $region12: #{fusionnet_forward.1} parent=1 // pred_region
      _
    $region13: #{fusionnet_forward.1} parent=1 // pred_fallthru
      _
    // Predicated region
    $region14: #{fusionnet_forward.1} parent=1 // pred_check
      _
    $region15: #{fusionnet_forward.1} parent=1 // pred_check_branch
      %37 = sbr.rel (0) target = $region17
    $region16: #{fusionnet_forward.1} parent=1 // pred_region
      %38 = dma.done [#allocation3], 49152
    $region17: #{fusionnet_forward.1} parent=1 // pred_fallthru
      _
    // Predicated region
    $region18: #{fusionnet_forward.1} parent=1 // pred_check
      _
    $region19: #{fusionnet_forward.1} parent=1 // pred_check_branch
      %40 = sbr.rel (0) target = $region21
    $region20: #{fusionnet_forward.1} parent=1 // pred_region
      %41 = dma.done [#allocation5], 24576
    $region21: #{fusionnet_forward.1} parent=1 // pred_fallthru
      _
    %v43 = vld [vmem:[#allocation2] sm:$0xff]
    %v44 = vld [vmem:[#allocation2 + $0x8] sm:$0xff]
    %v45 = vld [vmem:[#allocation2 + $0x10] sm:$0xff]
    %v46 = vld [vmem:[#allocation2 + $0x18] sm:$0xff]
    %v47 = vld [vmem:[#allocation2 + $0x20] sm:$0xff]
    %v48 = vld [vmem:[#allocation2 + $0x28] sm:$0xff]
    %v49 = vld [vmem:[#allocation2 + $0x30] sm:$0xff]
    %v50 = vld [vmem:[#allocation2 + $0x38] sm:$0xff]
    %v51 = vld [vmem:[#allocation2 + $0x40] sm:$0xff]
    %v52 = vld [vmem:[#allocation2 + $0x48] sm:$0xff]
    %v53 = vld [vmem:[#allocation2 + $0x50] sm:$0xff]
    %v54 = vld [vmem:[#allocation2 + $0x58] sm:$0xff]
    %v55 = vld [vmem:[#allocation2 + $0x60] sm:$0xff]
    %v56 = vld [vmem:[#allocation2 + $0x68] sm:$0xff]
    %v57 = vld [vmem:[#allocation2 + $0x70] sm:$0xff]
    %v58 = vld [vmem:[#allocation2 + $0x78] sm:$0xff]
    %v59 = vld [vmem:[#allocation2 + $0x80] sm:$0xff]
    %v60 = vld [vmem:[#allocation2 + $0x88] sm:$0xff]
    %v61 = vld [vmem:[#allocation2 + $0x90] sm:$0xff]
    %v62 = vld [vmem:[#allocation2 + $0x98] sm:$0xff]
    %v63 = vld [vmem:[#allocation2 + $0xa0] sm:$0xff]
    %v64 = vld [vmem:[#allocation2 + $0xa8] sm:$0xff]
    %v65 = vld [vmem:[#allocation2 + $0xb0] sm:$0xff]
    %v66 = vld [vmem:[#allocation2 + $0xb8] sm:$0xff]
    %v67 = vld [vmem:[#allocation2 + $0xc0] sm:$0xff]
    %v68 = vld [vmem:[#allocation2 + $0xc8] sm:$0xff]
    %v69 = vld [vmem:[#allocation2 + $0xd0] sm:$0xff]
    %v70 = vld [vmem:[#allocation2 + $0xd8] sm:$0xff]
    %v71 = vld [vmem:[#allocation2 + $0xe0] sm:$0xff]
    %v72 = vld [vmem:[#allocation2 + $0xe8] sm:$0xff]
    %v73 = vld [vmem:[#allocation2 + $0xf0] sm:$0xff]
    %v74 = vld [vmem:[#allocation2 + $0xf8] sm:$0xff]
    %v75 = vld [vmem:[#allocation2 + $0x100] sm:$0xff]
    %v76 = vld [vmem:[#allocation2 + $0x108] sm:$0xff]
    %v77 = vld [vmem:[#allocation2 + $0x110] sm:$0xff]
    %v78 = vld [vmem:[#allocation2 + $0x118] sm:$0xff]
    %v79 = vld [vmem:[#allocation2 + $0x120] sm:$0xff]
    %v80 = vld [vmem:[#allocation2 + $0x128] sm:$0xff]
    %v81 = vld [vmem:[#allocation2 + $0x130] sm:$0xff]
    %v82 = vld [vmem:[#allocation2 + $0x138] sm:$0xff]
    %v83 = vld [vmem:[#allocation2 + $0x140] sm:$0xff]
    %v84 = vld [vmem:[#allocation2 + $0x148] sm:$0xff]
    %v85 = vld [vmem:[#allocation2 + $0x150] sm:$0xff]
    %v86 = vld [vmem:[#allocation2 + $0x158] sm:$0xff]
    %v87 = vld [vmem:[#allocation2 + $0x160] sm:$0xff]
    %v88 = vld [vmem:[#allocation2 + $0x168] sm:$0xff]
    %v89 = vld [vmem:[#allocation2 + $0x170] sm:$0xff]
    %v90 = vld [vmem:[#allocation2 + $0x178] sm:$0xff]
    %v91 = vld [vmem:[#allocation2 + $0x180] sm:$0xff]
    %v92 = vld [vmem:[#allocation2 + $0x188] sm:$0xff]
    %v93 = vld [vmem:[#allocation2 + $0x190] sm:$0xff]
    %v94 = vld [vmem:[#allocation2 + $0x198] sm:$0xff]
    %v95 = vld [vmem:[#allocation2 + $0x1a0] sm:$0xff]
    %v96 = vld [vmem:[#allocation2 + $0x1a8] sm:$0xff]
    %v97 = vld [vmem:[#allocation2 + $0x1b0] sm:$0xff]
    %v98 = vld [vmem:[#allocation2 + $0x1b8] sm:$0xff]
    %v99 = vld [vmem:[#allocation2 + $0x1c0] sm:$0xff]
    %v100 = vld [vmem:[#allocation2 + $0x1c8] sm:$0xff]
    %v101 = vld [vmem:[#allocation2 + $0x1d0] sm:$0xff]
    %v102 = vld [vmem:[#allocation2 + $0x1d8] sm:$0xff]
    %v103 = vld [vmem:[#allocation2 + $0x1e0] sm:$0xff]
    %v104 = vld [vmem:[#allocation2 + $0x1e8] sm:$0xff]
    %v105 = vld [vmem:[#allocation2 + $0x1f0] sm:$0xff]
    %v106 = vld [vmem:[#allocation2 + $0x1f8] sm:$0xff]
    %v107 = vld [vmem:[#allocation2 + $0x200] sm:$0xff]
    %v108 = vld [vmem:[#allocation2 + $0x208] sm:$0xff]
    %v109 = vld [vmem:[#allocation2 + $0x210] sm:$0xff]
    %v110 = vld [vmem:[#allocation2 + $0x218] sm:$0xff]
    %v111 = vld [vmem:[#allocation2 + $0x220] sm:$0xff]
    %v112 = vld [vmem:[#allocation2 + $0x228] sm:$0xff]
    %v113 = vld [vmem:[#allocation2 + $0x230] sm:$0xff]
    %v114 = vld [vmem:[#allocation2 + $0x238] sm:$0xff]
    %v115 = vld [vmem:[#allocation2 + $0x240] sm:$0xff]
    %v116 = vld [vmem:[#allocation2 + $0x248] sm:$0xff]
    %v117 = vld [vmem:[#allocation2 + $0x250] sm:$0xff]
    %v118 = vld [vmem:[#allocation2 + $0x258] sm:$0xff]
    %v119 = vld [vmem:[#allocation2 + $0x260] sm:$0xff]
    %v120 = vld [vmem:[#allocation2 + $0x268] sm:$0xff]
    %v121 = vld [vmem:[#allocation2 + $0x270] sm:$0xff]
    %v122 = vld [vmem:[#allocation2 + $0x278] sm:$0xff]
    %v123 = vld [vmem:[#allocation2 + $0x280] sm:$0xff]
    %v124 = vld [vmem:[#allocation2 + $0x288] sm:$0xff]
    %v125 = vld [vmem:[#allocation2 + $0x290] sm:$0xff]
    %v126 = vld [vmem:[#allocation2 + $0x298] sm:$0xff]
    %v127 = vld [vmem:[#allocation2 + $0x2a0] sm:$0xff]
    %v128 = vld [vmem:[#allocation2 + $0x2a8] sm:$0xff]
    %v129 = vld [vmem:[#allocation2 + $0x2b0] sm:$0xff]
    %v130 = vld [vmem:[#allocation2 + $0x2b8] sm:$0xff]
    %v131 = vld [vmem:[#allocation2 + $0x2c0] sm:$0xff]
    %v132 = vld [vmem:[#allocation2 + $0x2c8] sm:$0xff]
    %v133 = vld [vmem:[#allocation2 + $0x2d0] sm:$0xff]
    %v134 = vld [vmem:[#allocation2 + $0x2d8] sm:$0xff]
    %v135 = vld [vmem:[#allocation2 + $0x2e0] sm:$0xff]
    %v136 = vld [vmem:[#allocation2 + $0x2e8] sm:$0xff]
    %v137 = vld [vmem:[#allocation2 + $0x2f0] sm:$0xff]
    %v138 = vld [vmem:[#allocation2 + $0x2f8] sm:$0xff]
    %v139 = vld [vmem:[#allocation2 + $0x300] sm:$0xff]
    %v140 = vld [vmem:[#allocation2 + $0x308] sm:$0xff]
    %v141 = vld [vmem:[#allocation2 + $0x310] sm:$0xff]
    %v142 = vld [vmem:[#allocation2 + $0x318] sm:$0xff]
    %v143 = vld [vmem:[#allocation2 + $0x320] sm:$0xff]
    %v144 = vld [vmem:[#allocation2 + $0x328] sm:$0xff]
    %v145 = vld [vmem:[#allocation2 + $0x330] sm:$0xff]
    %v146 = vld [vmem:[#allocation2 + $0x338] sm:$0xff]
    %v147 = vld [vmem:[#allocation2 + $0x340] sm:$0xff]
    %v148 = vld [vmem:[#allocation2 + $0x348] sm:$0xff]
    %v149 = vld [vmem:[#allocation2 + $0x350] sm:$0xff]
    %v150 = vld [vmem:[#allocation2 + $0x358] sm:$0xff]
    %v151 = vld [vmem:[#allocation2 + $0x360] sm:$0xff]
    %v152 = vld [vmem:[#allocation2 + $0x368] sm:$0xff]
    %v153 = vld [vmem:[#allocation2 + $0x370] sm:$0xff]
    %v154 = vld [vmem:[#allocation2 + $0x378] sm:$0xff]
    %v155 = vld [vmem:[#allocation2 + $0x380] sm:$0xff]
    %v156 = vld [vmem:[#allocation2 + $0x388] sm:$0xff]
    %v157 = vld [vmem:[#allocation2 + $0x390] sm:$0xff]
    %v158 = vld [vmem:[#allocation2 + $0x398] sm:$0xff]
    %v159 = vld [vmem:[#allocation2 + $0x3a0] sm:$0xff]
    %v160 = vld [vmem:[#allocation2 + $0x3a8] sm:$0xff]
    %v161 = vld [vmem:[#allocation2 + $0x3b0] sm:$0xff]
    %v162 = vld [vmem:[#allocation2 + $0x3b8] sm:$0xff]
    %v163 = vld [vmem:[#allocation2 + $0x3c0] sm:$0xff]
    %v164 = vld [vmem:[#allocation2 + $0x3c8] sm:$0xff]
    %v165 = vld [vmem:[#allocation2 + $0x3d0] sm:$0xff]
    %v166 = vld [vmem:[#allocation2 + $0x3d8] sm:$0xff]
    %v167 = vld [vmem:[#allocation2 + $0x3e0] sm:$0xff]
    %v168 = vld [vmem:[#allocation2 + $0x3e8] sm:$0xff]
    %v169 = vld [vmem:[#allocation2 + $0x3f0] sm:$0xff]
    %v170 = vld [vmem:[#allocation2 + $0x3f8] sm:$0xff]
    %v171 = vld [vmem:[#allocation2 + $0x400] sm:$0xff]
    %v172 = vld [vmem:[#allocation2 + $0x408] sm:$0xff]
    %v173 = vld [vmem:[#allocation2 + $0x410] sm:$0xff]
    %v174 = vld [vmem:[#allocation2 + $0x418] sm:$0xff]
    %v175 = vld [vmem:[#allocation2 + $0x420] sm:$0xff]
    %v176 = vld [vmem:[#allocation2 + $0x428] sm:$0xff]
    %v177 = vld [vmem:[#allocation2 + $0x430] sm:$0xff]
    %v178 = vld [vmem:[#allocation2 + $0x438] sm:$0xff]
    %v179 = vld [vmem:[#allocation2 + $0x440] sm:$0xff]
    %v180 = vld [vmem:[#allocation2 + $0x448] sm:$0xff]
    %v181 = vld [vmem:[#allocation2 + $0x450] sm:$0xff]
    %v182 = vld [vmem:[#allocation2 + $0x458] sm:$0xff]
    %v183 = vld [vmem:[#allocation2 + $0x460] sm:$0xff]
    %v184 = vld [vmem:[#allocation2 + $0x468] sm:$0xff]
    %v185 = vld [vmem:[#allocation2 + $0x470] sm:$0xff]
    %v186 = vld [vmem:[#allocation2 + $0x478] sm:$0xff]
    %v187 = vld [vmem:[#allocation2 + $0x480] sm:$0xff]
    %v188 = vld [vmem:[#allocation2 + $0x488] sm:$0xff]
    %v189 = vld [vmem:[#allocation2 + $0x490] sm:$0xff]
    %v190 = vld [vmem:[#allocation2 + $0x498] sm:$0xff]
    %v191 = vld [vmem:[#allocation2 + $0x4a0] sm:$0xff]
    %v192 = vld [vmem:[#allocation2 + $0x4a8] sm:$0xff]
    %v193 = vld [vmem:[#allocation2 + $0x4b0] sm:$0xff]
    %v194 = vld [vmem:[#allocation2 + $0x4b8] sm:$0xff]
    %v195 = vld [vmem:[#allocation2 + $0x4c0] sm:$0xff]
    %v196 = vld [vmem:[#allocation2 + $0x4c8] sm:$0xff]
    %v197 = vld [vmem:[#allocation2 + $0x4d0] sm:$0xff]
    %v198 = vld [vmem:[#allocation2 + $0x4d8] sm:$0xff]
    %v199 = vld [vmem:[#allocation2 + $0x4e0] sm:$0xff]
    %v200 = vld [vmem:[#allocation2 + $0x4e8] sm:$0xff]
    %v201 = vld [vmem:[#allocation2 + $0x4f0] sm:$0xff]
    %v202 = vld [vmem:[#allocation2 + $0x4f8] sm:$0xff]
    %v203 = vld [vmem:[#allocation2 + $0x500] sm:$0xff]
    %v204 = vld [vmem:[#allocation2 + $0x508] sm:$0xff]
    %v205 = vld [vmem:[#allocation2 + $0x510] sm:$0xff]
    %v206 = vld [vmem:[#allocation2 + $0x518] sm:$0xff]
    %v207 = vld [vmem:[#allocation2 + $0x520] sm:$0xff]
    %v208 = vld [vmem:[#allocation2 + $0x528] sm:$0xff]
    %v209 = vld [vmem:[#allocation2 + $0x530] sm:$0xff]
    %v210 = vld [vmem:[#allocation2 + $0x538] sm:$0xff]
    %v211 = vld [vmem:[#allocation2 + $0x540] sm:$0xff]
    %v212 = vld [vmem:[#allocation2 + $0x548] sm:$0xff]
    %v213 = vld [vmem:[#allocation2 + $0x550] sm:$0xff]
    %v214 = vld [vmem:[#allocation2 + $0x558] sm:$0xff]
    %v215 = vld [vmem:[#allocation2 + $0x560] sm:$0xff]
    %v216 = vld [vmem:[#allocation2 + $0x568] sm:$0xff]
    %v217 = vld [vmem:[#allocation2 + $0x570] sm:$0xff]
    %v218 = vld [vmem:[#allocation2 + $0x578] sm:$0xff]
    %v219 = vld [vmem:[#allocation2 + $0x580] sm:$0xff]
    %v220 = vld [vmem:[#allocation2 + $0x588] sm:$0xff]
    %v221 = vld [vmem:[#allocation2 + $0x590] sm:$0xff]
    %v222 = vld [vmem:[#allocation2 + $0x598] sm:$0xff]
    %v223 = vld [vmem:[#allocation2 + $0x5a0] sm:$0xff]
    %v224 = vld [vmem:[#allocation2 + $0x5a8] sm:$0xff]
    %v225 = vld [vmem:[#allocation2 + $0x5b0] sm:$0xff]
    %v226 = vld [vmem:[#allocation2 + $0x5b8] sm:$0xff]
    %v227 = vld [vmem:[#allocation2 + $0x5c0] sm:$0xff]
    %v228 = vld [vmem:[#allocation2 + $0x5c8] sm:$0xff]
    %v229 = vld [vmem:[#allocation2 + $0x5d0] sm:$0xff]
    %v230 = vld [vmem:[#allocation2 + $0x5d8] sm:$0xff]
    %v231 = vld [vmem:[#allocation2 + $0x5e0] sm:$0xff]
    %v232 = vld [vmem:[#allocation2 + $0x5e8] sm:$0xff]
    %v233 = vld [vmem:[#allocation2 + $0x5f0] sm:$0xff]
    %v234 = vld [vmem:[#allocation2 + $0x5f8] sm:$0xff]
    %v235 = vld [vmem:[#allocation2 + $0x600] sm:$0xff]
    %v236 = vld [vmem:[#allocation2 + $0x608] sm:$0xff]
    %v237 = vld [vmem:[#allocation2 + $0x610] sm:$0xff]
    %v238 = vld [vmem:[#allocation2 + $0x618] sm:$0xff]
    %v239 = vld [vmem:[#allocation2 + $0x620] sm:$0xff]
    %v240 = vld [vmem:[#allocation2 + $0x628] sm:$0xff]
    %v241 = vld [vmem:[#allocation2 + $0x630] sm:$0xff]
    %v242 = vld [vmem:[#allocation2 + $0x638] sm:$0xff]
    %v243 = vld [vmem:[#allocation2 + $0x640] sm:$0xff]
    %v244 = vld [vmem:[#allocation2 + $0x648] sm:$0xff]
    %v245 = vld [vmem:[#allocation2 + $0x650] sm:$0xff]
    %v246 = vld [vmem:[#allocation2 + $0x658] sm:$0xff]
    %v247 = vld [vmem:[#allocation2 + $0x660] sm:$0xff]
    %v248 = vld [vmem:[#allocation2 + $0x668] sm:$0xff]
    %v249 = vld [vmem:[#allocation2 + $0x670] sm:$0xff]
    %v250 = vld [vmem:[#allocation2 + $0x678] sm:$0xff]
    %v251 = vld [vmem:[#allocation2 + $0x680] sm:$0xff]
    %v252 = vld [vmem:[#allocation2 + $0x688] sm:$0xff]
    %v253 = vld [vmem:[#allocation2 + $0x690] sm:$0xff]
    %v254 = vld [vmem:[#allocation2 + $0x698] sm:$0xff]
    %v255 = vld [vmem:[#allocation2 + $0x6a0] sm:$0xff]
    %v256 = vld [vmem:[#allocation2 + $0x6a8] sm:$0xff]
    %v257 = vld [vmem:[#allocation2 + $0x6b0] sm:$0xff]
    %v258 = vld [vmem:[#allocation2 + $0x6b8] sm:$0xff]
    %v259 = vld [vmem:[#allocation2 + $0x6c0] sm:$0xff]
    %v260 = vld [vmem:[#allocation2 + $0x6c8] sm:$0xff]
    %v261 = vld [vmem:[#allocation2 + $0x6d0] sm:$0xff]
    %v262 = vld [vmem:[#allocation2 + $0x6d8] sm:$0xff]
    %v263 = vld [vmem:[#allocation2 + $0x6e0] sm:$0xff]
    %v264 = vld [vmem:[#allocation2 + $0x6e8] sm:$0xff]
    %v265 = vld [vmem:[#allocation2 + $0x6f0] sm:$0xff]
    %v266 = vld [vmem:[#allocation2 + $0x6f8] sm:$0xff]
    %v267 = vld [vmem:[#allocation2 + $0x700] sm:$0xff]
    %v268 = vld [vmem:[#allocation2 + $0x708] sm:$0xff]
    %v269 = vld [vmem:[#allocation2 + $0x710] sm:$0xff]
    %v270 = vld [vmem:[#allocation2 + $0x718] sm:$0xff]
    %v271 = vld [vmem:[#allocation2 + $0x720] sm:$0xff]
    %v272 = vld [vmem:[#allocation2 + $0x728] sm:$0xff]
    %v273 = vld [vmem:[#allocation2 + $0x730] sm:$0xff]
    %v274 = vld [vmem:[#allocation2 + $0x738] sm:$0xff]
    %v275 = vld [vmem:[#allocation2 + $0x740] sm:$0xff]
    %v276 = vld [vmem:[#allocation2 + $0x748] sm:$0xff]
    %v277 = vld [vmem:[#allocation2 + $0x750] sm:$0xff]
    %v278 = vld [vmem:[#allocation2 + $0x758] sm:$0xff]
    %v279 = vld [vmem:[#allocation2 + $0x760] sm:$0xff]
    %v280 = vld [vmem:[#allocation2 + $0x768] sm:$0xff]
    %v281 = vld [vmem:[#allocation2 + $0x770] sm:$0xff]
    %v282 = vld [vmem:[#allocation2 + $0x778] sm:$0xff]
    %v283 = vld [vmem:[#allocation2 + $0x780] sm:$0xff]
    %v284 = vld [vmem:[#allocation2 + $0x788] sm:$0xff]
    %v285 = vld [vmem:[#allocation2 + $0x790] sm:$0xff]
    %v286 = vld [vmem:[#allocation2 + $0x798] sm:$0xff]
    %v287 = vld [vmem:[#allocation2 + $0x7a0] sm:$0xff]
    %v288 = vld [vmem:[#allocation2 + $0x7a8] sm:$0xff]
    %v289 = vld [vmem:[#allocation2 + $0x7b0] sm:$0xff]
    %v290 = vld [vmem:[#allocation2 + $0x7b8] sm:$0xff]
    %v291 = vld [vmem:[#allocation2 + $0x7c0] sm:$0xff]
    %v292 = vld [vmem:[#allocation2 + $0x7c8] sm:$0xff]
    %v293 = vld [vmem:[#allocation2 + $0x7d0] sm:$0xff]
    %v294 = vld [vmem:[#allocation2 + $0x7d8] sm:$0xff]
    %v295 = vld [vmem:[#allocation2 + $0x7e0] sm:$0xff]
    %v296 = vld [vmem:[#allocation2 + $0x7e8] sm:$0xff]
    %v297 = vld [vmem:[#allocation2 + $0x7f0] sm:$0xff]
    %v298 = vld [vmem:[#allocation2 + $0x7f8] sm:$0xff]
    %v299 = vld [vmem:[#allocation2 + $0x800] sm:$0xff]
    %v300 = vld [vmem:[#allocation2 + $0x808] sm:$0xff]
    %v301 = vld [vmem:[#allocation2 + $0x810] sm:$0xff]
    %v302 = vld [vmem:[#allocation2 + $0x818] sm:$0xff]
    %v303 = vld [vmem:[#allocation2 + $0x820] sm:$0xff]
    %v304 = vld [vmem:[#allocation2 + $0x828] sm:$0xff]
    %v305 = vld [vmem:[#allocation2 + $0x830] sm:$0xff]
    %v306 = vld [vmem:[#allocation2 + $0x838] sm:$0xff]
    %v307 = vld [vmem:[#allocation2 + $0x840] sm:$0xff]
    %v308 = vld [vmem:[#allocation2 + $0x848] sm:$0xff]
    %v309 = vld [vmem:[#allocation2 + $0x850] sm:$0xff]
    %v310 = vld [vmem:[#allocation2 + $0x858] sm:$0xff]
    %v311 = vld [vmem:[#allocation2 + $0x860] sm:$0xff]
    %v312 = vld [vmem:[#allocation2 + $0x868] sm:$0xff]
    %v313 = vld [vmem:[#allocation2 + $0x870] sm:$0xff]
    %v314 = vld [vmem:[#allocation2 + $0x878] sm:$0xff]
    %v315 = vld [vmem:[#allocation2 + $0x880] sm:$0xff]
    %v316 = vld [vmem:[#allocation2 + $0x888] sm:$0xff]
    %v317 = vld [vmem:[#allocation2 + $0x890] sm:$0xff]
    %v318 = vld [vmem:[#allocation2 + $0x898] sm:$0xff]
    %v319 = vld [vmem:[#allocation2 + $0x8a0] sm:$0xff]
    %v320 = vld [vmem:[#allocation2 + $0x8a8] sm:$0xff]
    %v321 = vld [vmem:[#allocation2 + $0x8b0] sm:$0xff]
    %v322 = vld [vmem:[#allocation2 + $0x8b8] sm:$0xff]
    %v323 = vld [vmem:[#allocation2 + $0x8c0] sm:$0xff]
    %v324 = vld [vmem:[#allocation2 + $0x8c8] sm:$0xff]
    %v325 = vld [vmem:[#allocation2 + $0x8d0] sm:$0xff]
    %v326 = vld [vmem:[#allocation2 + $0x8d8] sm:$0xff]
    %v327 = vld [vmem:[#allocation2 + $0x8e0] sm:$0xff]
    %v328 = vld [vmem:[#allocation2 + $0x8e8] sm:$0xff]
    %v329 = vld [vmem:[#allocation2 + $0x8f0] sm:$0xff]
    %v330 = vld [vmem:[#allocation2 + $0x8f8] sm:$0xff]
    %v331 = vld [vmem:[#allocation2 + $0x900] sm:$0xff]
    %v332 = vld [vmem:[#allocation2 + $0x908] sm:$0xff]
    %v333 = vld [vmem:[#allocation2 + $0x910] sm:$0xff]
    %v334 = vld [vmem:[#allocation2 + $0x918] sm:$0xff]
    %v335 = vld [vmem:[#allocation2 + $0x920] sm:$0xff]
    %v336 = vld [vmem:[#allocation2 + $0x928] sm:$0xff]
    %v337 = vld [vmem:[#allocation2 + $0x930] sm:$0xff]
    %v338 = vld [vmem:[#allocation2 + $0x938] sm:$0xff]
    %v339 = vld [vmem:[#allocation2 + $0x940] sm:$0xff]
    %v340 = vld [vmem:[#allocation2 + $0x948] sm:$0xff]
    %v341 = vld [vmem:[#allocation2 + $0x950] sm:$0xff]
    %v342 = vld [vmem:[#allocation2 + $0x958] sm:$0xff]
    %v343 = vld [vmem:[#allocation2 + $0x960] sm:$0xff]
    %v344 = vld [vmem:[#allocation2 + $0x968] sm:$0xff]
    %v345 = vld [vmem:[#allocation2 + $0x970] sm:$0xff]
    %v346 = vld [vmem:[#allocation2 + $0x978] sm:$0xff]
    %v347 = vld [vmem:[#allocation2 + $0x980] sm:$0xff]
    %v348 = vld [vmem:[#allocation2 + $0x988] sm:$0xff]
    %v349 = vld [vmem:[#allocation2 + $0x990] sm:$0xff]
    %v350 = vld [vmem:[#allocation2 + $0x998] sm:$0xff]
    %v351 = vld [vmem:[#allocation2 + $0x9a0] sm:$0xff]
    %v352 = vld [vmem:[#allocation2 + $0x9a8] sm:$0xff]
    %v353 = vld [vmem:[#allocation2 + $0x9b0] sm:$0xff]
    %v354 = vld [vmem:[#allocation2 + $0x9b8] sm:$0xff]
    %v355 = vld [vmem:[#allocation2 + $0x9c0] sm:$0xff]
    %v356 = vld [vmem:[#allocation2 + $0x9c8] sm:$0xff]
    %v357 = vld [vmem:[#allocation2 + $0x9d0] sm:$0xff]
    %v358 = vld [vmem:[#allocation2 + $0x9d8] sm:$0xff]
    %v359 = vld [vmem:[#allocation2 + $0x9e0] sm:$0xff]
    %v360 = vld [vmem:[#allocation2 + $0x9e8] sm:$0xff]
    %v361 = vld [vmem:[#allocation2 + $0x9f0] sm:$0xff]
    %v362 = vld [vmem:[#allocation2 + $0x9f8] sm:$0xff]
    %v363 = vld [vmem:[#allocation2 + $0xa00] sm:$0xff]
    %v364 = vld [vmem:[#allocation2 + $0xa08] sm:$0xff]
    %v365 = vld [vmem:[#allocation2 + $0xa10] sm:$0xff]
    %v366 = vld [vmem:[#allocation2 + $0xa18] sm:$0xff]
    %v367 = vld [vmem:[#allocation2 + $0xa20] sm:$0xff]
    %v368 = vld [vmem:[#allocation2 + $0xa28] sm:$0xff]
    %v369 = vld [vmem:[#allocation2 + $0xa30] sm:$0xff]
    %v370 = vld [vmem:[#allocation2 + $0xa38] sm:$0xff]
    %v371 = vld [vmem:[#allocation2 + $0xa40] sm:$0xff]
    %v372 = vld [vmem:[#allocation2 + $0xa48] sm:$0xff]
    %v373 = vld [vmem:[#allocation2 + $0xa50] sm:$0xff]
    %v374 = vld [vmem:[#allocation2 + $0xa58] sm:$0xff]
    %v375 = vld [vmem:[#allocation2 + $0xa60] sm:$0xff]
    %v376 = vld [vmem:[#allocation2 + $0xa68] sm:$0xff]
    %v377 = vld [vmem:[#allocation2 + $0xa70] sm:$0xff]
    %v378 = vld [vmem:[#allocation2 + $0xa78] sm:$0xff]
    %v379 = vld [vmem:[#allocation2 + $0xa80] sm:$0xff]
    %v380 = vld [vmem:[#allocation2 + $0xa88] sm:$0xff]
    %v381 = vld [vmem:[#allocation2 + $0xa90] sm:$0xff]
    %v382 = vld [vmem:[#allocation2 + $0xa98] sm:$0xff]
    %v383 = vld [vmem:[#allocation2 + $0xaa0] sm:$0xff]
    %v384 = vld [vmem:[#allocation2 + $0xaa8] sm:$0xff]
    %v385 = vld [vmem:[#allocation2 + $0xab0] sm:$0xff]
    %v386 = vld [vmem:[#allocation2 + $0xab8] sm:$0xff]
    %v387 = vld [vmem:[#allocation2 + $0xac0] sm:$0xff]
    %v388 = vld [vmem:[#allocation2 + $0xac8] sm:$0xff]
    %v389 = vld [vmem:[#allocation2 + $0xad0] sm:$0xff]
    %v390 = vld [vmem:[#allocation2 + $0xad8] sm:$0xff]
    %v391 = vld [vmem:[#allocation2 + $0xae0] sm:$0xff]
    %v392 = vld [vmem:[#allocation2 + $0xae8] sm:$0xff]
    %v393 = vld [vmem:[#allocation2 + $0xaf0] sm:$0xff]
    %v394 = vld [vmem:[#allocation2 + $0xaf8] sm:$0xff]
    %v395 = vld [vmem:[#allocation2 + $0xb00] sm:$0xff]
    %v396 = vld [vmem:[#allocation2 + $0xb08] sm:$0xff]
    %v397 = vld [vmem:[#allocation2 + $0xb10] sm:$0xff]
    %v398 = vld [vmem:[#allocation2 + $0xb18] sm:$0xff]
    %v399 = vld [vmem:[#allocation2 + $0xb20] sm:$0xff]
    %v400 = vld [vmem:[#allocation2 + $0xb28] sm:$0xff]
    %v401 = vld [vmem:[#allocation2 + $0xb30] sm:$0xff]
    %v402 = vld [vmem:[#allocation2 + $0xb38] sm:$0xff]
    %v403 = vld [vmem:[#allocation2 + $0xb40] sm:$0xff]
    %v404 = vld [vmem:[#allocation2 + $0xb48] sm:$0xff]
    %v405 = vld [vmem:[#allocation2 + $0xb50] sm:$0xff]
    %v406 = vld [vmem:[#allocation2 + $0xb58] sm:$0xff]
    %v407 = vld [vmem:[#allocation2 + $0xb60] sm:$0xff]
    %v408 = vld [vmem:[#allocation2 + $0xb68] sm:$0xff]
    %v409 = vld [vmem:[#allocation2 + $0xb70] sm:$0xff]
    %v410 = vld [vmem:[#allocation2 + $0xb78] sm:$0xff]
    %v411 = vld [vmem:[#allocation2 + $0xb80] sm:$0xff]
    %v412 = vld [vmem:[#allocation2 + $0xb88] sm:$0xff]
    %v413 = vld [vmem:[#allocation2 + $0xb90] sm:$0xff]
    %v414 = vld [vmem:[#allocation2 + $0xb98] sm:$0xff]
    %v415 = vld [vmem:[#allocation2 + $0xba0] sm:$0xff]
    %v416 = vld [vmem:[#allocation2 + $0xba8] sm:$0xff]
    %v417 = vld [vmem:[#allocation2 + $0xbb0] sm:$0xff]
    %v418 = vld [vmem:[#allocation2 + $0xbb8] sm:$0xff]
    %v419 = vld [vmem:[#allocation2 + $0xbc0] sm:$0xff]
    %v420 = vld [vmem:[#allocation2 + $0xbc8] sm:$0xff]
    %v421 = vld [vmem:[#allocation2 + $0xbd0] sm:$0xff]
    %v422 = vld [vmem:[#allocation2 + $0xbd8] sm:$0xff]
    %v423 = vld [vmem:[#allocation2 + $0xbe0] sm:$0xff]
    %v424 = vld [vmem:[#allocation2 + $0xbe8] sm:$0xff]
    %v425 = vld [vmem:[#allocation2 + $0xbf0] sm:$0xff]
    %v426 = vld [vmem:[#allocation2 + $0xbf8] sm:$0xff]
    %v811 = vcombine.low %v43, %v49
    %v812 = vcombine.high %v43, %v49
    %v813 = vcombine.low %v55, %v61
    %v814 = vcombine.high %v55, %v61
    %v816 = vunpack.c.l.s4 1983009808
    %v817 = vunpack.c.0.s8 %v816
    %v818 = vlaneseq
    %v819 = vshrl.u32 %v818, 7
    %v820 = vsub.s32 %v817, %v819
    %v821 = vrot.slane %v811, %v820
    %v823 = vunpack.c.l.s4 1983009808
    %v824 = vunpack.c.0.s8 %v823
    %v825 = vlaneseq
    %v826 = vshrl.u32 %v825, 7
    %v827 = vsub.s32 %v824, %v826
    %v828 = vrot.slane %v812, %v827
    %v830 = vunpack.c.l.s4 1983009808
    %v831 = vunpack.c.0.s8 %v830
    %v832 = vlaneseq
    %v833 = vshrl.u32 %v832, 7
    %v834 = vsub.s32 %v831, %v833
    %v835 = vrot.slane %v813, %v834
    %v837 = vunpack.c.l.s4 1983009808
    %v838 = vunpack.c.0.s8 %v837
    %v839 = vlaneseq
    %v840 = vshrl.u32 %v839, 7
    %v841 = vsub.s32 %v838, %v840
    %v842 = vrot.slane %v814, %v841
    %v843 = vcombine.low %v821, %v835
    %v844 = vcombine.high %v821, %v835
    %v845 = vcombine.low %v828, %v842
    %v846 = vcombine.high %v828, %v842
    %v847 = vcombine.low %v44, %v50
    %v848 = vcombine.high %v44, %v50
    %v849 = vcombine.low %v56, %v62
    %v850 = vcombine.high %v56, %v62
    %v852 = vunpack.c.l.s4 1983009808
    %v853 = vunpack.c.0.s8 %v852
    %v854 = vlaneseq
    %v855 = vshrl.u32 %v854, 7
    %v856 = vsub.s32 %v853, %v855
    %v857 = vrot.slane %v847, %v856
    %v859 = vunpack.c.l.s4 1983009808
    %v860 = vunpack.c.0.s8 %v859
    %v861 = vlaneseq
    %v862 = vshrl.u32 %v861, 7
    %v863 = vsub.s32 %v860, %v862
    %v864 = vrot.slane %v848, %v863
    %v866 = vunpack.c.l.s4 1983009808
    %v867 = vunpack.c.0.s8 %v866
    %v868 = vlaneseq
    %v869 = vshrl.u32 %v868, 7
    %v870 = vsub.s32 %v867, %v869
    %v871 = vrot.slane %v849, %v870
    %v873 = vunpack.c.l.s4 1983009808
    %v874 = vunpack.c.0.s8 %v873
    %v875 = vlaneseq
    %v876 = vshrl.u32 %v875, 7
    %v877 = vsub.s32 %v874, %v876
    %v878 = vrot.slane %v850, %v877
    %v879 = vcombine.low %v857, %v871
    %v880 = vcombine.high %v857, %v871
    %v881 = vcombine.low %v864, %v878
    %v882 = vcombine.high %v864, %v878
    %v883 = vcombine.low %v45, %v51
    %v884 = vcombine.high %v45, %v51
    %v885 = vcombine.low %v57, %v63
    %v886 = vcombine.high %v57, %v63
    %v888 = vunpack.c.l.s4 1983009808
    %v889 = vunpack.c.0.s8 %v888
    %v890 = vlaneseq
    %v891 = vshrl.u32 %v890, 7
    %v892 = vsub.s32 %v889, %v891
    %v893 = vrot.slane %v883, %v892
    %v895 = vunpack.c.l.s4 1983009808
    %v896 = vunpack.c.0.s8 %v895
    %v897 = vlaneseq
    %v898 = vshrl.u32 %v897, 7
    %v899 = vsub.s32 %v896, %v898
    %v900 = vrot.slane %v884, %v899
    %v902 = vunpack.c.l.s4 1983009808
    %v903 = vunpack.c.0.s8 %v902
    %v904 = vlaneseq
    %v905 = vshrl.u32 %v904, 7
    %v906 = vsub.s32 %v903, %v905
    %v907 = vrot.slane %v885, %v906
    %v909 = vunpack.c.l.s4 1983009808
    %v910 = vunpack.c.0.s8 %v909
    %v911 = vlaneseq
    %v912 = vshrl.u32 %v911, 7
    %v913 = vsub.s32 %v910, %v912
    %v914 = vrot.slane %v886, %v913
    %v915 = vcombine.low %v893, %v907
    %v916 = vcombine.high %v893, %v907
    %v917 = vcombine.low %v900, %v914
    %v918 = vcombine.high %v900, %v914
    %v919 = vcombine.low %v46, %v52
    %v920 = vcombine.high %v46, %v52
    %v921 = vcombine.low %v58, %v64
    %v922 = vcombine.high %v58, %v64
    %v924 = vunpack.c.l.s4 1983009808
    %v925 = vunpack.c.0.s8 %v924
    %v926 = vlaneseq
    %v927 = vshrl.u32 %v926, 7
    %v928 = vsub.s32 %v925, %v927
    %v929 = vrot.slane %v919, %v928
    %v931 = vunpack.c.l.s4 1983009808
    %v932 = vunpack.c.0.s8 %v931
    %v933 = vlaneseq
    %v934 = vshrl.u32 %v933, 7
    %v935 = vsub.s32 %v932, %v934
    %v936 = vrot.slane %v920, %v935
    %v938 = vunpack.c.l.s4 1983009808
    %v939 = vunpack.c.0.s8 %v938
    %v940 = vlaneseq
    %v941 = vshrl.u32 %v940, 7
    %v942 = vsub.s32 %v939, %v941
    %v943 = vrot.slane %v921, %v942
    %v945 = vunpack.c.l.s4 1983009808
    %v946 = vunpack.c.0.s8 %v945
    %v947 = vlaneseq
    %v948 = vshrl.u32 %v947, 7
    %v949 = vsub.s32 %v946, %v948
    %v950 = vrot.slane %v922, %v949
    %v951 = vcombine.low %v929, %v943
    %v952 = vcombine.high %v929, %v943
    %v953 = vcombine.low %v936, %v950
    %v954 = vcombine.high %v936, %v950
    %v955 = vcombine.low %v47, %v53
    %v956 = vcombine.high %v47, %v53
    %v957 = vcombine.low %v59, %v65
    %v958 = vcombine.high %v59, %v65
    %v960 = vunpack.c.l.s4 1983009808
    %v961 = vunpack.c.0.s8 %v960
    %v962 = vlaneseq
    %v963 = vshrl.u32 %v962, 7
    %v964 = vsub.s32 %v961, %v963
    %v965 = vrot.slane %v955, %v964
    %v967 = vunpack.c.l.s4 1983009808
    %v968 = vunpack.c.0.s8 %v967
    %v969 = vlaneseq
    %v970 = vshrl.u32 %v969, 7
    %v971 = vsub.s32 %v968, %v970
    %v972 = vrot.slane %v956, %v971
    %v974 = vunpack.c.l.s4 1983009808
    %v975 = vunpack.c.0.s8 %v974
    %v976 = vlaneseq
    %v977 = vshrl.u32 %v976, 7
    %v978 = vsub.s32 %v975, %v977
    %v979 = vrot.slane %v957, %v978
    %v981 = vunpack.c.l.s4 1983009808
    %v982 = vunpack.c.0.s8 %v981
    %v983 = vlaneseq
    %v984 = vshrl.u32 %v983, 7
    %v985 = vsub.s32 %v982, %v984
    %v986 = vrot.slane %v958, %v985
    %v987 = vcombine.low %v965, %v979
    %v988 = vcombine.high %v965, %v979
    %v989 = vcombine.low %v972, %v986
    %v990 = vcombine.high %v972, %v986
    %v991 = vcombine.low %v48, %v54
    %v992 = vcombine.high %v48, %v54
    %v993 = vcombine.low %v60, %v66
    %v994 = vcombine.high %v60, %v66
    %v996 = vunpack.c.l.s4 1983009808
    %v997 = vunpack.c.0.s8 %v996
    %v998 = vlaneseq
    %v999 = vshrl.u32 %v998, 7
    %v1000 = vsub.s32 %v997, %v999
    %v1001 = vrot.slane %v991, %v1000
    %v1003 = vunpack.c.l.s4 1983009808
    %v1004 = vunpack.c.0.s8 %v1003
    %v1005 = vlaneseq
    %v1006 = vshrl.u32 %v1005, 7
    %v1007 = vsub.s32 %v1004, %v1006
    %v1008 = vrot.slane %v992, %v1007
    %v1010 = vunpack.c.l.s4 1983009808
    %v1011 = vunpack.c.0.s8 %v1010
    %v1012 = vlaneseq
    %v1013 = vshrl.u32 %v1012, 7
    %v1014 = vsub.s32 %v1011, %v1013
    %v1015 = vrot.slane %v993, %v1014
    %v1017 = vunpack.c.l.s4 1983009808
    %v1018 = vunpack.c.0.s8 %v1017
    %v1019 = vlaneseq
    %v1020 = vshrl.u32 %v1019, 7
    %v1021 = vsub.s32 %v1018, %v1020
    %v1022 = vrot.slane %v994, %v1021
    %v1023 = vcombine.low %v1001, %v1015
    %v1024 = vcombine.high %v1001, %v1015
    %v1025 = vcombine.low %v1008, %v1022
    %v1026 = vcombine.high %v1008, %v1022
    %v1027 = vcombine.low %v67, %v73
    %v1028 = vcombine.high %v67, %v73
    %v1029 = vcombine.low %v79, %v85
    %v1030 = vcombine.high %v79, %v85
    %v1032 = vunpack.c.l.s4 1983009808
    %v1033 = vunpack.c.0.s8 %v1032
    %v1034 = vlaneseq
    %v1035 = vshrl.u32 %v1034, 7
    %v1036 = vsub.s32 %v1033, %v1035
    %v1037 = vrot.slane %v1027, %v1036
    %v1039 = vunpack.c.l.s4 1983009808
    %v1040 = vunpack.c.0.s8 %v1039
    %v1041 = vlaneseq
    %v1042 = vshrl.u32 %v1041, 7
    %v1043 = vsub.s32 %v1040, %v1042
    %v1044 = vrot.slane %v1028, %v1043
    %v1046 = vunpack.c.l.s4 1983009808
    %v1047 = vunpack.c.0.s8 %v1046
    %v1048 = vlaneseq
    %v1049 = vshrl.u32 %v1048, 7
    %v1050 = vsub.s32 %v1047, %v1049
    %v1051 = vrot.slane %v1029, %v1050
    %v1053 = vunpack.c.l.s4 1983009808
    %v1054 = vunpack.c.0.s8 %v1053
    %v1055 = vlaneseq
    %v1056 = vshrl.u32 %v1055, 7
    %v1057 = vsub.s32 %v1054, %v1056
    %v1058 = vrot.slane %v1030, %v1057
    %v1059 = vcombine.low %v1037, %v1051
    %v1060 = vcombine.high %v1037, %v1051
    %v1061 = vcombine.low %v1044, %v1058
    %v1062 = vcombine.high %v1044, %v1058
    %v1063 = vcombine.low %v68, %v74
    %v1064 = vcombine.high %v68, %v74
    %v1065 = vcombine.low %v80, %v86
    %v1066 = vcombine.high %v80, %v86
    %v1068 = vunpack.c.l.s4 1983009808
    %v1069 = vunpack.c.0.s8 %v1068
    %v1070 = vlaneseq
    %v1071 = vshrl.u32 %v1070, 7
    %v1072 = vsub.s32 %v1069, %v1071
    %v1073 = vrot.slane %v1063, %v1072
    %v1075 = vunpack.c.l.s4 1983009808
    %v1076 = vunpack.c.0.s8 %v1075
    %v1077 = vlaneseq
    %v1078 = vshrl.u32 %v1077, 7
    %v1079 = vsub.s32 %v1076, %v1078
    %v1080 = vrot.slane %v1064, %v1079
    %v1082 = vunpack.c.l.s4 1983009808
    %v1083 = vunpack.c.0.s8 %v1082
    %v1084 = vlaneseq
    %v1085 = vshrl.u32 %v1084, 7
    %v1086 = vsub.s32 %v1083, %v1085
    %v1087 = vrot.slane %v1065, %v1086
    %v1089 = vunpack.c.l.s4 1983009808
    %v1090 = vunpack.c.0.s8 %v1089
    %v1091 = vlaneseq
    %v1092 = vshrl.u32 %v1091, 7
    %v1093 = vsub.s32 %v1090, %v1092
    %v1094 = vrot.slane %v1066, %v1093
    %v1095 = vcombine.low %v1073, %v1087
    %v1096 = vcombine.high %v1073, %v1087
    %v1097 = vcombine.low %v1080, %v1094
    %v1098 = vcombine.high %v1080, %v1094
    %v1099 = vcombine.low %v69, %v75
    %v1100 = vcombine.high %v69, %v75
    %v1101 = vcombine.low %v81, %v87
    %v1102 = vcombine.high %v81, %v87
    %v1104 = vunpack.c.l.s4 1983009808
    %v1105 = vunpack.c.0.s8 %v1104
    %v1106 = vlaneseq
    %v1107 = vshrl.u32 %v1106, 7
    %v1108 = vsub.s32 %v1105, %v1107
    %v1109 = vrot.slane %v1099, %v1108
    %v1111 = vunpack.c.l.s4 1983009808
    %v1112 = vunpack.c.0.s8 %v1111
    %v1113 = vlaneseq
    %v1114 = vshrl.u32 %v1113, 7
    %v1115 = vsub.s32 %v1112, %v1114
    %v1116 = vrot.slane %v1100, %v1115
    %v1118 = vunpack.c.l.s4 1983009808
    %v1119 = vunpack.c.0.s8 %v1118
    %v1120 = vlaneseq
    %v1121 = vshrl.u32 %v1120, 7
    %v1122 = vsub.s32 %v1119, %v1121
    %v1123 = vrot.slane %v1101, %v1122
    %v1125 = vunpack.c.l.s4 1983009808
    %v1126 = vunpack.c.0.s8 %v1125
    %v1127 = vlaneseq
    %v1128 = vshrl.u32 %v1127, 7
    %v1129 = vsub.s32 %v1126, %v1128
    %v1130 = vrot.slane %v1102, %v1129
    %v1131 = vcombine.low %v1109, %v1123
    %v1132 = vcombine.high %v1109, %v1123
    %v1133 = vcombine.low %v1116, %v1130
    %v1134 = vcombine.high %v1116, %v1130
    %v1135 = vcombine.low %v70, %v76
    %v1136 = vcombine.high %v70, %v76
    %v1137 = vcombine.low %v82, %v88
    %v1138 = vcombine.high %v82, %v88
    %v1140 = vunpack.c.l.s4 1983009808
    %v1141 = vunpack.c.0.s8 %v1140
    %v1142 = vlaneseq
    %v1143 = vshrl.u32 %v1142, 7
    %v1144 = vsub.s32 %v1141, %v1143
    %v1145 = vrot.slane %v1135, %v1144
    %v1147 = vunpack.c.l.s4 1983009808
    %v1148 = vunpack.c.0.s8 %v1147
    %v1149 = vlaneseq
    %v1150 = vshrl.u32 %v1149, 7
    %v1151 = vsub.s32 %v1148, %v1150
    %v1152 = vrot.slane %v1136, %v1151
    %v1154 = vunpack.c.l.s4 1983009808
    %v1155 = vunpack.c.0.s8 %v1154
    %v1156 = vlaneseq
    %v1157 = vshrl.u32 %v1156, 7
    %v1158 = vsub.s32 %v1155, %v1157
    %v1159 = vrot.slane %v1137, %v1158
    %v1161 = vunpack.c.l.s4 1983009808
    %v1162 = vunpack.c.0.s8 %v1161
    %v1163 = vlaneseq
    %v1164 = vshrl.u32 %v1163, 7
    %v1165 = vsub.s32 %v1162, %v1164
    %v1166 = vrot.slane %v1138, %v1165
    %v1167 = vcombine.low %v1145, %v1159
    %v1168 = vcombine.high %v1145, %v1159
    %v1169 = vcombine.low %v1152, %v1166
    %v1170 = vcombine.high %v1152, %v1166
    %v1171 = vcombine.low %v71, %v77
    %v1172 = vcombine.high %v71, %v77
    %v1173 = vcombine.low %v83, %v89
    %v1174 = vcombine.high %v83, %v89
    %v1176 = vunpack.c.l.s4 1983009808
    %v1177 = vunpack.c.0.s8 %v1176
    %v1178 = vlaneseq
    %v1179 = vshrl.u32 %v1178, 7
    %v1180 = vsub.s32 %v1177, %v1179
    %v1181 = vrot.slane %v1171, %v1180
    %v1183 = vunpack.c.l.s4 1983009808
    %v1184 = vunpack.c.0.s8 %v1183
    %v1185 = vlaneseq
    %v1186 = vshrl.u32 %v1185, 7
    %v1187 = vsub.s32 %v1184, %v1186
    %v1188 = vrot.slane %v1172, %v1187
    %v1190 = vunpack.c.l.s4 1983009808
    %v1191 = vunpack.c.0.s8 %v1190
    %v1192 = vlaneseq
    %v1193 = vshrl.u32 %v1192, 7
    %v1194 = vsub.s32 %v1191, %v1193
    %v1195 = vrot.slane %v1173, %v1194
    %v1197 = vunpack.c.l.s4 1983009808
    %v1198 = vunpack.c.0.s8 %v1197
    %v1199 = vlaneseq
    %v1200 = vshrl.u32 %v1199, 7
    %v1201 = vsub.s32 %v1198, %v1200
    %v1202 = vrot.slane %v1174, %v1201
    %v1203 = vcombine.low %v1181, %v1195
    %v1204 = vcombine.high %v1181, %v1195
    %v1205 = vcombine.low %v1188, %v1202
    %v1206 = vcombine.high %v1188, %v1202
    %v1207 = vcombine.low %v72, %v78
    %v1208 = vcombine.high %v72, %v78
    %v1209 = vcombine.low %v84, %v90
    %v1210 = vcombine.high %v84, %v90
    %v1212 = vunpack.c.l.s4 1983009808
    %v1213 = vunpack.c.0.s8 %v1212
    %v1214 = vlaneseq
    %v1215 = vshrl.u32 %v1214, 7
    %v1216 = vsub.s32 %v1213, %v1215
    %v1217 = vrot.slane %v1207, %v1216
    %v1219 = vunpack.c.l.s4 1983009808
    %v1220 = vunpack.c.0.s8 %v1219
    %v1221 = vlaneseq
    %v1222 = vshrl.u32 %v1221, 7
    %v1223 = vsub.s32 %v1220, %v1222
    %v1224 = vrot.slane %v1208, %v1223
    %v1226 = vunpack.c.l.s4 1983009808
    %v1227 = vunpack.c.0.s8 %v1226
    %v1228 = vlaneseq
    %v1229 = vshrl.u32 %v1228, 7
    %v1230 = vsub.s32 %v1227, %v1229
    %v1231 = vrot.slane %v1209, %v1230
    %v1233 = vunpack.c.l.s4 1983009808
    %v1234 = vunpack.c.0.s8 %v1233
    %v1235 = vlaneseq
    %v1236 = vshrl.u32 %v1235, 7
    %v1237 = vsub.s32 %v1234, %v1236
    %v1238 = vrot.slane %v1210, %v1237
    %v1239 = vcombine.low %v1217, %v1231
    %v1240 = vcombine.high %v1217, %v1231
    %v1241 = vcombine.low %v1224, %v1238
    %v1242 = vcombine.high %v1224, %v1238
    %v1243 = vcombine.low %v91, %v97
    %v1244 = vcombine.high %v91, %v97
    %v1245 = vcombine.low %v103, %v109
    %v1246 = vcombine.high %v103, %v109
    %v1248 = vunpack.c.l.s4 1983009808
    %v1249 = vunpack.c.0.s8 %v1248
    %v1250 = vlaneseq
    %v1251 = vshrl.u32 %v1250, 7
    %v1252 = vsub.s32 %v1249, %v1251
    %v1253 = vrot.slane %v1243, %v1252
    %v1255 = vunpack.c.l.s4 1983009808
    %v1256 = vunpack.c.0.s8 %v1255
    %v1257 = vlaneseq
    %v1258 = vshrl.u32 %v1257, 7
    %v1259 = vsub.s32 %v1256, %v1258
    %v1260 = vrot.slane %v1244, %v1259
    %v1262 = vunpack.c.l.s4 1983009808
    %v1263 = vunpack.c.0.s8 %v1262
    %v1264 = vlaneseq
    %v1265 = vshrl.u32 %v1264, 7
    %v1266 = vsub.s32 %v1263, %v1265
    %v1267 = vrot.slane %v1245, %v1266
    %v1269 = vunpack.c.l.s4 1983009808
    %v1270 = vunpack.c.0.s8 %v1269
    %v1271 = vlaneseq
    %v1272 = vshrl.u32 %v1271, 7
    %v1273 = vsub.s32 %v1270, %v1272
    %v1274 = vrot.slane %v1246, %v1273
    %v1275 = vcombine.low %v1253, %v1267
    %v1276 = vcombine.high %v1253, %v1267
    %v1277 = vcombine.low %v1260, %v1274
    %v1278 = vcombine.high %v1260, %v1274
    %v1279 = vcombine.low %v92, %v98
    %v1280 = vcombine.high %v92, %v98
    %v1281 = vcombine.low %v104, %v110
    %v1282 = vcombine.high %v104, %v110
    %v1284 = vunpack.c.l.s4 1983009808
    %v1285 = vunpack.c.0.s8 %v1284
    %v1286 = vlaneseq
    %v1287 = vshrl.u32 %v1286, 7
    %v1288 = vsub.s32 %v1285, %v1287
    %v1289 = vrot.slane %v1279, %v1288
    %v1291 = vunpack.c.l.s4 1983009808
    %v1292 = vunpack.c.0.s8 %v1291
    %v1293 = vlaneseq
    %v1294 = vshrl.u32 %v1293, 7
    %v1295 = vsub.s32 %v1292, %v1294
    %v1296 = vrot.slane %v1280, %v1295
    %v1298 = vunpack.c.l.s4 1983009808
    %v1299 = vunpack.c.0.s8 %v1298
    %v1300 = vlaneseq
    %v1301 = vshrl.u32 %v1300, 7
    %v1302 = vsub.s32 %v1299, %v1301
    %v1303 = vrot.slane %v1281, %v1302
    %v1305 = vunpack.c.l.s4 1983009808
    %v1306 = vunpack.c.0.s8 %v1305
    %v1307 = vlaneseq
    %v1308 = vshrl.u32 %v1307, 7
    %v1309 = vsub.s32 %v1306, %v1308
    %v1310 = vrot.slane %v1282, %v1309
    %v1311 = vcombine.low %v1289, %v1303
    %v1312 = vcombine.high %v1289, %v1303
    %v1313 = vcombine.low %v1296, %v1310
    %v1314 = vcombine.high %v1296, %v1310
    %v1315 = vcombine.low %v93, %v99
    %v1316 = vcombine.high %v93, %v99
    %v1317 = vcombine.low %v105, %v111
    %v1318 = vcombine.high %v105, %v111
    %v1320 = vunpack.c.l.s4 1983009808
    %v1321 = vunpack.c.0.s8 %v1320
    %v1322 = vlaneseq
    %v1323 = vshrl.u32 %v1322, 7
    %v1324 = vsub.s32 %v1321, %v1323
    %v1325 = vrot.slane %v1315, %v1324
    %v1327 = vunpack.c.l.s4 1983009808
    %v1328 = vunpack.c.0.s8 %v1327
    %v1329 = vlaneseq
    %v1330 = vshrl.u32 %v1329, 7
    %v1331 = vsub.s32 %v1328, %v1330
    %v1332 = vrot.slane %v1316, %v1331
    %v1334 = vunpack.c.l.s4 1983009808
    %v1335 = vunpack.c.0.s8 %v1334
    %v1336 = vlaneseq
    %v1337 = vshrl.u32 %v1336, 7
    %v1338 = vsub.s32 %v1335, %v1337
    %v1339 = vrot.slane %v1317, %v1338
    %v1341 = vunpack.c.l.s4 1983009808
    %v1342 = vunpack.c.0.s8 %v1341
    %v1343 = vlaneseq
    %v1344 = vshrl.u32 %v1343, 7
    %v1345 = vsub.s32 %v1342, %v1344
    %v1346 = vrot.slane %v1318, %v1345
    %v1347 = vcombine.low %v1325, %v1339
    %v1348 = vcombine.high %v1325, %v1339
    %v1349 = vcombine.low %v1332, %v1346
    %v1350 = vcombine.high %v1332, %v1346
    %v1351 = vcombine.low %v94, %v100
    %v1352 = vcombine.high %v94, %v100
    %v1353 = vcombine.low %v106, %v112
    %v1354 = vcombine.high %v106, %v112
    %v1356 = vunpack.c.l.s4 1983009808
    %v1357 = vunpack.c.0.s8 %v1356
    %v1358 = vlaneseq
    %v1359 = vshrl.u32 %v1358, 7
    %v1360 = vsub.s32 %v1357, %v1359
    %v1361 = vrot.slane %v1351, %v1360
    %v1363 = vunpack.c.l.s4 1983009808
    %v1364 = vunpack.c.0.s8 %v1363
    %v1365 = vlaneseq
    %v1366 = vshrl.u32 %v1365, 7
    %v1367 = vsub.s32 %v1364, %v1366
    %v1368 = vrot.slane %v1352, %v1367
    %v1370 = vunpack.c.l.s4 1983009808
    %v1371 = vunpack.c.0.s8 %v1370
    %v1372 = vlaneseq
    %v1373 = vshrl.u32 %v1372, 7
    %v1374 = vsub.s32 %v1371, %v1373
    %v1375 = vrot.slane %v1353, %v1374
    %v1377 = vunpack.c.l.s4 1983009808
    %v1378 = vunpack.c.0.s8 %v1377
    %v1379 = vlaneseq
    %v1380 = vshrl.u32 %v1379, 7
    %v1381 = vsub.s32 %v1378, %v1380
    %v1382 = vrot.slane %v1354, %v1381
    %v1383 = vcombine.low %v1361, %v1375
    %v1384 = vcombine.high %v1361, %v1375
    %v1385 = vcombine.low %v1368, %v1382
    %v1386 = vcombine.high %v1368, %v1382
    %v1387 = vcombine.low %v95, %v101
    %v1388 = vcombine.high %v95, %v101
    %v1389 = vcombine.low %v107, %v113
    %v1390 = vcombine.high %v107, %v113
    %v1392 = vunpack.c.l.s4 1983009808
    %v1393 = vunpack.c.0.s8 %v1392
    %v1394 = vlaneseq
    %v1395 = vshrl.u32 %v1394, 7
    %v1396 = vsub.s32 %v1393, %v1395
    %v1397 = vrot.slane %v1387, %v1396
    %v1399 = vunpack.c.l.s4 1983009808
    %v1400 = vunpack.c.0.s8 %v1399
    %v1401 = vlaneseq
    %v1402 = vshrl.u32 %v1401, 7
    %v1403 = vsub.s32 %v1400, %v1402
    %v1404 = vrot.slane %v1388, %v1403
    %v1406 = vunpack.c.l.s4 1983009808
    %v1407 = vunpack.c.0.s8 %v1406
    %v1408 = vlaneseq
    %v1409 = vshrl.u32 %v1408, 7
    %v1410 = vsub.s32 %v1407, %v1409
    %v1411 = vrot.slane %v1389, %v1410
    %v1413 = vunpack.c.l.s4 1983009808
    %v1414 = vunpack.c.0.s8 %v1413
    %v1415 = vlaneseq
    %v1416 = vshrl.u32 %v1415, 7
    %v1417 = vsub.s32 %v1414, %v1416
    %v1418 = vrot.slane %v1390, %v1417
    %v1419 = vcombine.low %v1397, %v1411
    %v1420 = vcombine.high %v1397, %v1411
    %v1421 = vcombine.low %v1404, %v1418
    %v1422 = vcombine.high %v1404, %v1418
    %v1423 = vcombine.low %v96, %v102
    %v1424 = vcombine.high %v96, %v102
    %v1425 = vcombine.low %v108, %v114
    %v1426 = vcombine.high %v108, %v114
    %v1428 = vunpack.c.l.s4 1983009808
    %v1429 = vunpack.c.0.s8 %v1428
    %v1430 = vlaneseq
    %v1431 = vshrl.u32 %v1430, 7
    %v1432 = vsub.s32 %v1429, %v1431
    %v1433 = vrot.slane %v1423, %v1432
    %v1435 = vunpack.c.l.s4 1983009808
    %v1436 = vunpack.c.0.s8 %v1435
    %v1437 = vlaneseq
    %v1438 = vshrl.u32 %v1437, 7
    %v1439 = vsub.s32 %v1436, %v1438
    %v1440 = vrot.slane %v1424, %v1439
    %v1442 = vunpack.c.l.s4 1983009808
    %v1443 = vunpack.c.0.s8 %v1442
    %v1444 = vlaneseq
    %v1445 = vshrl.u32 %v1444, 7
    %v1446 = vsub.s32 %v1443, %v1445
    %v1447 = vrot.slane %v1425, %v1446
    %v1449 = vunpack.c.l.s4 1983009808
    %v1450 = vunpack.c.0.s8 %v1449
    %v1451 = vlaneseq
    %v1452 = vshrl.u32 %v1451, 7
    %v1453 = vsub.s32 %v1450, %v1452
    %v1454 = vrot.slane %v1426, %v1453
    %v1455 = vcombine.low %v1433, %v1447
    %v1456 = vcombine.high %v1433, %v1447
    %v1457 = vcombine.low %v1440, %v1454
    %v1458 = vcombine.high %v1440, %v1454
    %v1459 = vcombine.low %v115, %v121
    %v1460 = vcombine.high %v115, %v121
    %v1461 = vcombine.low %v127, %v133
    %v1462 = vcombine.high %v127, %v133
    %v1464 = vunpack.c.l.s4 1983009808
    %v1465 = vunpack.c.0.s8 %v1464
    %v1466 = vlaneseq
    %v1467 = vshrl.u32 %v1466, 7
    %v1468 = vsub.s32 %v1465, %v1467
    %v1469 = vrot.slane %v1459, %v1468
    %v1471 = vunpack.c.l.s4 1983009808
    %v1472 = vunpack.c.0.s8 %v1471
    %v1473 = vlaneseq
    %v1474 = vshrl.u32 %v1473, 7
    %v1475 = vsub.s32 %v1472, %v1474
    %v1476 = vrot.slane %v1460, %v1475
    %v1478 = vunpack.c.l.s4 1983009808
    %v1479 = vunpack.c.0.s8 %v1478
    %v1480 = vlaneseq
    %v1481 = vshrl.u32 %v1480, 7
    %v1482 = vsub.s32 %v1479, %v1481
    %v1483 = vrot.slane %v1461, %v1482
    %v1485 = vunpack.c.l.s4 1983009808
    %v1486 = vunpack.c.0.s8 %v1485
    %v1487 = vlaneseq
    %v1488 = vshrl.u32 %v1487, 7
    %v1489 = vsub.s32 %v1486, %v1488
    %v1490 = vrot.slane %v1462, %v1489
    %v1491 = vcombine.low %v1469, %v1483
    %v1492 = vcombine.high %v1469, %v1483
    %v1493 = vcombine.low %v1476, %v1490
    %v1494 = vcombine.high %v1476, %v1490
    %v1495 = vcombine.low %v116, %v122
    %v1496 = vcombine.high %v116, %v122
    %v1497 = vcombine.low %v128, %v134
    %v1498 = vcombine.high %v128, %v134
    %v1500 = vunpack.c.l.s4 1983009808
    %v1501 = vunpack.c.0.s8 %v1500
    %v1502 = vlaneseq
    %v1503 = vshrl.u32 %v1502, 7
    %v1504 = vsub.s32 %v1501, %v1503
    %v1505 = vrot.slane %v1495, %v1504
    %v1507 = vunpack.c.l.s4 1983009808
    %v1508 = vunpack.c.0.s8 %v1507
    %v1509 = vlaneseq
    %v1510 = vshrl.u32 %v1509, 7
    %v1511 = vsub.s32 %v1508, %v1510
    %v1512 = vrot.slane %v1496, %v1511
    %v1514 = vunpack.c.l.s4 1983009808
    %v1515 = vunpack.c.0.s8 %v1514
    %v1516 = vlaneseq
    %v1517 = vshrl.u32 %v1516, 7
    %v1518 = vsub.s32 %v1515, %v1517
    %v1519 = vrot.slane %v1497, %v1518
    %v1521 = vunpack.c.l.s4 1983009808
    %v1522 = vunpack.c.0.s8 %v1521
    %v1523 = vlaneseq
    %v1524 = vshrl.u32 %v1523, 7
    %v1525 = vsub.s32 %v1522, %v1524
    %v1526 = vrot.slane %v1498, %v1525
    %v1527 = vcombine.low %v1505, %v1519
    %v1528 = vcombine.high %v1505, %v1519
    %v1529 = vcombine.low %v1512, %v1526
    %v1530 = vcombine.high %v1512, %v1526
    %v1531 = vcombine.low %v117, %v123
    %v1532 = vcombine.high %v117, %v123
    %v1533 = vcombine.low %v129, %v135
    %v1534 = vcombine.high %v129, %v135
    %v1536 = vunpack.c.l.s4 1983009808
    %v1537 = vunpack.c.0.s8 %v1536
    %v1538 = vlaneseq
    %v1539 = vshrl.u32 %v1538, 7
    %v1540 = vsub.s32 %v1537, %v1539
    %v1541 = vrot.slane %v1531, %v1540
    %v1543 = vunpack.c.l.s4 1983009808
    %v1544 = vunpack.c.0.s8 %v1543
    %v1545 = vlaneseq
    %v1546 = vshrl.u32 %v1545, 7
    %v1547 = vsub.s32 %v1544, %v1546
    %v1548 = vrot.slane %v1532, %v1547
    %v1550 = vunpack.c.l.s4 1983009808
    %v1551 = vunpack.c.0.s8 %v1550
    %v1552 = vlaneseq
    %v1553 = vshrl.u32 %v1552, 7
    %v1554 = vsub.s32 %v1551, %v1553
    %v1555 = vrot.slane %v1533, %v1554
    %v1557 = vunpack.c.l.s4 1983009808
    %v1558 = vunpack.c.0.s8 %v1557
    %v1559 = vlaneseq
    %v1560 = vshrl.u32 %v1559, 7
    %v1561 = vsub.s32 %v1558, %v1560
    %v1562 = vrot.slane %v1534, %v1561
    %v1563 = vcombine.low %v1541, %v1555
    %v1564 = vcombine.high %v1541, %v1555
    %v1565 = vcombine.low %v1548, %v1562
    %v1566 = vcombine.high %v1548, %v1562
    %v1567 = vcombine.low %v118, %v124
    %v1568 = vcombine.high %v118, %v124
    %v1569 = vcombine.low %v130, %v136
    %v1570 = vcombine.high %v130, %v136
    %v1572 = vunpack.c.l.s4 1983009808
    %v1573 = vunpack.c.0.s8 %v1572
    %v1574 = vlaneseq
    %v1575 = vshrl.u32 %v1574, 7
    %v1576 = vsub.s32 %v1573, %v1575
    %v1577 = vrot.slane %v1567, %v1576
    %v1579 = vunpack.c.l.s4 1983009808
    %v1580 = vunpack.c.0.s8 %v1579
    %v1581 = vlaneseq
    %v1582 = vshrl.u32 %v1581, 7
    %v1583 = vsub.s32 %v1580, %v1582
    %v1584 = vrot.slane %v1568, %v1583
    %v1586 = vunpack.c.l.s4 1983009808
    %v1587 = vunpack.c.0.s8 %v1586
    %v1588 = vlaneseq
    %v1589 = vshrl.u32 %v1588, 7
    %v1590 = vsub.s32 %v1587, %v1589
    %v1591 = vrot.slane %v1569, %v1590
    %v1593 = vunpack.c.l.s4 1983009808
    %v1594 = vunpack.c.0.s8 %v1593
    %v1595 = vlaneseq
    %v1596 = vshrl.u32 %v1595, 7
    %v1597 = vsub.s32 %v1594, %v1596
    %v1598 = vrot.slane %v1570, %v1597
    %v1599 = vcombine.low %v1577, %v1591
    %v1600 = vcombine.high %v1577, %v1591
    %v1601 = vcombine.low %v1584, %v1598
    %v1602 = vcombine.high %v1584, %v1598
    %v1603 = vcombine.low %v119, %v125
    %v1604 = vcombine.high %v119, %v125
    %v1605 = vcombine.low %v131, %v137
    %v1606 = vcombine.high %v131, %v137
    %v1608 = vunpack.c.l.s4 1983009808
    %v1609 = vunpack.c.0.s8 %v1608
    %v1610 = vlaneseq
    %v1611 = vshrl.u32 %v1610, 7
    %v1612 = vsub.s32 %v1609, %v1611
    %v1613 = vrot.slane %v1603, %v1612
    %v1615 = vunpack.c.l.s4 1983009808
    %v1616 = vunpack.c.0.s8 %v1615
    %v1617 = vlaneseq
    %v1618 = vshrl.u32 %v1617, 7
    %v1619 = vsub.s32 %v1616, %v1618
    %v1620 = vrot.slane %v1604, %v1619
    %v1622 = vunpack.c.l.s4 1983009808
    %v1623 = vunpack.c.0.s8 %v1622
    %v1624 = vlaneseq
    %v1625 = vshrl.u32 %v1624, 7
    %v1626 = vsub.s32 %v1623, %v1625
    %v1627 = vrot.slane %v1605, %v1626
    %v1629 = vunpack.c.l.s4 1983009808
    %v1630 = vunpack.c.0.s8 %v1629
    %v1631 = vlaneseq
    %v1632 = vshrl.u32 %v1631, 7
    %v1633 = vsub.s32 %v1630, %v1632
    %v1634 = vrot.slane %v1606, %v1633
    %v1635 = vcombine.low %v1613, %v1627
    %v1636 = vcombine.high %v1613, %v1627
    %v1637 = vcombine.low %v1620, %v1634
    %v1638 = vcombine.high %v1620, %v1634
    %v1639 = vcombine.low %v120, %v126
    %v1640 = vcombine.high %v120, %v126
    %v1641 = vcombine.low %v132, %v138
    %v1642 = vcombine.high %v132, %v138
    %v1644 = vunpack.c.l.s4 1983009808
    %v1645 = vunpack.c.0.s8 %v1644
    %v1646 = vlaneseq
    %v1647 = vshrl.u32 %v1646, 7
    %v1648 = vsub.s32 %v1645, %v1647
    %v1649 = vrot.slane %v1639, %v1648
    %v1651 = vunpack.c.l.s4 1983009808
    %v1652 = vunpack.c.0.s8 %v1651
    %v1653 = vlaneseq
    %v1654 = vshrl.u32 %v1653, 7
    %v1655 = vsub.s32 %v1652, %v1654
    %v1656 = vrot.slane %v1640, %v1655
    %v1658 = vunpack.c.l.s4 1983009808
    %v1659 = vunpack.c.0.s8 %v1658
    %v1660 = vlaneseq
    %v1661 = vshrl.u32 %v1660, 7
    %v1662 = vsub.s32 %v1659, %v1661
    %v1663 = vrot.slane %v1641, %v1662
    %v1665 = vunpack.c.l.s4 1983009808
    %v1666 = vunpack.c.0.s8 %v1665
    %v1667 = vlaneseq
    %v1668 = vshrl.u32 %v1667, 7
    %v1669 = vsub.s32 %v1666, %v1668
    %v1670 = vrot.slane %v1642, %v1669
    %v1671 = vcombine.low %v1649, %v1663
    %v1672 = vcombine.high %v1649, %v1663
    %v1673 = vcombine.low %v1656, %v1670
    %v1674 = vcombine.high %v1656, %v1670
    %v1675 = vcombine.low %v139, %v145
    %v1676 = vcombine.high %v139, %v145
    %v1677 = vcombine.low %v151, %v157
    %v1678 = vcombine.high %v151, %v157
    %v1680 = vunpack.c.l.s4 1983009808
    %v1681 = vunpack.c.0.s8 %v1680
    %v1682 = vlaneseq
    %v1683 = vshrl.u32 %v1682, 7
    %v1684 = vsub.s32 %v1681, %v1683
    %v1685 = vrot.slane %v1675, %v1684
    %v1687 = vunpack.c.l.s4 1983009808
    %v1688 = vunpack.c.0.s8 %v1687
    %v1689 = vlaneseq
    %v1690 = vshrl.u32 %v1689, 7
    %v1691 = vsub.s32 %v1688, %v1690
    %v1692 = vrot.slane %v1676, %v1691
    %v1694 = vunpack.c.l.s4 1983009808
    %v1695 = vunpack.c.0.s8 %v1694
    %v1696 = vlaneseq
    %v1697 = vshrl.u32 %v1696, 7
    %v1698 = vsub.s32 %v1695, %v1697
    %v1699 = vrot.slane %v1677, %v1698
    %v1701 = vunpack.c.l.s4 1983009808
    %v1702 = vunpack.c.0.s8 %v1701
    %v1703 = vlaneseq
    %v1704 = vshrl.u32 %v1703, 7
    %v1705 = vsub.s32 %v1702, %v1704
    %v1706 = vrot.slane %v1678, %v1705
    %v1707 = vcombine.low %v1685, %v1699
    %v1708 = vcombine.high %v1685, %v1699
    %v1709 = vcombine.low %v1692, %v1706
    %v1710 = vcombine.high %v1692, %v1706
    %v1711 = vcombine.low %v140, %v146
    %v1712 = vcombine.high %v140, %v146
    %v1713 = vcombine.low %v152, %v158
    %v1714 = vcombine.high %v152, %v158
    %v1716 = vunpack.c.l.s4 1983009808
    %v1717 = vunpack.c.0.s8 %v1716
    %v1718 = vlaneseq
    %v1719 = vshrl.u32 %v1718, 7
    %v1720 = vsub.s32 %v1717, %v1719
    %v1721 = vrot.slane %v1711, %v1720
    %v1723 = vunpack.c.l.s4 1983009808
    %v1724 = vunpack.c.0.s8 %v1723
    %v1725 = vlaneseq
    %v1726 = vshrl.u32 %v1725, 7
    %v1727 = vsub.s32 %v1724, %v1726
    %v1728 = vrot.slane %v1712, %v1727
    %v1730 = vunpack.c.l.s4 1983009808
    %v1731 = vunpack.c.0.s8 %v1730
    %v1732 = vlaneseq
    %v1733 = vshrl.u32 %v1732, 7
    %v1734 = vsub.s32 %v1731, %v1733
    %v1735 = vrot.slane %v1713, %v1734
    %v1737 = vunpack.c.l.s4 1983009808
    %v1738 = vunpack.c.0.s8 %v1737
    %v1739 = vlaneseq
    %v1740 = vshrl.u32 %v1739, 7
    %v1741 = vsub.s32 %v1738, %v1740
    %v1742 = vrot.slane %v1714, %v1741
    %v1743 = vcombine.low %v1721, %v1735
    %v1744 = vcombine.high %v1721, %v1735
    %v1745 = vcombine.low %v1728, %v1742
    %v1746 = vcombine.high %v1728, %v1742
    %v1747 = vcombine.low %v141, %v147
    %v1748 = vcombine.high %v141, %v147
    %v1749 = vcombine.low %v153, %v159
    %v1750 = vcombine.high %v153, %v159
    %v1752 = vunpack.c.l.s4 1983009808
    %v1753 = vunpack.c.0.s8 %v1752
    %v1754 = vlaneseq
    %v1755 = vshrl.u32 %v1754, 7
    %v1756 = vsub.s32 %v1753, %v1755
    %v1757 = vrot.slane %v1747, %v1756
    %v1759 = vunpack.c.l.s4 1983009808
    %v1760 = vunpack.c.0.s8 %v1759
    %v1761 = vlaneseq
    %v1762 = vshrl.u32 %v1761, 7
    %v1763 = vsub.s32 %v1760, %v1762
    %v1764 = vrot.slane %v1748, %v1763
    %v1766 = vunpack.c.l.s4 1983009808
    %v1767 = vunpack.c.0.s8 %v1766
    %v1768 = vlaneseq
    %v1769 = vshrl.u32 %v1768, 7
    %v1770 = vsub.s32 %v1767, %v1769
    %v1771 = vrot.slane %v1749, %v1770
    %v1773 = vunpack.c.l.s4 1983009808
    %v1774 = vunpack.c.0.s8 %v1773
    %v1775 = vlaneseq
    %v1776 = vshrl.u32 %v1775, 7
    %v1777 = vsub.s32 %v1774, %v1776
    %v1778 = vrot.slane %v1750, %v1777
    %v1779 = vcombine.low %v1757, %v1771
    %v1780 = vcombine.high %v1757, %v1771
    %v1781 = vcombine.low %v1764, %v1778
    %v1782 = vcombine.high %v1764, %v1778
    %v1783 = vcombine.low %v142, %v148
    %v1784 = vcombine.high %v142, %v148
    %v1785 = vcombine.low %v154, %v160
    %v1786 = vcombine.high %v154, %v160
    %v1788 = vunpack.c.l.s4 1983009808
    %v1789 = vunpack.c.0.s8 %v1788
    %v1790 = vlaneseq
    %v1791 = vshrl.u32 %v1790, 7
    %v1792 = vsub.s32 %v1789, %v1791
    %v1793 = vrot.slane %v1783, %v1792
    %v1795 = vunpack.c.l.s4 1983009808
    %v1796 = vunpack.c.0.s8 %v1795
    %v1797 = vlaneseq
    %v1798 = vshrl.u32 %v1797, 7
    %v1799 = vsub.s32 %v1796, %v1798
    %v1800 = vrot.slane %v1784, %v1799
    %v1802 = vunpack.c.l.s4 1983009808
    %v1803 = vunpack.c.0.s8 %v1802
    %v1804 = vlaneseq
    %v1805 = vshrl.u32 %v1804, 7
    %v1806 = vsub.s32 %v1803, %v1805
    %v1807 = vrot.slane %v1785, %v1806
    %v1809 = vunpack.c.l.s4 1983009808
    %v1810 = vunpack.c.0.s8 %v1809
    %v1811 = vlaneseq
    %v1812 = vshrl.u32 %v1811, 7
    %v1813 = vsub.s32 %v1810, %v1812
    %v1814 = vrot.slane %v1786, %v1813
    %v1815 = vcombine.low %v1793, %v1807
    %v1816 = vcombine.high %v1793, %v1807
    %v1817 = vcombine.low %v1800, %v1814
    %v1818 = vcombine.high %v1800, %v1814
    %v1819 = vcombine.low %v143, %v149
    %v1820 = vcombine.high %v143, %v149
    %v1821 = vcombine.low %v155, %v161
    %v1822 = vcombine.high %v155, %v161
    %v1824 = vunpack.c.l.s4 1983009808
    %v1825 = vunpack.c.0.s8 %v1824
    %v1826 = vlaneseq
    %v1827 = vshrl.u32 %v1826, 7
    %v1828 = vsub.s32 %v1825, %v1827
    %v1829 = vrot.slane %v1819, %v1828
    %v1831 = vunpack.c.l.s4 1983009808
    %v1832 = vunpack.c.0.s8 %v1831
    %v1833 = vlaneseq
    %v1834 = vshrl.u32 %v1833, 7
    %v1835 = vsub.s32 %v1832, %v1834
    %v1836 = vrot.slane %v1820, %v1835
    %v1838 = vunpack.c.l.s4 1983009808
    %v1839 = vunpack.c.0.s8 %v1838
    %v1840 = vlaneseq
    %v1841 = vshrl.u32 %v1840, 7
    %v1842 = vsub.s32 %v1839, %v1841
    %v1843 = vrot.slane %v1821, %v1842
    %v1845 = vunpack.c.l.s4 1983009808
    %v1846 = vunpack.c.0.s8 %v1845
    %v1847 = vlaneseq
    %v1848 = vshrl.u32 %v1847, 7
    %v1849 = vsub.s32 %v1846, %v1848
    %v1850 = vrot.slane %v1822, %v1849
    %v1851 = vcombine.low %v1829, %v1843
    %v1852 = vcombine.high %v1829, %v1843
    %v1853 = vcombine.low %v1836, %v1850
    %v1854 = vcombine.high %v1836, %v1850
    %v1855 = vcombine.low %v144, %v150
    %v1856 = vcombine.high %v144, %v150
    %v1857 = vcombine.low %v156, %v162
    %v1858 = vcombine.high %v156, %v162
    %v1860 = vunpack.c.l.s4 1983009808
    %v1861 = vunpack.c.0.s8 %v1860
    %v1862 = vlaneseq
    %v1863 = vshrl.u32 %v1862, 7
    %v1864 = vsub.s32 %v1861, %v1863
    %v1865 = vrot.slane %v1855, %v1864
    %v1867 = vunpack.c.l.s4 1983009808
    %v1868 = vunpack.c.0.s8 %v1867
    %v1869 = vlaneseq
    %v1870 = vshrl.u32 %v1869, 7
    %v1871 = vsub.s32 %v1868, %v1870
    %v1872 = vrot.slane %v1856, %v1871
    %v1874 = vunpack.c.l.s4 1983009808
    %v1875 = vunpack.c.0.s8 %v1874
    %v1876 = vlaneseq
    %v1877 = vshrl.u32 %v1876, 7
    %v1878 = vsub.s32 %v1875, %v1877
    %v1879 = vrot.slane %v1857, %v1878
    %v1881 = vunpack.c.l.s4 1983009808
    %v1882 = vunpack.c.0.s8 %v1881
    %v1883 = vlaneseq
    %v1884 = vshrl.u32 %v1883, 7
    %v1885 = vsub.s32 %v1882, %v1884
    %v1886 = vrot.slane %v1858, %v1885
    %v1887 = vcombine.low %v1865, %v1879
    %v1888 = vcombine.high %v1865, %v1879
    %v1889 = vcombine.low %v1872, %v1886
    %v1890 = vcombine.high %v1872, %v1886
    %v1891 = vcombine.low %v163, %v169
    %v1892 = vcombine.high %v163, %v169
    %v1893 = vcombine.low %v175, %v181
    %v1894 = vcombine.high %v175, %v181
    %v1896 = vunpack.c.l.s4 1983009808
    %v1897 = vunpack.c.0.s8 %v1896
    %v1898 = vlaneseq
    %v1899 = vshrl.u32 %v1898, 7
    %v1900 = vsub.s32 %v1897, %v1899
    %v1901 = vrot.slane %v1891, %v1900
    %v1903 = vunpack.c.l.s4 1983009808
    %v1904 = vunpack.c.0.s8 %v1903
    %v1905 = vlaneseq
    %v1906 = vshrl.u32 %v1905, 7
    %v1907 = vsub.s32 %v1904, %v1906
    %v1908 = vrot.slane %v1892, %v1907
    %v1910 = vunpack.c.l.s4 1983009808
    %v1911 = vunpack.c.0.s8 %v1910
    %v1912 = vlaneseq
    %v1913 = vshrl.u32 %v1912, 7
    %v1914 = vsub.s32 %v1911, %v1913
    %v1915 = vrot.slane %v1893, %v1914
    %v1917 = vunpack.c.l.s4 1983009808
    %v1918 = vunpack.c.0.s8 %v1917
    %v1919 = vlaneseq
    %v1920 = vshrl.u32 %v1919, 7
    %v1921 = vsub.s32 %v1918, %v1920
    %v1922 = vrot.slane %v1894, %v1921
    %v1923 = vcombine.low %v1901, %v1915
    %v1924 = vcombine.high %v1901, %v1915
    %v1925 = vcombine.low %v1908, %v1922
    %v1926 = vcombine.high %v1908, %v1922
    %v1927 = vcombine.low %v164, %v170
    %v1928 = vcombine.high %v164, %v170
    %v1929 = vcombine.low %v176, %v182
    %v1930 = vcombine.high %v176, %v182
    %v1932 = vunpack.c.l.s4 1983009808
    %v1933 = vunpack.c.0.s8 %v1932
    %v1934 = vlaneseq
    %v1935 = vshrl.u32 %v1934, 7
    %v1936 = vsub.s32 %v1933, %v1935
    %v1937 = vrot.slane %v1927, %v1936
    %v1939 = vunpack.c.l.s4 1983009808
    %v1940 = vunpack.c.0.s8 %v1939
    %v1941 = vlaneseq
    %v1942 = vshrl.u32 %v1941, 7
    %v1943 = vsub.s32 %v1940, %v1942
    %v1944 = vrot.slane %v1928, %v1943
    %v1946 = vunpack.c.l.s4 1983009808
    %v1947 = vunpack.c.0.s8 %v1946
    %v1948 = vlaneseq
    %v1949 = vshrl.u32 %v1948, 7
    %v1950 = vsub.s32 %v1947, %v1949
    %v1951 = vrot.slane %v1929, %v1950
    %v1953 = vunpack.c.l.s4 1983009808
    %v1954 = vunpack.c.0.s8 %v1953
    %v1955 = vlaneseq
    %v1956 = vshrl.u32 %v1955, 7
    %v1957 = vsub.s32 %v1954, %v1956
    %v1958 = vrot.slane %v1930, %v1957
    %v1959 = vcombine.low %v1937, %v1951
    %v1960 = vcombine.high %v1937, %v1951
    %v1961 = vcombine.low %v1944, %v1958
    %v1962 = vcombine.high %v1944, %v1958
    %v1963 = vcombine.low %v165, %v171
    %v1964 = vcombine.high %v165, %v171
    %v1965 = vcombine.low %v177, %v183
    %v1966 = vcombine.high %v177, %v183
    %v1968 = vunpack.c.l.s4 1983009808
    %v1969 = vunpack.c.0.s8 %v1968
    %v1970 = vlaneseq
    %v1971 = vshrl.u32 %v1970, 7
    %v1972 = vsub.s32 %v1969, %v1971
    %v1973 = vrot.slane %v1963, %v1972
    %v1975 = vunpack.c.l.s4 1983009808
    %v1976 = vunpack.c.0.s8 %v1975
    %v1977 = vlaneseq
    %v1978 = vshrl.u32 %v1977, 7
    %v1979 = vsub.s32 %v1976, %v1978
    %v1980 = vrot.slane %v1964, %v1979
    %v1982 = vunpack.c.l.s4 1983009808
    %v1983 = vunpack.c.0.s8 %v1982
    %v1984 = vlaneseq
    %v1985 = vshrl.u32 %v1984, 7
    %v1986 = vsub.s32 %v1983, %v1985
    %v1987 = vrot.slane %v1965, %v1986
    %v1989 = vunpack.c.l.s4 1983009808
    %v1990 = vunpack.c.0.s8 %v1989
    %v1991 = vlaneseq
    %v1992 = vshrl.u32 %v1991, 7
    %v1993 = vsub.s32 %v1990, %v1992
    %v1994 = vrot.slane %v1966, %v1993
    %v1995 = vcombine.low %v1973, %v1987
    %v1996 = vcombine.high %v1973, %v1987
    %v1997 = vcombine.low %v1980, %v1994
    %v1998 = vcombine.high %v1980, %v1994
    %v1999 = vcombine.low %v166, %v172
    %v2000 = vcombine.high %v166, %v172
    %v2001 = vcombine.low %v178, %v184
    %v2002 = vcombine.high %v178, %v184
    %v2004 = vunpack.c.l.s4 1983009808
    %v2005 = vunpack.c.0.s8 %v2004
    %v2006 = vlaneseq
    %v2007 = vshrl.u32 %v2006, 7
    %v2008 = vsub.s32 %v2005, %v2007
    %v2009 = vrot.slane %v1999, %v2008
    %v2011 = vunpack.c.l.s4 1983009808
    %v2012 = vunpack.c.0.s8 %v2011
    %v2013 = vlaneseq
    %v2014 = vshrl.u32 %v2013, 7
    %v2015 = vsub.s32 %v2012, %v2014
    %v2016 = vrot.slane %v2000, %v2015
    %v2018 = vunpack.c.l.s4 1983009808
    %v2019 = vunpack.c.0.s8 %v2018
    %v2020 = vlaneseq
    %v2021 = vshrl.u32 %v2020, 7
    %v2022 = vsub.s32 %v2019, %v2021
    %v2023 = vrot.slane %v2001, %v2022
    %v2025 = vunpack.c.l.s4 1983009808
    %v2026 = vunpack.c.0.s8 %v2025
    %v2027 = vlaneseq
    %v2028 = vshrl.u32 %v2027, 7
    %v2029 = vsub.s32 %v2026, %v2028
    %v2030 = vrot.slane %v2002, %v2029
    %v2031 = vcombine.low %v2009, %v2023
    %v2032 = vcombine.high %v2009, %v2023
    %v2033 = vcombine.low %v2016, %v2030
    %v2034 = vcombine.high %v2016, %v2030
    %v2035 = vcombine.low %v167, %v173
    %v2036 = vcombine.high %v167, %v173
    %v2037 = vcombine.low %v179, %v185
    %v2038 = vcombine.high %v179, %v185
    %v2040 = vunpack.c.l.s4 1983009808
    %v2041 = vunpack.c.0.s8 %v2040
    %v2042 = vlaneseq
    %v2043 = vshrl.u32 %v2042, 7
    %v2044 = vsub.s32 %v2041, %v2043
    %v2045 = vrot.slane %v2035, %v2044
    %v2047 = vunpack.c.l.s4 1983009808
    %v2048 = vunpack.c.0.s8 %v2047
    %v2049 = vlaneseq
    %v2050 = vshrl.u32 %v2049, 7
    %v2051 = vsub.s32 %v2048, %v2050
    %v2052 = vrot.slane %v2036, %v2051
    %v2054 = vunpack.c.l.s4 1983009808
    %v2055 = vunpack.c.0.s8 %v2054
    %v2056 = vlaneseq
    %v2057 = vshrl.u32 %v2056, 7
    %v2058 = vsub.s32 %v2055, %v2057
    %v2059 = vrot.slane %v2037, %v2058
    %v2061 = vunpack.c.l.s4 1983009808
    %v2062 = vunpack.c.0.s8 %v2061
    %v2063 = vlaneseq
    %v2064 = vshrl.u32 %v2063, 7
    %v2065 = vsub.s32 %v2062, %v2064
    %v2066 = vrot.slane %v2038, %v2065
    %v2067 = vcombine.low %v2045, %v2059
    %v2068 = vcombine.high %v2045, %v2059
    %v2069 = vcombine.low %v2052, %v2066
    %v2070 = vcombine.high %v2052, %v2066
    %v2071 = vcombine.low %v168, %v174
    %v2072 = vcombine.high %v168, %v174
    %v2073 = vcombine.low %v180, %v186
    %v2074 = vcombine.high %v180, %v186
    %v2076 = vunpack.c.l.s4 1983009808
    %v2077 = vunpack.c.0.s8 %v2076
    %v2078 = vlaneseq
    %v2079 = vshrl.u32 %v2078, 7
    %v2080 = vsub.s32 %v2077, %v2079
    %v2081 = vrot.slane %v2071, %v2080
    %v2083 = vunpack.c.l.s4 1983009808
    %v2084 = vunpack.c.0.s8 %v2083
    %v2085 = vlaneseq
    %v2086 = vshrl.u32 %v2085, 7
    %v2087 = vsub.s32 %v2084, %v2086
    %v2088 = vrot.slane %v2072, %v2087
    %v2090 = vunpack.c.l.s4 1983009808
    %v2091 = vunpack.c.0.s8 %v2090
    %v2092 = vlaneseq
    %v2093 = vshrl.u32 %v2092, 7
    %v2094 = vsub.s32 %v2091, %v2093
    %v2095 = vrot.slane %v2073, %v2094
    %v2097 = vunpack.c.l.s4 1983009808
    %v2098 = vunpack.c.0.s8 %v2097
    %v2099 = vlaneseq
    %v2100 = vshrl.u32 %v2099, 7
    %v2101 = vsub.s32 %v2098, %v2100
    %v2102 = vrot.slane %v2074, %v2101
    %v2103 = vcombine.low %v2081, %v2095
    %v2104 = vcombine.high %v2081, %v2095
    %v2105 = vcombine.low %v2088, %v2102
    %v2106 = vcombine.high %v2088, %v2102
    %v2107 = vcombine.low %v187, %v193
    %v2108 = vcombine.high %v187, %v193
    %v2109 = vcombine.low %v199, %v205
    %v2110 = vcombine.high %v199, %v205
    %v2112 = vunpack.c.l.s4 1983009808
    %v2113 = vunpack.c.0.s8 %v2112
    %v2114 = vlaneseq
    %v2115 = vshrl.u32 %v2114, 7
    %v2116 = vsub.s32 %v2113, %v2115
    %v2117 = vrot.slane %v2107, %v2116
    %v2119 = vunpack.c.l.s4 1983009808
    %v2120 = vunpack.c.0.s8 %v2119
    %v2121 = vlaneseq
    %v2122 = vshrl.u32 %v2121, 7
    %v2123 = vsub.s32 %v2120, %v2122
    %v2124 = vrot.slane %v2108, %v2123
    %v2126 = vunpack.c.l.s4 1983009808
    %v2127 = vunpack.c.0.s8 %v2126
    %v2128 = vlaneseq
    %v2129 = vshrl.u32 %v2128, 7
    %v2130 = vsub.s32 %v2127, %v2129
    %v2131 = vrot.slane %v2109, %v2130
    %v2133 = vunpack.c.l.s4 1983009808
    %v2134 = vunpack.c.0.s8 %v2133
    %v2135 = vlaneseq
    %v2136 = vshrl.u32 %v2135, 7
    %v2137 = vsub.s32 %v2134, %v2136
    %v2138 = vrot.slane %v2110, %v2137
    %v2139 = vcombine.low %v2117, %v2131
    %v2140 = vcombine.high %v2117, %v2131
    %v2141 = vcombine.low %v2124, %v2138
    %v2142 = vcombine.high %v2124, %v2138
    %v2143 = vcombine.low %v188, %v194
    %v2144 = vcombine.high %v188, %v194
    %v2145 = vcombine.low %v200, %v206
    %v2146 = vcombine.high %v200, %v206
    %v2148 = vunpack.c.l.s4 1983009808
    %v2149 = vunpack.c.0.s8 %v2148
    %v2150 = vlaneseq
    %v2151 = vshrl.u32 %v2150, 7
    %v2152 = vsub.s32 %v2149, %v2151
    %v2153 = vrot.slane %v2143, %v2152
    %v2155 = vunpack.c.l.s4 1983009808
    %v2156 = vunpack.c.0.s8 %v2155
    %v2157 = vlaneseq
    %v2158 = vshrl.u32 %v2157, 7
    %v2159 = vsub.s32 %v2156, %v2158
    %v2160 = vrot.slane %v2144, %v2159
    %v2162 = vunpack.c.l.s4 1983009808
    %v2163 = vunpack.c.0.s8 %v2162
    %v2164 = vlaneseq
    %v2165 = vshrl.u32 %v2164, 7
    %v2166 = vsub.s32 %v2163, %v2165
    %v2167 = vrot.slane %v2145, %v2166
    %v2169 = vunpack.c.l.s4 1983009808
    %v2170 = vunpack.c.0.s8 %v2169
    %v2171 = vlaneseq
    %v2172 = vshrl.u32 %v2171, 7
    %v2173 = vsub.s32 %v2170, %v2172
    %v2174 = vrot.slane %v2146, %v2173
    %v2175 = vcombine.low %v2153, %v2167
    %v2176 = vcombine.high %v2153, %v2167
    %v2177 = vcombine.low %v2160, %v2174
    %v2178 = vcombine.high %v2160, %v2174
    %v2179 = vcombine.low %v189, %v195
    %v2180 = vcombine.high %v189, %v195
    %v2181 = vcombine.low %v201, %v207
    %v2182 = vcombine.high %v201, %v207
    %v2184 = vunpack.c.l.s4 1983009808
    %v2185 = vunpack.c.0.s8 %v2184
    %v2186 = vlaneseq
    %v2187 = vshrl.u32 %v2186, 7
    %v2188 = vsub.s32 %v2185, %v2187
    %v2189 = vrot.slane %v2179, %v2188
    %v2191 = vunpack.c.l.s4 1983009808
    %v2192 = vunpack.c.0.s8 %v2191
    %v2193 = vlaneseq
    %v2194 = vshrl.u32 %v2193, 7
    %v2195 = vsub.s32 %v2192, %v2194
    %v2196 = vrot.slane %v2180, %v2195
    %v2198 = vunpack.c.l.s4 1983009808
    %v2199 = vunpack.c.0.s8 %v2198
    %v2200 = vlaneseq
    %v2201 = vshrl.u32 %v2200, 7
    %v2202 = vsub.s32 %v2199, %v2201
    %v2203 = vrot.slane %v2181, %v2202
    %v2205 = vunpack.c.l.s4 1983009808
    %v2206 = vunpack.c.0.s8 %v2205
    %v2207 = vlaneseq
    %v2208 = vshrl.u32 %v2207, 7
    %v2209 = vsub.s32 %v2206, %v2208
    %v2210 = vrot.slane %v2182, %v2209
    %v2211 = vcombine.low %v2189, %v2203
    %v2212 = vcombine.high %v2189, %v2203
    %v2213 = vcombine.low %v2196, %v2210
    %v2214 = vcombine.high %v2196, %v2210
    %v2215 = vcombine.low %v190, %v196
    %v2216 = vcombine.high %v190, %v196
    %v2217 = vcombine.low %v202, %v208
    %v2218 = vcombine.high %v202, %v208
    %v2220 = vunpack.c.l.s4 1983009808
    %v2221 = vunpack.c.0.s8 %v2220
    %v2222 = vlaneseq
    %v2223 = vshrl.u32 %v2222, 7
    %v2224 = vsub.s32 %v2221, %v2223
    %v2225 = vrot.slane %v2215, %v2224
    %v2227 = vunpack.c.l.s4 1983009808
    %v2228 = vunpack.c.0.s8 %v2227
    %v2229 = vlaneseq
    %v2230 = vshrl.u32 %v2229, 7
    %v2231 = vsub.s32 %v2228, %v2230
    %v2232 = vrot.slane %v2216, %v2231
    %v2234 = vunpack.c.l.s4 1983009808
    %v2235 = vunpack.c.0.s8 %v2234
    %v2236 = vlaneseq
    %v2237 = vshrl.u32 %v2236, 7
    %v2238 = vsub.s32 %v2235, %v2237
    %v2239 = vrot.slane %v2217, %v2238
    %v2241 = vunpack.c.l.s4 1983009808
    %v2242 = vunpack.c.0.s8 %v2241
    %v2243 = vlaneseq
    %v2244 = vshrl.u32 %v2243, 7
    %v2245 = vsub.s32 %v2242, %v2244
    %v2246 = vrot.slane %v2218, %v2245
    %v2247 = vcombine.low %v2225, %v2239
    %v2248 = vcombine.high %v2225, %v2239
    %v2249 = vcombine.low %v2232, %v2246
    %v2250 = vcombine.high %v2232, %v2246
    %v2251 = vcombine.low %v191, %v197
    %v2252 = vcombine.high %v191, %v197
    %v2253 = vcombine.low %v203, %v209
    %v2254 = vcombine.high %v203, %v209
    %v2256 = vunpack.c.l.s4 1983009808
    %v2257 = vunpack.c.0.s8 %v2256
    %v2258 = vlaneseq
    %v2259 = vshrl.u32 %v2258, 7
    %v2260 = vsub.s32 %v2257, %v2259
    %v2261 = vrot.slane %v2251, %v2260
    %v2263 = vunpack.c.l.s4 1983009808
    %v2264 = vunpack.c.0.s8 %v2263
    %v2265 = vlaneseq
    %v2266 = vshrl.u32 %v2265, 7
    %v2267 = vsub.s32 %v2264, %v2266
    %v2268 = vrot.slane %v2252, %v2267
    %v2270 = vunpack.c.l.s4 1983009808
    %v2271 = vunpack.c.0.s8 %v2270
    %v2272 = vlaneseq
    %v2273 = vshrl.u32 %v2272, 7
    %v2274 = vsub.s32 %v2271, %v2273
    %v2275 = vrot.slane %v2253, %v2274
    %v2277 = vunpack.c.l.s4 1983009808
    %v2278 = vunpack.c.0.s8 %v2277
    %v2279 = vlaneseq
    %v2280 = vshrl.u32 %v2279, 7
    %v2281 = vsub.s32 %v2278, %v2280
    %v2282 = vrot.slane %v2254, %v2281
    %v2283 = vcombine.low %v2261, %v2275
    %v2284 = vcombine.high %v2261, %v2275
    %v2285 = vcombine.low %v2268, %v2282
    %v2286 = vcombine.high %v2268, %v2282
    %v2287 = vcombine.low %v192, %v198
    %v2288 = vcombine.high %v192, %v198
    %v2289 = vcombine.low %v204, %v210
    %v2290 = vcombine.high %v204, %v210
    %v2292 = vunpack.c.l.s4 1983009808
    %v2293 = vunpack.c.0.s8 %v2292
    %v2294 = vlaneseq
    %v2295 = vshrl.u32 %v2294, 7
    %v2296 = vsub.s32 %v2293, %v2295
    %v2297 = vrot.slane %v2287, %v2296
    %v2299 = vunpack.c.l.s4 1983009808
    %v2300 = vunpack.c.0.s8 %v2299
    %v2301 = vlaneseq
    %v2302 = vshrl.u32 %v2301, 7
    %v2303 = vsub.s32 %v2300, %v2302
    %v2304 = vrot.slane %v2288, %v2303
    %v2306 = vunpack.c.l.s4 1983009808
    %v2307 = vunpack.c.0.s8 %v2306
    %v2308 = vlaneseq
    %v2309 = vshrl.u32 %v2308, 7
    %v2310 = vsub.s32 %v2307, %v2309
    %v2311 = vrot.slane %v2289, %v2310
    %v2313 = vunpack.c.l.s4 1983009808
    %v2314 = vunpack.c.0.s8 %v2313
    %v2315 = vlaneseq
    %v2316 = vshrl.u32 %v2315, 7
    %v2317 = vsub.s32 %v2314, %v2316
    %v2318 = vrot.slane %v2290, %v2317
    %v2319 = vcombine.low %v2297, %v2311
    %v2320 = vcombine.high %v2297, %v2311
    %v2321 = vcombine.low %v2304, %v2318
    %v2322 = vcombine.high %v2304, %v2318
    %v2323 = vcombine.low %v211, %v217
    %v2324 = vcombine.high %v211, %v217
    %v2325 = vcombine.low %v223, %v229
    %v2326 = vcombine.high %v223, %v229
    %v2328 = vunpack.c.l.s4 1983009808
    %v2329 = vunpack.c.0.s8 %v2328
    %v2330 = vlaneseq
    %v2331 = vshrl.u32 %v2330, 7
    %v2332 = vsub.s32 %v2329, %v2331
    %v2333 = vrot.slane %v2323, %v2332
    %v2335 = vunpack.c.l.s4 1983009808
    %v2336 = vunpack.c.0.s8 %v2335
    %v2337 = vlaneseq
    %v2338 = vshrl.u32 %v2337, 7
    %v2339 = vsub.s32 %v2336, %v2338
    %v2340 = vrot.slane %v2324, %v2339
    %v2342 = vunpack.c.l.s4 1983009808
    %v2343 = vunpack.c.0.s8 %v2342
    %v2344 = vlaneseq
    %v2345 = vshrl.u32 %v2344, 7
    %v2346 = vsub.s32 %v2343, %v2345
    %v2347 = vrot.slane %v2325, %v2346
    %v2349 = vunpack.c.l.s4 1983009808
    %v2350 = vunpack.c.0.s8 %v2349
    %v2351 = vlaneseq
    %v2352 = vshrl.u32 %v2351, 7
    %v2353 = vsub.s32 %v2350, %v2352
    %v2354 = vrot.slane %v2326, %v2353
    %v2355 = vcombine.low %v2333, %v2347
    %v2356 = vcombine.high %v2333, %v2347
    %v2357 = vcombine.low %v2340, %v2354
    %v2358 = vcombine.high %v2340, %v2354
    %v2359 = vcombine.low %v212, %v218
    %v2360 = vcombine.high %v212, %v218
    %v2361 = vcombine.low %v224, %v230
    %v2362 = vcombine.high %v224, %v230
    %v2364 = vunpack.c.l.s4 1983009808
    %v2365 = vunpack.c.0.s8 %v2364
    %v2366 = vlaneseq
    %v2367 = vshrl.u32 %v2366, 7
    %v2368 = vsub.s32 %v2365, %v2367
    %v2369 = vrot.slane %v2359, %v2368
    %v2371 = vunpack.c.l.s4 1983009808
    %v2372 = vunpack.c.0.s8 %v2371
    %v2373 = vlaneseq
    %v2374 = vshrl.u32 %v2373, 7
    %v2375 = vsub.s32 %v2372, %v2374
    %v2376 = vrot.slane %v2360, %v2375
    %v2378 = vunpack.c.l.s4 1983009808
    %v2379 = vunpack.c.0.s8 %v2378
    %v2380 = vlaneseq
    %v2381 = vshrl.u32 %v2380, 7
    %v2382 = vsub.s32 %v2379, %v2381
    %v2383 = vrot.slane %v2361, %v2382
    %v2385 = vunpack.c.l.s4 1983009808
    %v2386 = vunpack.c.0.s8 %v2385
    %v2387 = vlaneseq
    %v2388 = vshrl.u32 %v2387, 7
    %v2389 = vsub.s32 %v2386, %v2388
    %v2390 = vrot.slane %v2362, %v2389
    %v2391 = vcombine.low %v2369, %v2383
    %v2392 = vcombine.high %v2369, %v2383
    %v2393 = vcombine.low %v2376, %v2390
    %v2394 = vcombine.high %v2376, %v2390
    %v2395 = vcombine.low %v213, %v219
    %v2396 = vcombine.high %v213, %v219
    %v2397 = vcombine.low %v225, %v231
    %v2398 = vcombine.high %v225, %v231
    %v2400 = vunpack.c.l.s4 1983009808
    %v2401 = vunpack.c.0.s8 %v2400
    %v2402 = vlaneseq
    %v2403 = vshrl.u32 %v2402, 7
    %v2404 = vsub.s32 %v2401, %v2403
    %v2405 = vrot.slane %v2395, %v2404
    %v2407 = vunpack.c.l.s4 1983009808
    %v2408 = vunpack.c.0.s8 %v2407
    %v2409 = vlaneseq
    %v2410 = vshrl.u32 %v2409, 7
    %v2411 = vsub.s32 %v2408, %v2410
    %v2412 = vrot.slane %v2396, %v2411
    %v2414 = vunpack.c.l.s4 1983009808
    %v2415 = vunpack.c.0.s8 %v2414
    %v2416 = vlaneseq
    %v2417 = vshrl.u32 %v2416, 7
    %v2418 = vsub.s32 %v2415, %v2417
    %v2419 = vrot.slane %v2397, %v2418
    %v2421 = vunpack.c.l.s4 1983009808
    %v2422 = vunpack.c.0.s8 %v2421
    %v2423 = vlaneseq
    %v2424 = vshrl.u32 %v2423, 7
    %v2425 = vsub.s32 %v2422, %v2424
    %v2426 = vrot.slane %v2398, %v2425
    %v2427 = vcombine.low %v2405, %v2419
    %v2428 = vcombine.high %v2405, %v2419
    %v2429 = vcombine.low %v2412, %v2426
    %v2430 = vcombine.high %v2412, %v2426
    %v2431 = vcombine.low %v214, %v220
    %v2432 = vcombine.high %v214, %v220
    %v2433 = vcombine.low %v226, %v232
    %v2434 = vcombine.high %v226, %v232
    %v2436 = vunpack.c.l.s4 1983009808
    %v2437 = vunpack.c.0.s8 %v2436
    %v2438 = vlaneseq
    %v2439 = vshrl.u32 %v2438, 7
    %v2440 = vsub.s32 %v2437, %v2439
    %v2441 = vrot.slane %v2431, %v2440
    %v2443 = vunpack.c.l.s4 1983009808
    %v2444 = vunpack.c.0.s8 %v2443
    %v2445 = vlaneseq
    %v2446 = vshrl.u32 %v2445, 7
    %v2447 = vsub.s32 %v2444, %v2446
    %v2448 = vrot.slane %v2432, %v2447
    %v2450 = vunpack.c.l.s4 1983009808
    %v2451 = vunpack.c.0.s8 %v2450
    %v2452 = vlaneseq
    %v2453 = vshrl.u32 %v2452, 7
    %v2454 = vsub.s32 %v2451, %v2453
    %v2455 = vrot.slane %v2433, %v2454
    %v2457 = vunpack.c.l.s4 1983009808
    %v2458 = vunpack.c.0.s8 %v2457
    %v2459 = vlaneseq
    %v2460 = vshrl.u32 %v2459, 7
    %v2461 = vsub.s32 %v2458, %v2460
    %v2462 = vrot.slane %v2434, %v2461
    %v2463 = vcombine.low %v2441, %v2455
    %v2464 = vcombine.high %v2441, %v2455
    %v2465 = vcombine.low %v2448, %v2462
    %v2466 = vcombine.high %v2448, %v2462
    %v2467 = vcombine.low %v215, %v221
    %v2468 = vcombine.high %v215, %v221
    %v2469 = vcombine.low %v227, %v233
    %v2470 = vcombine.high %v227, %v233
    %v2472 = vunpack.c.l.s4 1983009808
    %v2473 = vunpack.c.0.s8 %v2472
    %v2474 = vlaneseq
    %v2475 = vshrl.u32 %v2474, 7
    %v2476 = vsub.s32 %v2473, %v2475
    %v2477 = vrot.slane %v2467, %v2476
    %v2479 = vunpack.c.l.s4 1983009808
    %v2480 = vunpack.c.0.s8 %v2479
    %v2481 = vlaneseq
    %v2482 = vshrl.u32 %v2481, 7
    %v2483 = vsub.s32 %v2480, %v2482
    %v2484 = vrot.slane %v2468, %v2483
    %v2486 = vunpack.c.l.s4 1983009808
    %v2487 = vunpack.c.0.s8 %v2486
    %v2488 = vlaneseq
    %v2489 = vshrl.u32 %v2488, 7
    %v2490 = vsub.s32 %v2487, %v2489
    %v2491 = vrot.slane %v2469, %v2490
    %v2493 = vunpack.c.l.s4 1983009808
    %v2494 = vunpack.c.0.s8 %v2493
    %v2495 = vlaneseq
    %v2496 = vshrl.u32 %v2495, 7
    %v2497 = vsub.s32 %v2494, %v2496
    %v2498 = vrot.slane %v2470, %v2497
    %v2499 = vcombine.low %v2477, %v2491
    %v2500 = vcombine.high %v2477, %v2491
    %v2501 = vcombine.low %v2484, %v2498
    %v2502 = vcombine.high %v2484, %v2498
    %v2503 = vcombine.low %v216, %v222
    %v2504 = vcombine.high %v216, %v222
    %v2505 = vcombine.low %v228, %v234
    %v2506 = vcombine.high %v228, %v234
    %v2508 = vunpack.c.l.s4 1983009808
    %v2509 = vunpack.c.0.s8 %v2508
    %v2510 = vlaneseq
    %v2511 = vshrl.u32 %v2510, 7
    %v2512 = vsub.s32 %v2509, %v2511
    %v2513 = vrot.slane %v2503, %v2512
    %v2515 = vunpack.c.l.s4 1983009808
    %v2516 = vunpack.c.0.s8 %v2515
    %v2517 = vlaneseq
    %v2518 = vshrl.u32 %v2517, 7
    %v2519 = vsub.s32 %v2516, %v2518
    %v2520 = vrot.slane %v2504, %v2519
    %v2522 = vunpack.c.l.s4 1983009808
    %v2523 = vunpack.c.0.s8 %v2522
    %v2524 = vlaneseq
    %v2525 = vshrl.u32 %v2524, 7
    %v2526 = vsub.s32 %v2523, %v2525
    %v2527 = vrot.slane %v2505, %v2526
    %v2529 = vunpack.c.l.s4 1983009808
    %v2530 = vunpack.c.0.s8 %v2529
    %v2531 = vlaneseq
    %v2532 = vshrl.u32 %v2531, 7
    %v2533 = vsub.s32 %v2530, %v2532
    %v2534 = vrot.slane %v2506, %v2533
    %v2535 = vcombine.low %v2513, %v2527
    %v2536 = vcombine.high %v2513, %v2527
    %v2537 = vcombine.low %v2520, %v2534
    %v2538 = vcombine.high %v2520, %v2534
    %v2539 = vcombine.low %v235, %v241
    %v2540 = vcombine.high %v235, %v241
    %v2541 = vcombine.low %v247, %v253
    %v2542 = vcombine.high %v247, %v253
    %v2544 = vunpack.c.l.s4 1983009808
    %v2545 = vunpack.c.0.s8 %v2544
    %v2546 = vlaneseq
    %v2547 = vshrl.u32 %v2546, 7
    %v2548 = vsub.s32 %v2545, %v2547
    %v2549 = vrot.slane %v2539, %v2548
    %v2551 = vunpack.c.l.s4 1983009808
    %v2552 = vunpack.c.0.s8 %v2551
    %v2553 = vlaneseq
    %v2554 = vshrl.u32 %v2553, 7
    %v2555 = vsub.s32 %v2552, %v2554
    %v2556 = vrot.slane %v2540, %v2555
    %v2558 = vunpack.c.l.s4 1983009808
    %v2559 = vunpack.c.0.s8 %v2558
    %v2560 = vlaneseq
    %v2561 = vshrl.u32 %v2560, 7
    %v2562 = vsub.s32 %v2559, %v2561
    %v2563 = vrot.slane %v2541, %v2562
    %v2565 = vunpack.c.l.s4 1983009808
    %v2566 = vunpack.c.0.s8 %v2565
    %v2567 = vlaneseq
    %v2568 = vshrl.u32 %v2567, 7
    %v2569 = vsub.s32 %v2566, %v2568
    %v2570 = vrot.slane %v2542, %v2569
    %v2571 = vcombine.low %v2549, %v2563
    %v2572 = vcombine.high %v2549, %v2563
    %v2573 = vcombine.low %v2556, %v2570
    %v2574 = vcombine.high %v2556, %v2570
    %v2575 = vcombine.low %v236, %v242
    %v2576 = vcombine.high %v236, %v242
    %v2577 = vcombine.low %v248, %v254
    %v2578 = vcombine.high %v248, %v254
    %v2580 = vunpack.c.l.s4 1983009808
    %v2581 = vunpack.c.0.s8 %v2580
    %v2582 = vlaneseq
    %v2583 = vshrl.u32 %v2582, 7
    %v2584 = vsub.s32 %v2581, %v2583
    %v2585 = vrot.slane %v2575, %v2584
    %v2587 = vunpack.c.l.s4 1983009808
    %v2588 = vunpack.c.0.s8 %v2587
    %v2589 = vlaneseq
    %v2590 = vshrl.u32 %v2589, 7
    %v2591 = vsub.s32 %v2588, %v2590
    %v2592 = vrot.slane %v2576, %v2591
    %v2594 = vunpack.c.l.s4 1983009808
    %v2595 = vunpack.c.0.s8 %v2594
    %v2596 = vlaneseq
    %v2597 = vshrl.u32 %v2596, 7
    %v2598 = vsub.s32 %v2595, %v2597
    %v2599 = vrot.slane %v2577, %v2598
    %v2601 = vunpack.c.l.s4 1983009808
    %v2602 = vunpack.c.0.s8 %v2601
    %v2603 = vlaneseq
    %v2604 = vshrl.u32 %v2603, 7
    %v2605 = vsub.s32 %v2602, %v2604
    %v2606 = vrot.slane %v2578, %v2605
    %v2607 = vcombine.low %v2585, %v2599
    %v2608 = vcombine.high %v2585, %v2599
    %v2609 = vcombine.low %v2592, %v2606
    %v2610 = vcombine.high %v2592, %v2606
    %v2611 = vcombine.low %v237, %v243
    %v2612 = vcombine.high %v237, %v243
    %v2613 = vcombine.low %v249, %v255
    %v2614 = vcombine.high %v249, %v255
    %v2616 = vunpack.c.l.s4 1983009808
    %v2617 = vunpack.c.0.s8 %v2616
    %v2618 = vlaneseq
    %v2619 = vshrl.u32 %v2618, 7
    %v2620 = vsub.s32 %v2617, %v2619
    %v2621 = vrot.slane %v2611, %v2620
    %v2623 = vunpack.c.l.s4 1983009808
    %v2624 = vunpack.c.0.s8 %v2623
    %v2625 = vlaneseq
    %v2626 = vshrl.u32 %v2625, 7
    %v2627 = vsub.s32 %v2624, %v2626
    %v2628 = vrot.slane %v2612, %v2627
    %v2630 = vunpack.c.l.s4 1983009808
    %v2631 = vunpack.c.0.s8 %v2630
    %v2632 = vlaneseq
    %v2633 = vshrl.u32 %v2632, 7
    %v2634 = vsub.s32 %v2631, %v2633
    %v2635 = vrot.slane %v2613, %v2634
    %v2637 = vunpack.c.l.s4 1983009808
    %v2638 = vunpack.c.0.s8 %v2637
    %v2639 = vlaneseq
    %v2640 = vshrl.u32 %v2639, 7
    %v2641 = vsub.s32 %v2638, %v2640
    %v2642 = vrot.slane %v2614, %v2641
    %v2643 = vcombine.low %v2621, %v2635
    %v2644 = vcombine.high %v2621, %v2635
    %v2645 = vcombine.low %v2628, %v2642
    %v2646 = vcombine.high %v2628, %v2642
    %v2647 = vcombine.low %v238, %v244
    %v2648 = vcombine.high %v238, %v244
    %v2649 = vcombine.low %v250, %v256
    %v2650 = vcombine.high %v250, %v256
    %v2652 = vunpack.c.l.s4 1983009808
    %v2653 = vunpack.c.0.s8 %v2652
    %v2654 = vlaneseq
    %v2655 = vshrl.u32 %v2654, 7
    %v2656 = vsub.s32 %v2653, %v2655
    %v2657 = vrot.slane %v2647, %v2656
    %v2659 = vunpack.c.l.s4 1983009808
    %v2660 = vunpack.c.0.s8 %v2659
    %v2661 = vlaneseq
    %v2662 = vshrl.u32 %v2661, 7
    %v2663 = vsub.s32 %v2660, %v2662
    %v2664 = vrot.slane %v2648, %v2663
    %v2666 = vunpack.c.l.s4 1983009808
    %v2667 = vunpack.c.0.s8 %v2666
    %v2668 = vlaneseq
    %v2669 = vshrl.u32 %v2668, 7
    %v2670 = vsub.s32 %v2667, %v2669
    %v2671 = vrot.slane %v2649, %v2670
    %v2673 = vunpack.c.l.s4 1983009808
    %v2674 = vunpack.c.0.s8 %v2673
    %v2675 = vlaneseq
    %v2676 = vshrl.u32 %v2675, 7
    %v2677 = vsub.s32 %v2674, %v2676
    %v2678 = vrot.slane %v2650, %v2677
    %v2679 = vcombine.low %v2657, %v2671
    %v2680 = vcombine.high %v2657, %v2671
    %v2681 = vcombine.low %v2664, %v2678
    %v2682 = vcombine.high %v2664, %v2678
    %v2683 = vcombine.low %v239, %v245
    %v2684 = vcombine.high %v239, %v245
    %v2685 = vcombine.low %v251, %v257
    %v2686 = vcombine.high %v251, %v257
    %v2688 = vunpack.c.l.s4 1983009808
    %v2689 = vunpack.c.0.s8 %v2688
    %v2690 = vlaneseq
    %v2691 = vshrl.u32 %v2690, 7
    %v2692 = vsub.s32 %v2689, %v2691
    %v2693 = vrot.slane %v2683, %v2692
    %v2695 = vunpack.c.l.s4 1983009808
    %v2696 = vunpack.c.0.s8 %v2695
    %v2697 = vlaneseq
    %v2698 = vshrl.u32 %v2697, 7
    %v2699 = vsub.s32 %v2696, %v2698
    %v2700 = vrot.slane %v2684, %v2699
    %v2702 = vunpack.c.l.s4 1983009808
    %v2703 = vunpack.c.0.s8 %v2702
    %v2704 = vlaneseq
    %v2705 = vshrl.u32 %v2704, 7
    %v2706 = vsub.s32 %v2703, %v2705
    %v2707 = vrot.slane %v2685, %v2706
    %v2709 = vunpack.c.l.s4 1983009808
    %v2710 = vunpack.c.0.s8 %v2709
    %v2711 = vlaneseq
    %v2712 = vshrl.u32 %v2711, 7
    %v2713 = vsub.s32 %v2710, %v2712
    %v2714 = vrot.slane %v2686, %v2713
    %v2715 = vcombine.low %v2693, %v2707
    %v2716 = vcombine.high %v2693, %v2707
    %v2717 = vcombine.low %v2700, %v2714
    %v2718 = vcombine.high %v2700, %v2714
    %v2719 = vcombine.low %v240, %v246
    %v2720 = vcombine.high %v240, %v246
    %v2721 = vcombine.low %v252, %v258
    %v2722 = vcombine.high %v252, %v258
    %v2724 = vunpack.c.l.s4 1983009808
    %v2725 = vunpack.c.0.s8 %v2724
    %v2726 = vlaneseq
    %v2727 = vshrl.u32 %v2726, 7
    %v2728 = vsub.s32 %v2725, %v2727
    %v2729 = vrot.slane %v2719, %v2728
    %v2731 = vunpack.c.l.s4 1983009808
    %v2732 = vunpack.c.0.s8 %v2731
    %v2733 = vlaneseq
    %v2734 = vshrl.u32 %v2733, 7
    %v2735 = vsub.s32 %v2732, %v2734
    %v2736 = vrot.slane %v2720, %v2735
    %v2738 = vunpack.c.l.s4 1983009808
    %v2739 = vunpack.c.0.s8 %v2738
    %v2740 = vlaneseq
    %v2741 = vshrl.u32 %v2740, 7
    %v2742 = vsub.s32 %v2739, %v2741
    %v2743 = vrot.slane %v2721, %v2742
    %v2745 = vunpack.c.l.s4 1983009808
    %v2746 = vunpack.c.0.s8 %v2745
    %v2747 = vlaneseq
    %v2748 = vshrl.u32 %v2747, 7
    %v2749 = vsub.s32 %v2746, %v2748
    %v2750 = vrot.slane %v2722, %v2749
    %v2751 = vcombine.low %v2729, %v2743
    %v2752 = vcombine.high %v2729, %v2743
    %v2753 = vcombine.low %v2736, %v2750
    %v2754 = vcombine.high %v2736, %v2750
    %v2755 = vcombine.low %v259, %v265
    %v2756 = vcombine.high %v259, %v265
    %v2757 = vcombine.low %v271, %v277
    %v2758 = vcombine.high %v271, %v277
    %v2760 = vunpack.c.l.s4 1983009808
    %v2761 = vunpack.c.0.s8 %v2760
    %v2762 = vlaneseq
    %v2763 = vshrl.u32 %v2762, 7
    %v2764 = vsub.s32 %v2761, %v2763
    %v2765 = vrot.slane %v2755, %v2764
    %v2767 = vunpack.c.l.s4 1983009808
    %v2768 = vunpack.c.0.s8 %v2767
    %v2769 = vlaneseq
    %v2770 = vshrl.u32 %v2769, 7
    %v2771 = vsub.s32 %v2768, %v2770
    %v2772 = vrot.slane %v2756, %v2771
    %v2774 = vunpack.c.l.s4 1983009808
    %v2775 = vunpack.c.0.s8 %v2774
    %v2776 = vlaneseq
    %v2777 = vshrl.u32 %v2776, 7
    %v2778 = vsub.s32 %v2775, %v2777
    %v2779 = vrot.slane %v2757, %v2778
    %v2781 = vunpack.c.l.s4 1983009808
    %v2782 = vunpack.c.0.s8 %v2781
    %v2783 = vlaneseq
    %v2784 = vshrl.u32 %v2783, 7
    %v2785 = vsub.s32 %v2782, %v2784
    %v2786 = vrot.slane %v2758, %v2785
    %v2787 = vcombine.low %v2765, %v2779
    %v2788 = vcombine.high %v2765, %v2779
    %v2789 = vcombine.low %v2772, %v2786
    %v2790 = vcombine.high %v2772, %v2786
    %v2791 = vcombine.low %v260, %v266
    %v2792 = vcombine.high %v260, %v266
    %v2793 = vcombine.low %v272, %v278
    %v2794 = vcombine.high %v272, %v278
    %v2796 = vunpack.c.l.s4 1983009808
    %v2797 = vunpack.c.0.s8 %v2796
    %v2798 = vlaneseq
    %v2799 = vshrl.u32 %v2798, 7
    %v2800 = vsub.s32 %v2797, %v2799
    %v2801 = vrot.slane %v2791, %v2800
    %v2803 = vunpack.c.l.s4 1983009808
    %v2804 = vunpack.c.0.s8 %v2803
    %v2805 = vlaneseq
    %v2806 = vshrl.u32 %v2805, 7
    %v2807 = vsub.s32 %v2804, %v2806
    %v2808 = vrot.slane %v2792, %v2807
    %v2810 = vunpack.c.l.s4 1983009808
    %v2811 = vunpack.c.0.s8 %v2810
    %v2812 = vlaneseq
    %v2813 = vshrl.u32 %v2812, 7
    %v2814 = vsub.s32 %v2811, %v2813
    %v2815 = vrot.slane %v2793, %v2814
    %v2817 = vunpack.c.l.s4 1983009808
    %v2818 = vunpack.c.0.s8 %v2817
    %v2819 = vlaneseq
    %v2820 = vshrl.u32 %v2819, 7
    %v2821 = vsub.s32 %v2818, %v2820
    %v2822 = vrot.slane %v2794, %v2821
    %v2823 = vcombine.low %v2801, %v2815
    %v2824 = vcombine.high %v2801, %v2815
    %v2825 = vcombine.low %v2808, %v2822
    %v2826 = vcombine.high %v2808, %v2822
    %v2827 = vcombine.low %v261, %v267
    %v2828 = vcombine.high %v261, %v267
    %v2829 = vcombine.low %v273, %v279
    %v2830 = vcombine.high %v273, %v279
    %v2832 = vunpack.c.l.s4 1983009808
    %v2833 = vunpack.c.0.s8 %v2832
    %v2834 = vlaneseq
    %v2835 = vshrl.u32 %v2834, 7
    %v2836 = vsub.s32 %v2833, %v2835
    %v2837 = vrot.slane %v2827, %v2836
    %v2839 = vunpack.c.l.s4 1983009808
    %v2840 = vunpack.c.0.s8 %v2839
    %v2841 = vlaneseq
    %v2842 = vshrl.u32 %v2841, 7
    %v2843 = vsub.s32 %v2840, %v2842
    %v2844 = vrot.slane %v2828, %v2843
    %v2846 = vunpack.c.l.s4 1983009808
    %v2847 = vunpack.c.0.s8 %v2846
    %v2848 = vlaneseq
    %v2849 = vshrl.u32 %v2848, 7
    %v2850 = vsub.s32 %v2847, %v2849
    %v2851 = vrot.slane %v2829, %v2850
    %v2853 = vunpack.c.l.s4 1983009808
    %v2854 = vunpack.c.0.s8 %v2853
    %v2855 = vlaneseq
    %v2856 = vshrl.u32 %v2855, 7
    %v2857 = vsub.s32 %v2854, %v2856
    %v2858 = vrot.slane %v2830, %v2857
    %v2859 = vcombine.low %v2837, %v2851
    %v2860 = vcombine.high %v2837, %v2851
    %v2861 = vcombine.low %v2844, %v2858
    %v2862 = vcombine.high %v2844, %v2858
    %v2863 = vcombine.low %v262, %v268
    %v2864 = vcombine.high %v262, %v268
    %v2865 = vcombine.low %v274, %v280
    %v2866 = vcombine.high %v274, %v280
    %v2868 = vunpack.c.l.s4 1983009808
    %v2869 = vunpack.c.0.s8 %v2868
    %v2870 = vlaneseq
    %v2871 = vshrl.u32 %v2870, 7
    %v2872 = vsub.s32 %v2869, %v2871
    %v2873 = vrot.slane %v2863, %v2872
    %v2875 = vunpack.c.l.s4 1983009808
    %v2876 = vunpack.c.0.s8 %v2875
    %v2877 = vlaneseq
    %v2878 = vshrl.u32 %v2877, 7
    %v2879 = vsub.s32 %v2876, %v2878
    %v2880 = vrot.slane %v2864, %v2879
    %v2882 = vunpack.c.l.s4 1983009808
    %v2883 = vunpack.c.0.s8 %v2882
    %v2884 = vlaneseq
    %v2885 = vshrl.u32 %v2884, 7
    %v2886 = vsub.s32 %v2883, %v2885
    %v2887 = vrot.slane %v2865, %v2886
    %v2889 = vunpack.c.l.s4 1983009808
    %v2890 = vunpack.c.0.s8 %v2889
    %v2891 = vlaneseq
    %v2892 = vshrl.u32 %v2891, 7
    %v2893 = vsub.s32 %v2890, %v2892
    %v2894 = vrot.slane %v2866, %v2893
    %v2895 = vcombine.low %v2873, %v2887
    %v2896 = vcombine.high %v2873, %v2887
    %v2897 = vcombine.low %v2880, %v2894
    %v2898 = vcombine.high %v2880, %v2894
    %v2899 = vcombine.low %v263, %v269
    %v2900 = vcombine.high %v263, %v269
    %v2901 = vcombine.low %v275, %v281
    %v2902 = vcombine.high %v275, %v281
    %v2904 = vunpack.c.l.s4 1983009808
    %v2905 = vunpack.c.0.s8 %v2904
    %v2906 = vlaneseq
    %v2907 = vshrl.u32 %v2906, 7
    %v2908 = vsub.s32 %v2905, %v2907
    %v2909 = vrot.slane %v2899, %v2908
    %v2911 = vunpack.c.l.s4 1983009808
    %v2912 = vunpack.c.0.s8 %v2911
    %v2913 = vlaneseq
    %v2914 = vshrl.u32 %v2913, 7
    %v2915 = vsub.s32 %v2912, %v2914
    %v2916 = vrot.slane %v2900, %v2915
    %v2918 = vunpack.c.l.s4 1983009808
    %v2919 = vunpack.c.0.s8 %v2918
    %v2920 = vlaneseq
    %v2921 = vshrl.u32 %v2920, 7
    %v2922 = vsub.s32 %v2919, %v2921
    %v2923 = vrot.slane %v2901, %v2922
    %v2925 = vunpack.c.l.s4 1983009808
    %v2926 = vunpack.c.0.s8 %v2925
    %v2927 = vlaneseq
    %v2928 = vshrl.u32 %v2927, 7
    %v2929 = vsub.s32 %v2926, %v2928
    %v2930 = vrot.slane %v2902, %v2929
    %v2931 = vcombine.low %v2909, %v2923
    %v2932 = vcombine.high %v2909, %v2923
    %v2933 = vcombine.low %v2916, %v2930
    %v2934 = vcombine.high %v2916, %v2930
    %v2935 = vcombine.low %v264, %v270
    %v2936 = vcombine.high %v264, %v270
    %v2937 = vcombine.low %v276, %v282
    %v2938 = vcombine.high %v276, %v282
    %v2940 = vunpack.c.l.s4 1983009808
    %v2941 = vunpack.c.0.s8 %v2940
    %v2942 = vlaneseq
    %v2943 = vshrl.u32 %v2942, 7
    %v2944 = vsub.s32 %v2941, %v2943
    %v2945 = vrot.slane %v2935, %v2944
    %v2947 = vunpack.c.l.s4 1983009808
    %v2948 = vunpack.c.0.s8 %v2947
    %v2949 = vlaneseq
    %v2950 = vshrl.u32 %v2949, 7
    %v2951 = vsub.s32 %v2948, %v2950
    %v2952 = vrot.slane %v2936, %v2951
    %v2954 = vunpack.c.l.s4 1983009808
    %v2955 = vunpack.c.0.s8 %v2954
    %v2956 = vlaneseq
    %v2957 = vshrl.u32 %v2956, 7
    %v2958 = vsub.s32 %v2955, %v2957
    %v2959 = vrot.slane %v2937, %v2958
    %v2961 = vunpack.c.l.s4 1983009808
    %v2962 = vunpack.c.0.s8 %v2961
    %v2963 = vlaneseq
    %v2964 = vshrl.u32 %v2963, 7
    %v2965 = vsub.s32 %v2962, %v2964
    %v2966 = vrot.slane %v2938, %v2965
    %v2967 = vcombine.low %v2945, %v2959
    %v2968 = vcombine.high %v2945, %v2959
    %v2969 = vcombine.low %v2952, %v2966
    %v2970 = vcombine.high %v2952, %v2966
    %v2971 = vcombine.low %v283, %v289
    %v2972 = vcombine.high %v283, %v289
    %v2973 = vcombine.low %v295, %v301
    %v2974 = vcombine.high %v295, %v301
    %v2976 = vunpack.c.l.s4 1983009808
    %v2977 = vunpack.c.0.s8 %v2976
    %v2978 = vlaneseq
    %v2979 = vshrl.u32 %v2978, 7
    %v2980 = vsub.s32 %v2977, %v2979
    %v2981 = vrot.slane %v2971, %v2980
    %v2983 = vunpack.c.l.s4 1983009808
    %v2984 = vunpack.c.0.s8 %v2983
    %v2985 = vlaneseq
    %v2986 = vshrl.u32 %v2985, 7
    %v2987 = vsub.s32 %v2984, %v2986
    %v2988 = vrot.slane %v2972, %v2987
    %v2990 = vunpack.c.l.s4 1983009808
    %v2991 = vunpack.c.0.s8 %v2990
    %v2992 = vlaneseq
    %v2993 = vshrl.u32 %v2992, 7
    %v2994 = vsub.s32 %v2991, %v2993
    %v2995 = vrot.slane %v2973, %v2994
    %v2997 = vunpack.c.l.s4 1983009808
    %v2998 = vunpack.c.0.s8 %v2997
    %v2999 = vlaneseq
    %v3000 = vshrl.u32 %v2999, 7
    %v3001 = vsub.s32 %v2998, %v3000
    %v3002 = vrot.slane %v2974, %v3001
    %v3003 = vcombine.low %v2981, %v2995
    %v3004 = vcombine.high %v2981, %v2995
    %v3005 = vcombine.low %v2988, %v3002
    %v3006 = vcombine.high %v2988, %v3002
    %v3007 = vcombine.low %v284, %v290
    %v3008 = vcombine.high %v284, %v290
    %v3009 = vcombine.low %v296, %v302
    %v3010 = vcombine.high %v296, %v302
    %v3012 = vunpack.c.l.s4 1983009808
    %v3013 = vunpack.c.0.s8 %v3012
    %v3014 = vlaneseq
    %v3015 = vshrl.u32 %v3014, 7
    %v3016 = vsub.s32 %v3013, %v3015
    %v3017 = vrot.slane %v3007, %v3016
    %v3019 = vunpack.c.l.s4 1983009808
    %v3020 = vunpack.c.0.s8 %v3019
    %v3021 = vlaneseq
    %v3022 = vshrl.u32 %v3021, 7
    %v3023 = vsub.s32 %v3020, %v3022
    %v3024 = vrot.slane %v3008, %v3023
    %v3026 = vunpack.c.l.s4 1983009808
    %v3027 = vunpack.c.0.s8 %v3026
    %v3028 = vlaneseq
    %v3029 = vshrl.u32 %v3028, 7
    %v3030 = vsub.s32 %v3027, %v3029
    %v3031 = vrot.slane %v3009, %v3030
    %v3033 = vunpack.c.l.s4 1983009808
    %v3034 = vunpack.c.0.s8 %v3033
    %v3035 = vlaneseq
    %v3036 = vshrl.u32 %v3035, 7
    %v3037 = vsub.s32 %v3034, %v3036
    %v3038 = vrot.slane %v3010, %v3037
    %v3039 = vcombine.low %v3017, %v3031
    %v3040 = vcombine.high %v3017, %v3031
    %v3041 = vcombine.low %v3024, %v3038
    %v3042 = vcombine.high %v3024, %v3038
    %v3043 = vcombine.low %v285, %v291
    %v3044 = vcombine.high %v285, %v291
    %v3045 = vcombine.low %v297, %v303
    %v3046 = vcombine.high %v297, %v303
    %v3048 = vunpack.c.l.s4 1983009808
    %v3049 = vunpack.c.0.s8 %v3048
    %v3050 = vlaneseq
    %v3051 = vshrl.u32 %v3050, 7
    %v3052 = vsub.s32 %v3049, %v3051
    %v3053 = vrot.slane %v3043, %v3052
    %v3055 = vunpack.c.l.s4 1983009808
    %v3056 = vunpack.c.0.s8 %v3055
    %v3057 = vlaneseq
    %v3058 = vshrl.u32 %v3057, 7
    %v3059 = vsub.s32 %v3056, %v3058
    %v3060 = vrot.slane %v3044, %v3059
    %v3062 = vunpack.c.l.s4 1983009808
    %v3063 = vunpack.c.0.s8 %v3062
    %v3064 = vlaneseq
    %v3065 = vshrl.u32 %v3064, 7
    %v3066 = vsub.s32 %v3063, %v3065
    %v3067 = vrot.slane %v3045, %v3066
    %v3069 = vunpack.c.l.s4 1983009808
    %v3070 = vunpack.c.0.s8 %v3069
    %v3071 = vlaneseq
    %v3072 = vshrl.u32 %v3071, 7
    %v3073 = vsub.s32 %v3070, %v3072
    %v3074 = vrot.slane %v3046, %v3073
    %v3075 = vcombine.low %v3053, %v3067
    %v3076 = vcombine.high %v3053, %v3067
    %v3077 = vcombine.low %v3060, %v3074
    %v3078 = vcombine.high %v3060, %v3074
    %v3079 = vcombine.low %v286, %v292
    %v3080 = vcombine.high %v286, %v292
    %v3081 = vcombine.low %v298, %v304
    %v3082 = vcombine.high %v298, %v304
    %v3084 = vunpack.c.l.s4 1983009808
    %v3085 = vunpack.c.0.s8 %v3084
    %v3086 = vlaneseq
    %v3087 = vshrl.u32 %v3086, 7
    %v3088 = vsub.s32 %v3085, %v3087
    %v3089 = vrot.slane %v3079, %v3088
    %v3091 = vunpack.c.l.s4 1983009808
    %v3092 = vunpack.c.0.s8 %v3091
    %v3093 = vlaneseq
    %v3094 = vshrl.u32 %v3093, 7
    %v3095 = vsub.s32 %v3092, %v3094
    %v3096 = vrot.slane %v3080, %v3095
    %v3098 = vunpack.c.l.s4 1983009808
    %v3099 = vunpack.c.0.s8 %v3098
    %v3100 = vlaneseq
    %v3101 = vshrl.u32 %v3100, 7
    %v3102 = vsub.s32 %v3099, %v3101
    %v3103 = vrot.slane %v3081, %v3102
    %v3105 = vunpack.c.l.s4 1983009808
    %v3106 = vunpack.c.0.s8 %v3105
    %v3107 = vlaneseq
    %v3108 = vshrl.u32 %v3107, 7
    %v3109 = vsub.s32 %v3106, %v3108
    %v3110 = vrot.slane %v3082, %v3109
    %v3111 = vcombine.low %v3089, %v3103
    %v3112 = vcombine.high %v3089, %v3103
    %v3113 = vcombine.low %v3096, %v3110
    %v3114 = vcombine.high %v3096, %v3110
    %v3115 = vcombine.low %v287, %v293
    %v3116 = vcombine.high %v287, %v293
    %v3117 = vcombine.low %v299, %v305
    %v3118 = vcombine.high %v299, %v305
    %v3120 = vunpack.c.l.s4 1983009808
    %v3121 = vunpack.c.0.s8 %v3120
    %v3122 = vlaneseq
    %v3123 = vshrl.u32 %v3122, 7
    %v3124 = vsub.s32 %v3121, %v3123
    %v3125 = vrot.slane %v3115, %v3124
    %v3127 = vunpack.c.l.s4 1983009808
    %v3128 = vunpack.c.0.s8 %v3127
    %v3129 = vlaneseq
    %v3130 = vshrl.u32 %v3129, 7
    %v3131 = vsub.s32 %v3128, %v3130
    %v3132 = vrot.slane %v3116, %v3131
    %v3134 = vunpack.c.l.s4 1983009808
    %v3135 = vunpack.c.0.s8 %v3134
    %v3136 = vlaneseq
    %v3137 = vshrl.u32 %v3136, 7
    %v3138 = vsub.s32 %v3135, %v3137
    %v3139 = vrot.slane %v3117, %v3138
    %v3141 = vunpack.c.l.s4 1983009808
    %v3142 = vunpack.c.0.s8 %v3141
    %v3143 = vlaneseq
    %v3144 = vshrl.u32 %v3143, 7
    %v3145 = vsub.s32 %v3142, %v3144
    %v3146 = vrot.slane %v3118, %v3145
    %v3147 = vcombine.low %v3125, %v3139
    %v3148 = vcombine.high %v3125, %v3139
    %v3149 = vcombine.low %v3132, %v3146
    %v3150 = vcombine.high %v3132, %v3146
    %v3151 = vcombine.low %v288, %v294
    %v3152 = vcombine.high %v288, %v294
    %v3153 = vcombine.low %v300, %v306
    %v3154 = vcombine.high %v300, %v306
    %v3156 = vunpack.c.l.s4 1983009808
    %v3157 = vunpack.c.0.s8 %v3156
    %v3158 = vlaneseq
    %v3159 = vshrl.u32 %v3158, 7
    %v3160 = vsub.s32 %v3157, %v3159
    %v3161 = vrot.slane %v3151, %v3160
    %v3163 = vunpack.c.l.s4 1983009808
    %v3164 = vunpack.c.0.s8 %v3163
    %v3165 = vlaneseq
    %v3166 = vshrl.u32 %v3165, 7
    %v3167 = vsub.s32 %v3164, %v3166
    %v3168 = vrot.slane %v3152, %v3167
    %v3170 = vunpack.c.l.s4 1983009808
    %v3171 = vunpack.c.0.s8 %v3170
    %v3172 = vlaneseq
    %v3173 = vshrl.u32 %v3172, 7
    %v3174 = vsub.s32 %v3171, %v3173
    %v3175 = vrot.slane %v3153, %v3174
    %v3177 = vunpack.c.l.s4 1983009808
    %v3178 = vunpack.c.0.s8 %v3177
    %v3179 = vlaneseq
    %v3180 = vshrl.u32 %v3179, 7
    %v3181 = vsub.s32 %v3178, %v3180
    %v3182 = vrot.slane %v3154, %v3181
    %v3183 = vcombine.low %v3161, %v3175
    %v3184 = vcombine.high %v3161, %v3175
    %v3185 = vcombine.low %v3168, %v3182
    %v3186 = vcombine.high %v3168, %v3182
    %v3187 = vcombine.low %v307, %v313
    %v3188 = vcombine.high %v307, %v313
    %v3189 = vcombine.low %v319, %v325
    %v3190 = vcombine.high %v319, %v325
    %v3192 = vunpack.c.l.s4 1983009808
    %v3193 = vunpack.c.0.s8 %v3192
    %v3194 = vlaneseq
    %v3195 = vshrl.u32 %v3194, 7
    %v3196 = vsub.s32 %v3193, %v3195
    %v3197 = vrot.slane %v3187, %v3196
    %v3199 = vunpack.c.l.s4 1983009808
    %v3200 = vunpack.c.0.s8 %v3199
    %v3201 = vlaneseq
    %v3202 = vshrl.u32 %v3201, 7
    %v3203 = vsub.s32 %v3200, %v3202
    %v3204 = vrot.slane %v3188, %v3203
    %v3206 = vunpack.c.l.s4 1983009808
    %v3207 = vunpack.c.0.s8 %v3206
    %v3208 = vlaneseq
    %v3209 = vshrl.u32 %v3208, 7
    %v3210 = vsub.s32 %v3207, %v3209
    %v3211 = vrot.slane %v3189, %v3210
    %v3213 = vunpack.c.l.s4 1983009808
    %v3214 = vunpack.c.0.s8 %v3213
    %v3215 = vlaneseq
    %v3216 = vshrl.u32 %v3215, 7
    %v3217 = vsub.s32 %v3214, %v3216
    %v3218 = vrot.slane %v3190, %v3217
    %v3219 = vcombine.low %v3197, %v3211
    %v3220 = vcombine.high %v3197, %v3211
    %v3221 = vcombine.low %v3204, %v3218
    %v3222 = vcombine.high %v3204, %v3218
    %v3223 = vcombine.low %v308, %v314
    %v3224 = vcombine.high %v308, %v314
    %v3225 = vcombine.low %v320, %v326
    %v3226 = vcombine.high %v320, %v326
    %v3228 = vunpack.c.l.s4 1983009808
    %v3229 = vunpack.c.0.s8 %v3228
    %v3230 = vlaneseq
    %v3231 = vshrl.u32 %v3230, 7
    %v3232 = vsub.s32 %v3229, %v3231
    %v3233 = vrot.slane %v3223, %v3232
    %v3235 = vunpack.c.l.s4 1983009808
    %v3236 = vunpack.c.0.s8 %v3235
    %v3237 = vlaneseq
    %v3238 = vshrl.u32 %v3237, 7
    %v3239 = vsub.s32 %v3236, %v3238
    %v3240 = vrot.slane %v3224, %v3239
    %v3242 = vunpack.c.l.s4 1983009808
    %v3243 = vunpack.c.0.s8 %v3242
    %v3244 = vlaneseq
    %v3245 = vshrl.u32 %v3244, 7
    %v3246 = vsub.s32 %v3243, %v3245
    %v3247 = vrot.slane %v3225, %v3246
    %v3249 = vunpack.c.l.s4 1983009808
    %v3250 = vunpack.c.0.s8 %v3249
    %v3251 = vlaneseq
    %v3252 = vshrl.u32 %v3251, 7
    %v3253 = vsub.s32 %v3250, %v3252
    %v3254 = vrot.slane %v3226, %v3253
    %v3255 = vcombine.low %v3233, %v3247
    %v3256 = vcombine.high %v3233, %v3247
    %v3257 = vcombine.low %v3240, %v3254
    %v3258 = vcombine.high %v3240, %v3254
    %v3259 = vcombine.low %v309, %v315
    %v3260 = vcombine.high %v309, %v315
    %v3261 = vcombine.low %v321, %v327
    %v3262 = vcombine.high %v321, %v327
    %v3264 = vunpack.c.l.s4 1983009808
    %v3265 = vunpack.c.0.s8 %v3264
    %v3266 = vlaneseq
    %v3267 = vshrl.u32 %v3266, 7
    %v3268 = vsub.s32 %v3265, %v3267
    %v3269 = vrot.slane %v3259, %v3268
    %v3271 = vunpack.c.l.s4 1983009808
    %v3272 = vunpack.c.0.s8 %v3271
    %v3273 = vlaneseq
    %v3274 = vshrl.u32 %v3273, 7
    %v3275 = vsub.s32 %v3272, %v3274
    %v3276 = vrot.slane %v3260, %v3275
    %v3278 = vunpack.c.l.s4 1983009808
    %v3279 = vunpack.c.0.s8 %v3278
    %v3280 = vlaneseq
    %v3281 = vshrl.u32 %v3280, 7
    %v3282 = vsub.s32 %v3279, %v3281
    %v3283 = vrot.slane %v3261, %v3282
    %v3285 = vunpack.c.l.s4 1983009808
    %v3286 = vunpack.c.0.s8 %v3285
    %v3287 = vlaneseq
    %v3288 = vshrl.u32 %v3287, 7
    %v3289 = vsub.s32 %v3286, %v3288
    %v3290 = vrot.slane %v3262, %v3289
    %v3291 = vcombine.low %v3269, %v3283
    %v3292 = vcombine.high %v3269, %v3283
    %v3293 = vcombine.low %v3276, %v3290
    %v3294 = vcombine.high %v3276, %v3290
    %v3295 = vcombine.low %v310, %v316
    %v3296 = vcombine.high %v310, %v316
    %v3297 = vcombine.low %v322, %v328
    %v3298 = vcombine.high %v322, %v328
    %v3300 = vunpack.c.l.s4 1983009808
    %v3301 = vunpack.c.0.s8 %v3300
    %v3302 = vlaneseq
    %v3303 = vshrl.u32 %v3302, 7
    %v3304 = vsub.s32 %v3301, %v3303
    %v3305 = vrot.slane %v3295, %v3304
    %v3307 = vunpack.c.l.s4 1983009808
    %v3308 = vunpack.c.0.s8 %v3307
    %v3309 = vlaneseq
    %v3310 = vshrl.u32 %v3309, 7
    %v3311 = vsub.s32 %v3308, %v3310
    %v3312 = vrot.slane %v3296, %v3311
    %v3314 = vunpack.c.l.s4 1983009808
    %v3315 = vunpack.c.0.s8 %v3314
    %v3316 = vlaneseq
    %v3317 = vshrl.u32 %v3316, 7
    %v3318 = vsub.s32 %v3315, %v3317
    %v3319 = vrot.slane %v3297, %v3318
    %v3321 = vunpack.c.l.s4 1983009808
    %v3322 = vunpack.c.0.s8 %v3321
    %v3323 = vlaneseq
    %v3324 = vshrl.u32 %v3323, 7
    %v3325 = vsub.s32 %v3322, %v3324
    %v3326 = vrot.slane %v3298, %v3325
    %v3327 = vcombine.low %v3305, %v3319
    %v3328 = vcombine.high %v3305, %v3319
    %v3329 = vcombine.low %v3312, %v3326
    %v3330 = vcombine.high %v3312, %v3326
    %v3331 = vcombine.low %v311, %v317
    %v3332 = vcombine.high %v311, %v317
    %v3333 = vcombine.low %v323, %v329
    %v3334 = vcombine.high %v323, %v329
    %v3336 = vunpack.c.l.s4 1983009808
    %v3337 = vunpack.c.0.s8 %v3336
    %v3338 = vlaneseq
    %v3339 = vshrl.u32 %v3338, 7
    %v3340 = vsub.s32 %v3337, %v3339
    %v3341 = vrot.slane %v3331, %v3340
    %v3343 = vunpack.c.l.s4 1983009808
    %v3344 = vunpack.c.0.s8 %v3343
    %v3345 = vlaneseq
    %v3346 = vshrl.u32 %v3345, 7
    %v3347 = vsub.s32 %v3344, %v3346
    %v3348 = vrot.slane %v3332, %v3347
    %v3350 = vunpack.c.l.s4 1983009808
    %v3351 = vunpack.c.0.s8 %v3350
    %v3352 = vlaneseq
    %v3353 = vshrl.u32 %v3352, 7
    %v3354 = vsub.s32 %v3351, %v3353
    %v3355 = vrot.slane %v3333, %v3354
    %v3357 = vunpack.c.l.s4 1983009808
    %v3358 = vunpack.c.0.s8 %v3357
    %v3359 = vlaneseq
    %v3360 = vshrl.u32 %v3359, 7
    %v3361 = vsub.s32 %v3358, %v3360
    %v3362 = vrot.slane %v3334, %v3361
    %v3363 = vcombine.low %v3341, %v3355
    %v3364 = vcombine.high %v3341, %v3355
    %v3365 = vcombine.low %v3348, %v3362
    %v3366 = vcombine.high %v3348, %v3362
    %v3367 = vcombine.low %v312, %v318
    %v3368 = vcombine.high %v312, %v318
    %v3369 = vcombine.low %v324, %v330
    %v3370 = vcombine.high %v324, %v330
    %v3372 = vunpack.c.l.s4 1983009808
    %v3373 = vunpack.c.0.s8 %v3372
    %v3374 = vlaneseq
    %v3375 = vshrl.u32 %v3374, 7
    %v3376 = vsub.s32 %v3373, %v3375
    %v3377 = vrot.slane %v3367, %v3376
    %v3379 = vunpack.c.l.s4 1983009808
    %v3380 = vunpack.c.0.s8 %v3379
    %v3381 = vlaneseq
    %v3382 = vshrl.u32 %v3381, 7
    %v3383 = vsub.s32 %v3380, %v3382
    %v3384 = vrot.slane %v3368, %v3383
    %v3386 = vunpack.c.l.s4 1983009808
    %v3387 = vunpack.c.0.s8 %v3386
    %v3388 = vlaneseq
    %v3389 = vshrl.u32 %v3388, 7
    %v3390 = vsub.s32 %v3387, %v3389
    %v3391 = vrot.slane %v3369, %v3390
    %v3393 = vunpack.c.l.s4 1983009808
    %v3394 = vunpack.c.0.s8 %v3393
    %v3395 = vlaneseq
    %v3396 = vshrl.u32 %v3395, 7
    %v3397 = vsub.s32 %v3394, %v3396
    %v3398 = vrot.slane %v3370, %v3397
    %v3399 = vcombine.low %v3377, %v3391
    %v3400 = vcombine.high %v3377, %v3391
    %v3401 = vcombine.low %v3384, %v3398
    %v3402 = vcombine.high %v3384, %v3398
    %v3403 = vcombine.low %v331, %v337
    %v3404 = vcombine.high %v331, %v337
    %v3405 = vcombine.low %v343, %v349
    %v3406 = vcombine.high %v343, %v349
    %v3408 = vunpack.c.l.s4 1983009808
    %v3409 = vunpack.c.0.s8 %v3408
    %v3410 = vlaneseq
    %v3411 = vshrl.u32 %v3410, 7
    %v3412 = vsub.s32 %v3409, %v3411
    %v3413 = vrot.slane %v3403, %v3412
    %v3415 = vunpack.c.l.s4 1983009808
    %v3416 = vunpack.c.0.s8 %v3415
    %v3417 = vlaneseq
    %v3418 = vshrl.u32 %v3417, 7
    %v3419 = vsub.s32 %v3416, %v3418
    %v3420 = vrot.slane %v3404, %v3419
    %v3422 = vunpack.c.l.s4 1983009808
    %v3423 = vunpack.c.0.s8 %v3422
    %v3424 = vlaneseq
    %v3425 = vshrl.u32 %v3424, 7
    %v3426 = vsub.s32 %v3423, %v3425
    %v3427 = vrot.slane %v3405, %v3426
    %v3429 = vunpack.c.l.s4 1983009808
    %v3430 = vunpack.c.0.s8 %v3429
    %v3431 = vlaneseq
    %v3432 = vshrl.u32 %v3431, 7
    %v3433 = vsub.s32 %v3430, %v3432
    %v3434 = vrot.slane %v3406, %v3433
    %v3435 = vcombine.low %v3413, %v3427
    %v3436 = vcombine.high %v3413, %v3427
    %v3437 = vcombine.low %v3420, %v3434
    %v3438 = vcombine.high %v3420, %v3434
    %v3439 = vcombine.low %v332, %v338
    %v3440 = vcombine.high %v332, %v338
    %v3441 = vcombine.low %v344, %v350
    %v3442 = vcombine.high %v344, %v350
    %v3444 = vunpack.c.l.s4 1983009808
    %v3445 = vunpack.c.0.s8 %v3444
    %v3446 = vlaneseq
    %v3447 = vshrl.u32 %v3446, 7
    %v3448 = vsub.s32 %v3445, %v3447
    %v3449 = vrot.slane %v3439, %v3448
    %v3451 = vunpack.c.l.s4 1983009808
    %v3452 = vunpack.c.0.s8 %v3451
    %v3453 = vlaneseq
    %v3454 = vshrl.u32 %v3453, 7
    %v3455 = vsub.s32 %v3452, %v3454
    %v3456 = vrot.slane %v3440, %v3455
    %v3458 = vunpack.c.l.s4 1983009808
    %v3459 = vunpack.c.0.s8 %v3458
    %v3460 = vlaneseq
    %v3461 = vshrl.u32 %v3460, 7
    %v3462 = vsub.s32 %v3459, %v3461
    %v3463 = vrot.slane %v3441, %v3462
    %v3465 = vunpack.c.l.s4 1983009808
    %v3466 = vunpack.c.0.s8 %v3465
    %v3467 = vlaneseq
    %v3468 = vshrl.u32 %v3467, 7
    %v3469 = vsub.s32 %v3466, %v3468
    %v3470 = vrot.slane %v3442, %v3469
    %v3471 = vcombine.low %v3449, %v3463
    %v3472 = vcombine.high %v3449, %v3463
    %v3473 = vcombine.low %v3456, %v3470
    %v3474 = vcombine.high %v3456, %v3470
    %v3475 = vcombine.low %v333, %v339
    %v3476 = vcombine.high %v333, %v339
    %v3477 = vcombine.low %v345, %v351
    %v3478 = vcombine.high %v345, %v351
    %v3480 = vunpack.c.l.s4 1983009808
    %v3481 = vunpack.c.0.s8 %v3480
    %v3482 = vlaneseq
    %v3483 = vshrl.u32 %v3482, 7
    %v3484 = vsub.s32 %v3481, %v3483
    %v3485 = vrot.slane %v3475, %v3484
    %v3487 = vunpack.c.l.s4 1983009808
    %v3488 = vunpack.c.0.s8 %v3487
    %v3489 = vlaneseq
    %v3490 = vshrl.u32 %v3489, 7
    %v3491 = vsub.s32 %v3488, %v3490
    %v3492 = vrot.slane %v3476, %v3491
    %v3494 = vunpack.c.l.s4 1983009808
    %v3495 = vunpack.c.0.s8 %v3494
    %v3496 = vlaneseq
    %v3497 = vshrl.u32 %v3496, 7
    %v3498 = vsub.s32 %v3495, %v3497
    %v3499 = vrot.slane %v3477, %v3498
    %v3501 = vunpack.c.l.s4 1983009808
    %v3502 = vunpack.c.0.s8 %v3501
    %v3503 = vlaneseq
    %v3504 = vshrl.u32 %v3503, 7
    %v3505 = vsub.s32 %v3502, %v3504
    %v3506 = vrot.slane %v3478, %v3505
    %v3507 = vcombine.low %v3485, %v3499
    %v3508 = vcombine.high %v3485, %v3499
    %v3509 = vcombine.low %v3492, %v3506
    %v3510 = vcombine.high %v3492, %v3506
    %v3511 = vcombine.low %v334, %v340
    %v3512 = vcombine.high %v334, %v340
    %v3513 = vcombine.low %v346, %v352
    %v3514 = vcombine.high %v346, %v352
    %v3516 = vunpack.c.l.s4 1983009808
    %v3517 = vunpack.c.0.s8 %v3516
    %v3518 = vlaneseq
    %v3519 = vshrl.u32 %v3518, 7
    %v3520 = vsub.s32 %v3517, %v3519
    %v3521 = vrot.slane %v3511, %v3520
    %v3523 = vunpack.c.l.s4 1983009808
    %v3524 = vunpack.c.0.s8 %v3523
    %v3525 = vlaneseq
    %v3526 = vshrl.u32 %v3525, 7
    %v3527 = vsub.s32 %v3524, %v3526
    %v3528 = vrot.slane %v3512, %v3527
    %v3530 = vunpack.c.l.s4 1983009808
    %v3531 = vunpack.c.0.s8 %v3530
    %v3532 = vlaneseq
    %v3533 = vshrl.u32 %v3532, 7
    %v3534 = vsub.s32 %v3531, %v3533
    %v3535 = vrot.slane %v3513, %v3534
    %v3537 = vunpack.c.l.s4 1983009808
    %v3538 = vunpack.c.0.s8 %v3537
    %v3539 = vlaneseq
    %v3540 = vshrl.u32 %v3539, 7
    %v3541 = vsub.s32 %v3538, %v3540
    %v3542 = vrot.slane %v3514, %v3541
    %v3543 = vcombine.low %v3521, %v3535
    %v3544 = vcombine.high %v3521, %v3535
    %v3545 = vcombine.low %v3528, %v3542
    %v3546 = vcombine.high %v3528, %v3542
    %v3547 = vcombine.low %v335, %v341
    %v3548 = vcombine.high %v335, %v341
    %v3549 = vcombine.low %v347, %v353
    %v3550 = vcombine.high %v347, %v353
    %v3552 = vunpack.c.l.s4 1983009808
    %v3553 = vunpack.c.0.s8 %v3552
    %v3554 = vlaneseq
    %v3555 = vshrl.u32 %v3554, 7
    %v3556 = vsub.s32 %v3553, %v3555
    %v3557 = vrot.slane %v3547, %v3556
    %v3559 = vunpack.c.l.s4 1983009808
    %v3560 = vunpack.c.0.s8 %v3559
    %v3561 = vlaneseq
    %v3562 = vshrl.u32 %v3561, 7
    %v3563 = vsub.s32 %v3560, %v3562
    %v3564 = vrot.slane %v3548, %v3563
    %v3566 = vunpack.c.l.s4 1983009808
    %v3567 = vunpack.c.0.s8 %v3566
    %v3568 = vlaneseq
    %v3569 = vshrl.u32 %v3568, 7
    %v3570 = vsub.s32 %v3567, %v3569
    %v3571 = vrot.slane %v3549, %v3570
    %v3573 = vunpack.c.l.s4 1983009808
    %v3574 = vunpack.c.0.s8 %v3573
    %v3575 = vlaneseq
    %v3576 = vshrl.u32 %v3575, 7
    %v3577 = vsub.s32 %v3574, %v3576
    %v3578 = vrot.slane %v3550, %v3577
    %v3579 = vcombine.low %v3557, %v3571
    %v3580 = vcombine.high %v3557, %v3571
    %v3581 = vcombine.low %v3564, %v3578
    %v3582 = vcombine.high %v3564, %v3578
    %v3583 = vcombine.low %v336, %v342
    %v3584 = vcombine.high %v336, %v342
    %v3585 = vcombine.low %v348, %v354
    %v3586 = vcombine.high %v348, %v354
    %v3588 = vunpack.c.l.s4 1983009808
    %v3589 = vunpack.c.0.s8 %v3588
    %v3590 = vlaneseq
    %v3591 = vshrl.u32 %v3590, 7
    %v3592 = vsub.s32 %v3589, %v3591
    %v3593 = vrot.slane %v3583, %v3592
    %v3595 = vunpack.c.l.s4 1983009808
    %v3596 = vunpack.c.0.s8 %v3595
    %v3597 = vlaneseq
    %v3598 = vshrl.u32 %v3597, 7
    %v3599 = vsub.s32 %v3596, %v3598
    %v3600 = vrot.slane %v3584, %v3599
    %v3602 = vunpack.c.l.s4 1983009808
    %v3603 = vunpack.c.0.s8 %v3602
    %v3604 = vlaneseq
    %v3605 = vshrl.u32 %v3604, 7
    %v3606 = vsub.s32 %v3603, %v3605
    %v3607 = vrot.slane %v3585, %v3606
    %v3609 = vunpack.c.l.s4 1983009808
    %v3610 = vunpack.c.0.s8 %v3609
    %v3611 = vlaneseq
    %v3612 = vshrl.u32 %v3611, 7
    %v3613 = vsub.s32 %v3610, %v3612
    %v3614 = vrot.slane %v3586, %v3613
    %v3615 = vcombine.low %v3593, %v3607
    %v3616 = vcombine.high %v3593, %v3607
    %v3617 = vcombine.low %v3600, %v3614
    %v3618 = vcombine.high %v3600, %v3614
    %v3619 = vcombine.low %v355, %v361
    %v3620 = vcombine.high %v355, %v361
    %v3621 = vcombine.low %v367, %v373
    %v3622 = vcombine.high %v367, %v373
    %v3624 = vunpack.c.l.s4 1983009808
    %v3625 = vunpack.c.0.s8 %v3624
    %v3626 = vlaneseq
    %v3627 = vshrl.u32 %v3626, 7
    %v3628 = vsub.s32 %v3625, %v3627
    %v3629 = vrot.slane %v3619, %v3628
    %v3631 = vunpack.c.l.s4 1983009808
    %v3632 = vunpack.c.0.s8 %v3631
    %v3633 = vlaneseq
    %v3634 = vshrl.u32 %v3633, 7
    %v3635 = vsub.s32 %v3632, %v3634
    %v3636 = vrot.slane %v3620, %v3635
    %v3638 = vunpack.c.l.s4 1983009808
    %v3639 = vunpack.c.0.s8 %v3638
    %v3640 = vlaneseq
    %v3641 = vshrl.u32 %v3640, 7
    %v3642 = vsub.s32 %v3639, %v3641
    %v3643 = vrot.slane %v3621, %v3642
    %v3645 = vunpack.c.l.s4 1983009808
    %v3646 = vunpack.c.0.s8 %v3645
    %v3647 = vlaneseq
    %v3648 = vshrl.u32 %v3647, 7
    %v3649 = vsub.s32 %v3646, %v3648
    %v3650 = vrot.slane %v3622, %v3649
    %v3651 = vcombine.low %v3629, %v3643
    %v3652 = vcombine.high %v3629, %v3643
    %v3653 = vcombine.low %v3636, %v3650
    %v3654 = vcombine.high %v3636, %v3650
    %v3655 = vcombine.low %v356, %v362
    %v3656 = vcombine.high %v356, %v362
    %v3657 = vcombine.low %v368, %v374
    %v3658 = vcombine.high %v368, %v374
    %v3660 = vunpack.c.l.s4 1983009808
    %v3661 = vunpack.c.0.s8 %v3660
    %v3662 = vlaneseq
    %v3663 = vshrl.u32 %v3662, 7
    %v3664 = vsub.s32 %v3661, %v3663
    %v3665 = vrot.slane %v3655, %v3664
    %v3667 = vunpack.c.l.s4 1983009808
    %v3668 = vunpack.c.0.s8 %v3667
    %v3669 = vlaneseq
    %v3670 = vshrl.u32 %v3669, 7
    %v3671 = vsub.s32 %v3668, %v3670
    %v3672 = vrot.slane %v3656, %v3671
    %v3674 = vunpack.c.l.s4 1983009808
    %v3675 = vunpack.c.0.s8 %v3674
    %v3676 = vlaneseq
    %v3677 = vshrl.u32 %v3676, 7
    %v3678 = vsub.s32 %v3675, %v3677
    %v3679 = vrot.slane %v3657, %v3678
    %v3681 = vunpack.c.l.s4 1983009808
    %v3682 = vunpack.c.0.s8 %v3681
    %v3683 = vlaneseq
    %v3684 = vshrl.u32 %v3683, 7
    %v3685 = vsub.s32 %v3682, %v3684
    %v3686 = vrot.slane %v3658, %v3685
    %v3687 = vcombine.low %v3665, %v3679
    %v3688 = vcombine.high %v3665, %v3679
    %v3689 = vcombine.low %v3672, %v3686
    %v3690 = vcombine.high %v3672, %v3686
    %v3691 = vcombine.low %v357, %v363
    %v3692 = vcombine.high %v357, %v363
    %v3693 = vcombine.low %v369, %v375
    %v3694 = vcombine.high %v369, %v375
    %v3696 = vunpack.c.l.s4 1983009808
    %v3697 = vunpack.c.0.s8 %v3696
    %v3698 = vlaneseq
    %v3699 = vshrl.u32 %v3698, 7
    %v3700 = vsub.s32 %v3697, %v3699
    %v3701 = vrot.slane %v3691, %v3700
    %v3703 = vunpack.c.l.s4 1983009808
    %v3704 = vunpack.c.0.s8 %v3703
    %v3705 = vlaneseq
    %v3706 = vshrl.u32 %v3705, 7
    %v3707 = vsub.s32 %v3704, %v3706
    %v3708 = vrot.slane %v3692, %v3707
    %v3710 = vunpack.c.l.s4 1983009808
    %v3711 = vunpack.c.0.s8 %v3710
    %v3712 = vlaneseq
    %v3713 = vshrl.u32 %v3712, 7
    %v3714 = vsub.s32 %v3711, %v3713
    %v3715 = vrot.slane %v3693, %v3714
    %v3717 = vunpack.c.l.s4 1983009808
    %v3718 = vunpack.c.0.s8 %v3717
    %v3719 = vlaneseq
    %v3720 = vshrl.u32 %v3719, 7
    %v3721 = vsub.s32 %v3718, %v3720
    %v3722 = vrot.slane %v3694, %v3721
    %v3723 = vcombine.low %v3701, %v3715
    %v3724 = vcombine.high %v3701, %v3715
    %v3725 = vcombine.low %v3708, %v3722
    %v3726 = vcombine.high %v3708, %v3722
    %v3727 = vcombine.low %v358, %v364
    %v3728 = vcombine.high %v358, %v364
    %v3729 = vcombine.low %v370, %v376
    %v3730 = vcombine.high %v370, %v376
    %v3732 = vunpack.c.l.s4 1983009808
    %v3733 = vunpack.c.0.s8 %v3732
    %v3734 = vlaneseq
    %v3735 = vshrl.u32 %v3734, 7
    %v3736 = vsub.s32 %v3733, %v3735
    %v3737 = vrot.slane %v3727, %v3736
    %v3739 = vunpack.c.l.s4 1983009808
    %v3740 = vunpack.c.0.s8 %v3739
    %v3741 = vlaneseq
    %v3742 = vshrl.u32 %v3741, 7
    %v3743 = vsub.s32 %v3740, %v3742
    %v3744 = vrot.slane %v3728, %v3743
    %v3746 = vunpack.c.l.s4 1983009808
    %v3747 = vunpack.c.0.s8 %v3746
    %v3748 = vlaneseq
    %v3749 = vshrl.u32 %v3748, 7
    %v3750 = vsub.s32 %v3747, %v3749
    %v3751 = vrot.slane %v3729, %v3750
    %v3753 = vunpack.c.l.s4 1983009808
    %v3754 = vunpack.c.0.s8 %v3753
    %v3755 = vlaneseq
    %v3756 = vshrl.u32 %v3755, 7
    %v3757 = vsub.s32 %v3754, %v3756
    %v3758 = vrot.slane %v3730, %v3757
    %v3759 = vcombine.low %v3737, %v3751
    %v3760 = vcombine.high %v3737, %v3751
    %v3761 = vcombine.low %v3744, %v3758
    %v3762 = vcombine.high %v3744, %v3758
    %v3763 = vcombine.low %v359, %v365
    %v3764 = vcombine.high %v359, %v365
    %v3765 = vcombine.low %v371, %v377
    %v3766 = vcombine.high %v371, %v377
    %v3768 = vunpack.c.l.s4 1983009808
    %v3769 = vunpack.c.0.s8 %v3768
    %v3770 = vlaneseq
    %v3771 = vshrl.u32 %v3770, 7
    %v3772 = vsub.s32 %v3769, %v3771
    %v3773 = vrot.slane %v3763, %v3772
    %v3775 = vunpack.c.l.s4 1983009808
    %v3776 = vunpack.c.0.s8 %v3775
    %v3777 = vlaneseq
    %v3778 = vshrl.u32 %v3777, 7
    %v3779 = vsub.s32 %v3776, %v3778
    %v3780 = vrot.slane %v3764, %v3779
    %v3782 = vunpack.c.l.s4 1983009808
    %v3783 = vunpack.c.0.s8 %v3782
    %v3784 = vlaneseq
    %v3785 = vshrl.u32 %v3784, 7
    %v3786 = vsub.s32 %v3783, %v3785
    %v3787 = vrot.slane %v3765, %v3786
    %v3789 = vunpack.c.l.s4 1983009808
    %v3790 = vunpack.c.0.s8 %v3789
    %v3791 = vlaneseq
    %v3792 = vshrl.u32 %v3791, 7
    %v3793 = vsub.s32 %v3790, %v3792
    %v3794 = vrot.slane %v3766, %v3793
    %v3795 = vcombine.low %v3773, %v3787
    %v3796 = vcombine.high %v3773, %v3787
    %v3797 = vcombine.low %v3780, %v3794
    %v3798 = vcombine.high %v3780, %v3794
    %v3799 = vcombine.low %v360, %v366
    %v3800 = vcombine.high %v360, %v366
    %v3801 = vcombine.low %v372, %v378
    %v3802 = vcombine.high %v372, %v378
    %v3804 = vunpack.c.l.s4 1983009808
    %v3805 = vunpack.c.0.s8 %v3804
    %v3806 = vlaneseq
    %v3807 = vshrl.u32 %v3806, 7
    %v3808 = vsub.s32 %v3805, %v3807
    %v3809 = vrot.slane %v3799, %v3808
    %v3811 = vunpack.c.l.s4 1983009808
    %v3812 = vunpack.c.0.s8 %v3811
    %v3813 = vlaneseq
    %v3814 = vshrl.u32 %v3813, 7
    %v3815 = vsub.s32 %v3812, %v3814
    %v3816 = vrot.slane %v3800, %v3815
    %v3818 = vunpack.c.l.s4 1983009808
    %v3819 = vunpack.c.0.s8 %v3818
    %v3820 = vlaneseq
    %v3821 = vshrl.u32 %v3820, 7
    %v3822 = vsub.s32 %v3819, %v3821
    %v3823 = vrot.slane %v3801, %v3822
    %v3825 = vunpack.c.l.s4 1983009808
    %v3826 = vunpack.c.0.s8 %v3825
    %v3827 = vlaneseq
    %v3828 = vshrl.u32 %v3827, 7
    %v3829 = vsub.s32 %v3826, %v3828
    %v3830 = vrot.slane %v3802, %v3829
    %v3831 = vcombine.low %v3809, %v3823
    %v3832 = vcombine.high %v3809, %v3823
    %v3833 = vcombine.low %v3816, %v3830
    %v3834 = vcombine.high %v3816, %v3830
    %v3835 = vcombine.low %v379, %v385
    %v3836 = vcombine.high %v379, %v385
    %v3837 = vcombine.low %v391, %v397
    %v3838 = vcombine.high %v391, %v397
    %v3840 = vunpack.c.l.s4 1983009808
    %v3841 = vunpack.c.0.s8 %v3840
    %v3842 = vlaneseq
    %v3843 = vshrl.u32 %v3842, 7
    %v3844 = vsub.s32 %v3841, %v3843
    %v3845 = vrot.slane %v3835, %v3844
    %v3847 = vunpack.c.l.s4 1983009808
    %v3848 = vunpack.c.0.s8 %v3847
    %v3849 = vlaneseq
    %v3850 = vshrl.u32 %v3849, 7
    %v3851 = vsub.s32 %v3848, %v3850
    %v3852 = vrot.slane %v3836, %v3851
    %v3854 = vunpack.c.l.s4 1983009808
    %v3855 = vunpack.c.0.s8 %v3854
    %v3856 = vlaneseq
    %v3857 = vshrl.u32 %v3856, 7
    %v3858 = vsub.s32 %v3855, %v3857
    %v3859 = vrot.slane %v3837, %v3858
    %v3861 = vunpack.c.l.s4 1983009808
    %v3862 = vunpack.c.0.s8 %v3861
    %v3863 = vlaneseq
    %v3864 = vshrl.u32 %v3863, 7
    %v3865 = vsub.s32 %v3862, %v3864
    %v3866 = vrot.slane %v3838, %v3865
    %v3867 = vcombine.low %v3845, %v3859
    %v3868 = vcombine.high %v3845, %v3859
    %v3869 = vcombine.low %v3852, %v3866
    %v3870 = vcombine.high %v3852, %v3866
    %v3871 = vcombine.low %v380, %v386
    %v3872 = vcombine.high %v380, %v386
    %v3873 = vcombine.low %v392, %v398
    %v3874 = vcombine.high %v392, %v398
    %v3876 = vunpack.c.l.s4 1983009808
    %v3877 = vunpack.c.0.s8 %v3876
    %v3878 = vlaneseq
    %v3879 = vshrl.u32 %v3878, 7
    %v3880 = vsub.s32 %v3877, %v3879
    %v3881 = vrot.slane %v3871, %v3880
    %v3883 = vunpack.c.l.s4 1983009808
    %v3884 = vunpack.c.0.s8 %v3883
    %v3885 = vlaneseq
    %v3886 = vshrl.u32 %v3885, 7
    %v3887 = vsub.s32 %v3884, %v3886
    %v3888 = vrot.slane %v3872, %v3887
    %v3890 = vunpack.c.l.s4 1983009808
    %v3891 = vunpack.c.0.s8 %v3890
    %v3892 = vlaneseq
    %v3893 = vshrl.u32 %v3892, 7
    %v3894 = vsub.s32 %v3891, %v3893
    %v3895 = vrot.slane %v3873, %v3894
    %v3897 = vunpack.c.l.s4 1983009808
    %v3898 = vunpack.c.0.s8 %v3897
    %v3899 = vlaneseq
    %v3900 = vshrl.u32 %v3899, 7
    %v3901 = vsub.s32 %v3898, %v3900
    %v3902 = vrot.slane %v3874, %v3901
    %v3903 = vcombine.low %v3881, %v3895
    %v3904 = vcombine.high %v3881, %v3895
    %v3905 = vcombine.low %v3888, %v3902
    %v3906 = vcombine.high %v3888, %v3902
    %v3907 = vcombine.low %v381, %v387
    %v3908 = vcombine.high %v381, %v387
    %v3909 = vcombine.low %v393, %v399
    %v3910 = vcombine.high %v393, %v399
    %v3912 = vunpack.c.l.s4 1983009808
    %v3913 = vunpack.c.0.s8 %v3912
    %v3914 = vlaneseq
    %v3915 = vshrl.u32 %v3914, 7
    %v3916 = vsub.s32 %v3913, %v3915
    %v3917 = vrot.slane %v3907, %v3916
    %v3919 = vunpack.c.l.s4 1983009808
    %v3920 = vunpack.c.0.s8 %v3919
    %v3921 = vlaneseq
    %v3922 = vshrl.u32 %v3921, 7
    %v3923 = vsub.s32 %v3920, %v3922
    %v3924 = vrot.slane %v3908, %v3923
    %v3926 = vunpack.c.l.s4 1983009808
    %v3927 = vunpack.c.0.s8 %v3926
    %v3928 = vlaneseq
    %v3929 = vshrl.u32 %v3928, 7
    %v3930 = vsub.s32 %v3927, %v3929
    %v3931 = vrot.slane %v3909, %v3930
    %v3933 = vunpack.c.l.s4 1983009808
    %v3934 = vunpack.c.0.s8 %v3933
    %v3935 = vlaneseq
    %v3936 = vshrl.u32 %v3935, 7
    %v3937 = vsub.s32 %v3934, %v3936
    %v3938 = vrot.slane %v3910, %v3937
    %v3939 = vcombine.low %v3917, %v3931
    %v3940 = vcombine.high %v3917, %v3931
    %v3941 = vcombine.low %v3924, %v3938
    %v3942 = vcombine.high %v3924, %v3938
    %v3943 = vcombine.low %v382, %v388
    %v3944 = vcombine.high %v382, %v388
    %v3945 = vcombine.low %v394, %v400
    %v3946 = vcombine.high %v394, %v400
    %v3948 = vunpack.c.l.s4 1983009808
    %v3949 = vunpack.c.0.s8 %v3948
    %v3950 = vlaneseq
    %v3951 = vshrl.u32 %v3950, 7
    %v3952 = vsub.s32 %v3949, %v3951
    %v3953 = vrot.slane %v3943, %v3952
    %v3955 = vunpack.c.l.s4 1983009808
    %v3956 = vunpack.c.0.s8 %v3955
    %v3957 = vlaneseq
    %v3958 = vshrl.u32 %v3957, 7
    %v3959 = vsub.s32 %v3956, %v3958
    %v3960 = vrot.slane %v3944, %v3959
    %v3962 = vunpack.c.l.s4 1983009808
    %v3963 = vunpack.c.0.s8 %v3962
    %v3964 = vlaneseq
    %v3965 = vshrl.u32 %v3964, 7
    %v3966 = vsub.s32 %v3963, %v3965
    %v3967 = vrot.slane %v3945, %v3966
    %v3969 = vunpack.c.l.s4 1983009808
    %v3970 = vunpack.c.0.s8 %v3969
    %v3971 = vlaneseq
    %v3972 = vshrl.u32 %v3971, 7
    %v3973 = vsub.s32 %v3970, %v3972
    %v3974 = vrot.slane %v3946, %v3973
    %v3975 = vcombine.low %v3953, %v3967
    %v3976 = vcombine.high %v3953, %v3967
    %v3977 = vcombine.low %v3960, %v3974
    %v3978 = vcombine.high %v3960, %v3974
    %v3979 = vcombine.low %v383, %v389
    %v3980 = vcombine.high %v383, %v389
    %v3981 = vcombine.low %v395, %v401
    %v3982 = vcombine.high %v395, %v401
    %v3984 = vunpack.c.l.s4 1983009808
    %v3985 = vunpack.c.0.s8 %v3984
    %v3986 = vlaneseq
    %v3987 = vshrl.u32 %v3986, 7
    %v3988 = vsub.s32 %v3985, %v3987
    %v3989 = vrot.slane %v3979, %v3988
    %v3991 = vunpack.c.l.s4 1983009808
    %v3992 = vunpack.c.0.s8 %v3991
    %v3993 = vlaneseq
    %v3994 = vshrl.u32 %v3993, 7
    %v3995 = vsub.s32 %v3992, %v3994
    %v3996 = vrot.slane %v3980, %v3995
    %v3998 = vunpack.c.l.s4 1983009808
    %v3999 = vunpack.c.0.s8 %v3998
    %v4000 = vlaneseq
    %v4001 = vshrl.u32 %v4000, 7
    %v4002 = vsub.s32 %v3999, %v4001
    %v4003 = vrot.slane %v3981, %v4002
    %v4005 = vunpack.c.l.s4 1983009808
    %v4006 = vunpack.c.0.s8 %v4005
    %v4007 = vlaneseq
    %v4008 = vshrl.u32 %v4007, 7
    %v4009 = vsub.s32 %v4006, %v4008
    %v4010 = vrot.slane %v3982, %v4009
    %v4011 = vcombine.low %v3989, %v4003
    %v4012 = vcombine.high %v3989, %v4003
    %v4013 = vcombine.low %v3996, %v4010
    %v4014 = vcombine.high %v3996, %v4010
    %v4015 = vcombine.low %v384, %v390
    %v4016 = vcombine.high %v384, %v390
    %v4017 = vcombine.low %v396, %v402
    %v4018 = vcombine.high %v396, %v402
    %v4020 = vunpack.c.l.s4 1983009808
    %v4021 = vunpack.c.0.s8 %v4020
    %v4022 = vlaneseq
    %v4023 = vshrl.u32 %v4022, 7
    %v4024 = vsub.s32 %v4021, %v4023
    %v4025 = vrot.slane %v4015, %v4024
    %v4027 = vunpack.c.l.s4 1983009808
    %v4028 = vunpack.c.0.s8 %v4027
    %v4029 = vlaneseq
    %v4030 = vshrl.u32 %v4029, 7
    %v4031 = vsub.s32 %v4028, %v4030
    %v4032 = vrot.slane %v4016, %v4031
    %v4034 = vunpack.c.l.s4 1983009808
    %v4035 = vunpack.c.0.s8 %v4034
    %v4036 = vlaneseq
    %v4037 = vshrl.u32 %v4036, 7
    %v4038 = vsub.s32 %v4035, %v4037
    %v4039 = vrot.slane %v4017, %v4038
    %v4041 = vunpack.c.l.s4 1983009808
    %v4042 = vunpack.c.0.s8 %v4041
    %v4043 = vlaneseq
    %v4044 = vshrl.u32 %v4043, 7
    %v4045 = vsub.s32 %v4042, %v4044
    %v4046 = vrot.slane %v4018, %v4045
    %v4047 = vcombine.low %v4025, %v4039
    %v4048 = vcombine.high %v4025, %v4039
    %v4049 = vcombine.low %v4032, %v4046
    %v4050 = vcombine.high %v4032, %v4046
    %v4051 = vcombine.low %v403, %v409
    %v4052 = vcombine.high %v403, %v409
    %v4053 = vcombine.low %v415, %v421
    %v4054 = vcombine.high %v415, %v421
    %v4056 = vunpack.c.l.s4 1983009808
    %v4057 = vunpack.c.0.s8 %v4056
    %v4058 = vlaneseq
    %v4059 = vshrl.u32 %v4058, 7
    %v4060 = vsub.s32 %v4057, %v4059
    %v4061 = vrot.slane %v4051, %v4060
    %v4063 = vunpack.c.l.s4 1983009808
    %v4064 = vunpack.c.0.s8 %v4063
    %v4065 = vlaneseq
    %v4066 = vshrl.u32 %v4065, 7
    %v4067 = vsub.s32 %v4064, %v4066
    %v4068 = vrot.slane %v4052, %v4067
    %v4070 = vunpack.c.l.s4 1983009808
    %v4071 = vunpack.c.0.s8 %v4070
    %v4072 = vlaneseq
    %v4073 = vshrl.u32 %v4072, 7
    %v4074 = vsub.s32 %v4071, %v4073
    %v4075 = vrot.slane %v4053, %v4074
    %v4077 = vunpack.c.l.s4 1983009808
    %v4078 = vunpack.c.0.s8 %v4077
    %v4079 = vlaneseq
    %v4080 = vshrl.u32 %v4079, 7
    %v4081 = vsub.s32 %v4078, %v4080
    %v4082 = vrot.slane %v4054, %v4081
    %v4083 = vcombine.low %v4061, %v4075
    %v4084 = vcombine.high %v4061, %v4075
    %v4085 = vcombine.low %v4068, %v4082
    %v4086 = vcombine.high %v4068, %v4082
    %v4087 = vcombine.low %v404, %v410
    %v4088 = vcombine.high %v404, %v410
    %v4089 = vcombine.low %v416, %v422
    %v4090 = vcombine.high %v416, %v422
    %v4092 = vunpack.c.l.s4 1983009808
    %v4093 = vunpack.c.0.s8 %v4092
    %v4094 = vlaneseq
    %v4095 = vshrl.u32 %v4094, 7
    %v4096 = vsub.s32 %v4093, %v4095
    %v4097 = vrot.slane %v4087, %v4096
    %v4099 = vunpack.c.l.s4 1983009808
    %v4100 = vunpack.c.0.s8 %v4099
    %v4101 = vlaneseq
    %v4102 = vshrl.u32 %v4101, 7
    %v4103 = vsub.s32 %v4100, %v4102
    %v4104 = vrot.slane %v4088, %v4103
    %v4106 = vunpack.c.l.s4 1983009808
    %v4107 = vunpack.c.0.s8 %v4106
    %v4108 = vlaneseq
    %v4109 = vshrl.u32 %v4108, 7
    %v4110 = vsub.s32 %v4107, %v4109
    %v4111 = vrot.slane %v4089, %v4110
    %v4113 = vunpack.c.l.s4 1983009808
    %v4114 = vunpack.c.0.s8 %v4113
    %v4115 = vlaneseq
    %v4116 = vshrl.u32 %v4115, 7
    %v4117 = vsub.s32 %v4114, %v4116
    %v4118 = vrot.slane %v4090, %v4117
    %v4119 = vcombine.low %v4097, %v4111
    %v4120 = vcombine.high %v4097, %v4111
    %v4121 = vcombine.low %v4104, %v4118
    %v4122 = vcombine.high %v4104, %v4118
    %v4123 = vcombine.low %v405, %v411
    %v4124 = vcombine.high %v405, %v411
    %v4125 = vcombine.low %v417, %v423
    %v4126 = vcombine.high %v417, %v423
    %v4128 = vunpack.c.l.s4 1983009808
    %v4129 = vunpack.c.0.s8 %v4128
    %v4130 = vlaneseq
    %v4131 = vshrl.u32 %v4130, 7
    %v4132 = vsub.s32 %v4129, %v4131
    %v4133 = vrot.slane %v4123, %v4132
    %v4135 = vunpack.c.l.s4 1983009808
    %v4136 = vunpack.c.0.s8 %v4135
    %v4137 = vlaneseq
    %v4138 = vshrl.u32 %v4137, 7
    %v4139 = vsub.s32 %v4136, %v4138
    %v4140 = vrot.slane %v4124, %v4139
    %v4142 = vunpack.c.l.s4 1983009808
    %v4143 = vunpack.c.0.s8 %v4142
    %v4144 = vlaneseq
    %v4145 = vshrl.u32 %v4144, 7
    %v4146 = vsub.s32 %v4143, %v4145
    %v4147 = vrot.slane %v4125, %v4146
    %v4149 = vunpack.c.l.s4 1983009808
    %v4150 = vunpack.c.0.s8 %v4149
    %v4151 = vlaneseq
    %v4152 = vshrl.u32 %v4151, 7
    %v4153 = vsub.s32 %v4150, %v4152
    %v4154 = vrot.slane %v4126, %v4153
    %v4155 = vcombine.low %v4133, %v4147
    %v4156 = vcombine.high %v4133, %v4147
    %v4157 = vcombine.low %v4140, %v4154
    %v4158 = vcombine.high %v4140, %v4154
    %v4159 = vcombine.low %v406, %v412
    %v4160 = vcombine.high %v406, %v412
    %v4161 = vcombine.low %v418, %v424
    %v4162 = vcombine.high %v418, %v424
    %v4164 = vunpack.c.l.s4 1983009808
    %v4165 = vunpack.c.0.s8 %v4164
    %v4166 = vlaneseq
    %v4167 = vshrl.u32 %v4166, 7
    %v4168 = vsub.s32 %v4165, %v4167
    %v4169 = vrot.slane %v4159, %v4168
    %v4171 = vunpack.c.l.s4 1983009808
    %v4172 = vunpack.c.0.s8 %v4171
    %v4173 = vlaneseq
    %v4174 = vshrl.u32 %v4173, 7
    %v4175 = vsub.s32 %v4172, %v4174
    %v4176 = vrot.slane %v4160, %v4175
    %v4178 = vunpack.c.l.s4 1983009808
    %v4179 = vunpack.c.0.s8 %v4178
    %v4180 = vlaneseq
    %v4181 = vshrl.u32 %v4180, 7
    %v4182 = vsub.s32 %v4179, %v4181
    %v4183 = vrot.slane %v4161, %v4182
    %v4185 = vunpack.c.l.s4 1983009808
    %v4186 = vunpack.c.0.s8 %v4185
    %v4187 = vlaneseq
    %v4188 = vshrl.u32 %v4187, 7
    %v4189 = vsub.s32 %v4186, %v4188
    %v4190 = vrot.slane %v4162, %v4189
    %v4191 = vcombine.low %v4169, %v4183
    %v4192 = vcombine.high %v4169, %v4183
    %v4193 = vcombine.low %v4176, %v4190
    %v4194 = vcombine.high %v4176, %v4190
    %v4195 = vcombine.low %v407, %v413
    %v4196 = vcombine.high %v407, %v413
    %v4197 = vcombine.low %v419, %v425
    %v4198 = vcombine.high %v419, %v425
    %v4200 = vunpack.c.l.s4 1983009808
    %v4201 = vunpack.c.0.s8 %v4200
    %v4202 = vlaneseq
    %v4203 = vshrl.u32 %v4202, 7
    %v4204 = vsub.s32 %v4201, %v4203
    %v4205 = vrot.slane %v4195, %v4204
    %v4207 = vunpack.c.l.s4 1983009808
    %v4208 = vunpack.c.0.s8 %v4207
    %v4209 = vlaneseq
    %v4210 = vshrl.u32 %v4209, 7
    %v4211 = vsub.s32 %v4208, %v4210
    %v4212 = vrot.slane %v4196, %v4211
    %v4214 = vunpack.c.l.s4 1983009808
    %v4215 = vunpack.c.0.s8 %v4214
    %v4216 = vlaneseq
    %v4217 = vshrl.u32 %v4216, 7
    %v4218 = vsub.s32 %v4215, %v4217
    %v4219 = vrot.slane %v4197, %v4218
    %v4221 = vunpack.c.l.s4 1983009808
    %v4222 = vunpack.c.0.s8 %v4221
    %v4223 = vlaneseq
    %v4224 = vshrl.u32 %v4223, 7
    %v4225 = vsub.s32 %v4222, %v4224
    %v4226 = vrot.slane %v4198, %v4225
    %v4227 = vcombine.low %v4205, %v4219
    %v4228 = vcombine.high %v4205, %v4219
    %v4229 = vcombine.low %v4212, %v4226
    %v4230 = vcombine.high %v4212, %v4226
    %v4231 = vcombine.low %v408, %v414
    %v4232 = vcombine.high %v408, %v414
    %v4233 = vcombine.low %v420, %v426
    %v4234 = vcombine.high %v420, %v426
    %v4236 = vunpack.c.l.s4 1983009808
    %v4237 = vunpack.c.0.s8 %v4236
    %v4238 = vlaneseq
    %v4239 = vshrl.u32 %v4238, 7
    %v4240 = vsub.s32 %v4237, %v4239
    %v4241 = vrot.slane %v4231, %v4240
    %v4243 = vunpack.c.l.s4 1983009808
    %v4244 = vunpack.c.0.s8 %v4243
    %v4245 = vlaneseq
    %v4246 = vshrl.u32 %v4245, 7
    %v4247 = vsub.s32 %v4244, %v4246
    %v4248 = vrot.slane %v4232, %v4247
    %v4250 = vunpack.c.l.s4 1983009808
    %v4251 = vunpack.c.0.s8 %v4250
    %v4252 = vlaneseq
    %v4253 = vshrl.u32 %v4252, 7
    %v4254 = vsub.s32 %v4251, %v4253
    %v4255 = vrot.slane %v4233, %v4254
    %v4257 = vunpack.c.l.s4 1983009808
    %v4258 = vunpack.c.0.s8 %v4257
    %v4259 = vlaneseq
    %v4260 = vshrl.u32 %v4259, 7
    %v4261 = vsub.s32 %v4258, %v4260
    %v4262 = vrot.slane %v4234, %v4261
    %v4263 = vcombine.low %v4241, %v4255
    %v4264 = vcombine.high %v4241, %v4255
    %v4265 = vcombine.low %v4248, %v4262
    %v4266 = vcombine.high %v4248, %v4262
    %v4651 = vpack.c.bf16 %v1059, %v843
    %v4652 = vpack.c.bf16 %v1060, %v844
    %v4653 = vpack.c.bf16 %v1061, %v845
    %v4654 = vpack.c.bf16 %v1062, %v846
    %v4655 = vpack.c.bf16 %v1095, %v879
    %v4656 = vpack.c.bf16 %v1096, %v880
    %v4657 = vpack.c.bf16 %v1097, %v881
    %v4658 = vpack.c.bf16 %v1098, %v882
    %v4659 = vpack.c.bf16 %v1131, %v915
    %v4660 = vpack.c.bf16 %v1132, %v916
    %v4661 = vpack.c.bf16 %v1133, %v917
    %v4662 = vpack.c.bf16 %v1134, %v918
    %v4663 = vpack.c.bf16 %v1167, %v951
    %v4664 = vpack.c.bf16 %v1168, %v952
    %v4665 = vpack.c.bf16 %v1169, %v953
    %v4666 = vpack.c.bf16 %v1170, %v954
    %v4667 = vpack.c.bf16 %v1203, %v987
    %v4668 = vpack.c.bf16 %v1204, %v988
    %v4669 = vpack.c.bf16 %v1205, %v989
    %v4670 = vpack.c.bf16 %v1206, %v990
    %v4671 = vpack.c.bf16 %v1239, %v1023
    %v4672 = vpack.c.bf16 %v1240, %v1024
    %v4673 = vpack.c.bf16 %v1241, %v1025
    %v4674 = vpack.c.bf16 %v1242, %v1026
    %v4675 = vpack.c.bf16 %v1491, %v1275
    %v4676 = vpack.c.bf16 %v1492, %v1276
    %v4677 = vpack.c.bf16 %v1493, %v1277
    %v4678 = vpack.c.bf16 %v1494, %v1278
    %v4679 = vpack.c.bf16 %v1527, %v1311
    %v4680 = vpack.c.bf16 %v1528, %v1312
    %v4681 = vpack.c.bf16 %v1529, %v1313
    %v4682 = vpack.c.bf16 %v1530, %v1314
    %v4683 = vpack.c.bf16 %v1563, %v1347
    %v4684 = vpack.c.bf16 %v1564, %v1348
    %v4685 = vpack.c.bf16 %v1565, %v1349
    %v4686 = vpack.c.bf16 %v1566, %v1350
    %v4687 = vpack.c.bf16 %v1599, %v1383
    %v4688 = vpack.c.bf16 %v1600, %v1384
    %v4689 = vpack.c.bf16 %v1601, %v1385
    %v4690 = vpack.c.bf16 %v1602, %v1386
    %v4691 = vpack.c.bf16 %v1635, %v1419
    %v4692 = vpack.c.bf16 %v1636, %v1420
    %v4693 = vpack.c.bf16 %v1637, %v1421
    %v4694 = vpack.c.bf16 %v1638, %v1422
    %v4695 = vpack.c.bf16 %v1671, %v1455
    %v4696 = vpack.c.bf16 %v1672, %v1456
    %v4697 = vpack.c.bf16 %v1673, %v1457
    %v4698 = vpack.c.bf16 %v1674, %v1458
    %v4699 = vpack.c.bf16 %v1923, %v1707
    %v4700 = vpack.c.bf16 %v1924, %v1708
    %v4701 = vpack.c.bf16 %v1925, %v1709
    %v4702 = vpack.c.bf16 %v1926, %v1710
    %v4703 = vpack.c.bf16 %v1959, %v1743
    %v4704 = vpack.c.bf16 %v1960, %v1744
    %v4705 = vpack.c.bf16 %v1961, %v1745
    %v4706 = vpack.c.bf16 %v1962, %v1746
    %v4707 = vpack.c.bf16 %v1995, %v1779
    %v4708 = vpack.c.bf16 %v1996, %v1780
    %v4709 = vpack.c.bf16 %v1997, %v1781
    %v4710 = vpack.c.bf16 %v1998, %v1782
    %v4711 = vpack.c.bf16 %v2031, %v1815
    %v4712 = vpack.c.bf16 %v2032, %v1816
    %v4713 = vpack.c.bf16 %v2033, %v1817
    %v4714 = vpack.c.bf16 %v2034, %v1818
    %v4715 = vpack.c.bf16 %v2067, %v1851
    %v4716 = vpack.c.bf16 %v2068, %v1852
    %v4717 = vpack.c.bf16 %v2069, %v1853
    %v4718 = vpack.c.bf16 %v2070, %v1854
    %v4719 = vpack.c.bf16 %v2103, %v1887
    %v4720 = vpack.c.bf16 %v2104, %v1888
    %v4721 = vpack.c.bf16 %v2105, %v1889
    %v4722 = vpack.c.bf16 %v2106, %v1890
    %v4723 = vpack.c.bf16 %v2355, %v2139
    %v4724 = vpack.c.bf16 %v2356, %v2140
    %v4725 = vpack.c.bf16 %v2357, %v2141
    %v4726 = vpack.c.bf16 %v2358, %v2142
    %v4727 = vpack.c.bf16 %v2391, %v2175
    %v4728 = vpack.c.bf16 %v2392, %v2176
    %v4729 = vpack.c.bf16 %v2393, %v2177
    %v4730 = vpack.c.bf16 %v2394, %v2178
    %v4731 = vpack.c.bf16 %v2427, %v2211
    %v4732 = vpack.c.bf16 %v2428, %v2212
    %v4733 = vpack.c.bf16 %v2429, %v2213
    %v4734 = vpack.c.bf16 %v2430, %v2214
    %v4735 = vpack.c.bf16 %v2463, %v2247
    %v4736 = vpack.c.bf16 %v2464, %v2248
    %v4737 = vpack.c.bf16 %v2465, %v2249
    %v4738 = vpack.c.bf16 %v2466, %v2250
    %v4739 = vpack.c.bf16 %v2499, %v2283
    %v4740 = vpack.c.bf16 %v2500, %v2284
    %v4741 = vpack.c.bf16 %v2501, %v2285
    %v4742 = vpack.c.bf16 %v2502, %v2286
    %v4743 = vpack.c.bf16 %v2535, %v2319
    %v4744 = vpack.c.bf16 %v2536, %v2320
    %v4745 = vpack.c.bf16 %v2537, %v2321
    %v4746 = vpack.c.bf16 %v2538, %v2322
    %v4747 = vpack.c.bf16 %v2787, %v2571
    %v4748 = vpack.c.bf16 %v2788, %v2572
    %v4749 = vpack.c.bf16 %v2789, %v2573
    %v4750 = vpack.c.bf16 %v2790, %v2574
    %v4751 = vpack.c.bf16 %v2823, %v2607
    %v4752 = vpack.c.bf16 %v2824, %v2608
    %v4753 = vpack.c.bf16 %v2825, %v2609
    %v4754 = vpack.c.bf16 %v2826, %v2610
    %v4755 = vpack.c.bf16 %v2859, %v2643
    %v4756 = vpack.c.bf16 %v2860, %v2644
    %v4757 = vpack.c.bf16 %v2861, %v2645
    %v4758 = vpack.c.bf16 %v2862, %v2646
    %v4759 = vpack.c.bf16 %v2895, %v2679
    %v4760 = vpack.c.bf16 %v2896, %v2680
    %v4761 = vpack.c.bf16 %v2897, %v2681
    %v4762 = vpack.c.bf16 %v2898, %v2682
    %v4763 = vpack.c.bf16 %v2931, %v2715
    %v4764 = vpack.c.bf16 %v2932, %v2716
    %v4765 = vpack.c.bf16 %v2933, %v2717
    %v4766 = vpack.c.bf16 %v2934, %v2718
    %v4767 = vpack.c.bf16 %v2967, %v2751
    %v4768 = vpack.c.bf16 %v2968, %v2752
    %v4769 = vpack.c.bf16 %v2969, %v2753
    %v4770 = vpack.c.bf16 %v2970, %v2754
    %v4771 = vpack.c.bf16 %v3219, %v3003
    %v4772 = vpack.c.bf16 %v3220, %v3004
    %v4773 = vpack.c.bf16 %v3221, %v3005
    %v4774 = vpack.c.bf16 %v3222, %v3006
    %v4775 = vpack.c.bf16 %v3255, %v3039
    %v4776 = vpack.c.bf16 %v3256, %v3040
    %v4777 = vpack.c.bf16 %v3257, %v3041
    %v4778 = vpack.c.bf16 %v3258, %v3042
    %v4779 = vpack.c.bf16 %v3291, %v3075
    %v4780 = vpack.c.bf16 %v3292, %v3076
    %v4781 = vpack.c.bf16 %v3293, %v3077
    %v4782 = vpack.c.bf16 %v3294, %v3078
    %v4783 = vpack.c.bf16 %v3327, %v3111
    %v4784 = vpack.c.bf16 %v3328, %v3112
    %v4785 = vpack.c.bf16 %v3329, %v3113
    %v4786 = vpack.c.bf16 %v3330, %v3114
    %v4787 = vpack.c.bf16 %v3363, %v3147
    %v4788 = vpack.c.bf16 %v3364, %v3148
    %v4789 = vpack.c.bf16 %v3365, %v3149
    %v4790 = vpack.c.bf16 %v3366, %v3150
    %v4791 = vpack.c.bf16 %v3399, %v3183
    %v4792 = vpack.c.bf16 %v3400, %v3184
    %v4793 = vpack.c.bf16 %v3401, %v3185
    %v4794 = vpack.c.bf16 %v3402, %v3186
    %v4795 = vpack.c.bf16 %v3651, %v3435
    %v4796 = vpack.c.bf16 %v3652, %v3436
    %v4797 = vpack.c.bf16 %v3653, %v3437
    %v4798 = vpack.c.bf16 %v3654, %v3438
    %v4799 = vpack.c.bf16 %v3687, %v3471
    %v4800 = vpack.c.bf16 %v3688, %v3472
    %v4801 = vpack.c.bf16 %v3689, %v3473
    %v4802 = vpack.c.bf16 %v3690, %v3474
    %v4803 = vpack.c.bf16 %v3723, %v3507
    %v4804 = vpack.c.bf16 %v3724, %v3508
    %v4805 = vpack.c.bf16 %v3725, %v3509
    %v4806 = vpack.c.bf16 %v3726, %v3510
    %v4807 = vpack.c.bf16 %v3759, %v3543
    %v4808 = vpack.c.bf16 %v3760, %v3544
    %v4809 = vpack.c.bf16 %v3761, %v3545
    %v4810 = vpack.c.bf16 %v3762, %v3546
    %v4811 = vpack.c.bf16 %v3795, %v3579
    %v4812 = vpack.c.bf16 %v3796, %v3580
    %v4813 = vpack.c.bf16 %v3797, %v3581
    %v4814 = vpack.c.bf16 %v3798, %v3582
    %v4815 = vpack.c.bf16 %v3831, %v3615
    %v4816 = vpack.c.bf16 %v3832, %v3616
    %v4817 = vpack.c.bf16 %v3833, %v3617
    %v4818 = vpack.c.bf16 %v3834, %v3618
    %v4819 = vpack.c.bf16 %v4083, %v3867
    %v4820 = vpack.c.bf16 %v4084, %v3868
    %v4821 = vpack.c.bf16 %v4085, %v3869
    %v4822 = vpack.c.bf16 %v4086, %v3870
    %v4823 = vpack.c.bf16 %v4119, %v3903
    %v4824 = vpack.c.bf16 %v4120, %v3904
    %v4825 = vpack.c.bf16 %v4121, %v3905
    %v4826 = vpack.c.bf16 %v4122, %v3906
    %v4827 = vpack.c.bf16 %v4155, %v3939
    %v4828 = vpack.c.bf16 %v4156, %v3940
    %v4829 = vpack.c.bf16 %v4157, %v3941
    %v4830 = vpack.c.bf16 %v4158, %v3942
    %v4831 = vpack.c.bf16 %v4191, %v3975
    %v4832 = vpack.c.bf16 %v4192, %v3976
    %v4833 = vpack.c.bf16 %v4193, %v3977
    %v4834 = vpack.c.bf16 %v4194, %v3978
    %v4835 = vpack.c.bf16 %v4227, %v4011
    %v4836 = vpack.c.bf16 %v4228, %v4012
    %v4837 = vpack.c.bf16 %v4229, %v4013
    %v4838 = vpack.c.bf16 %v4230, %v4014
    %v4839 = vpack.c.bf16 %v4263, %v4047
    %v4840 = vpack.c.bf16 %v4264, %v4048
    %v4841 = vpack.c.bf16 %v4265, %v4049
    %v4842 = vpack.c.bf16 %v4266, %v4050
    %v4843 = vld [vmem:[#allocation4] sm:$0xf]
    %v4844 = vld [vmem:[#allocation4 + $0x4] sm:$0xf]
    %v4845 = vld [vmem:[#allocation4 + $0x8] sm:$0xf]
    %v4846 = vld [vmem:[#allocation4 + $0xc] sm:$0xf]
    %v4847 = vld [vmem:[#allocation4 + $0x10] sm:$0xf]
    %v4848 = vld [vmem:[#allocation4 + $0x14] sm:$0xf]
    %v4849 = vld [vmem:[#allocation4 + $0x18] sm:$0xf]
    %v4850 = vld [vmem:[#allocation4 + $0x1c] sm:$0xf]
    %v4851 = vld [vmem:[#allocation4 + $0x20] sm:$0xf]
    %v4852 = vld [vmem:[#allocation4 + $0x24] sm:$0xf]
    %v4853 = vld [vmem:[#allocation4 + $0x28] sm:$0xf]
    %v4854 = vld [vmem:[#allocation4 + $0x2c] sm:$0xf]
    %v4855 = vld [vmem:[#allocation4 + $0x30] sm:$0xf]
    %v4856 = vld [vmem:[#allocation4 + $0x34] sm:$0xf]
    %v4857 = vld [vmem:[#allocation4 + $0x38] sm:$0xf]
    %v4858 = vld [vmem:[#allocation4 + $0x3c] sm:$0xf]
    %v4859 = vld [vmem:[#allocation4 + $0x40] sm:$0xf]
    %v4860 = vld [vmem:[#allocation4 + $0x44] sm:$0xf]
    %v4861 = vld [vmem:[#allocation4 + $0x48] sm:$0xf]
    %v4862 = vld [vmem:[#allocation4 + $0x4c] sm:$0xf]
    %v4863 = vld [vmem:[#allocation4 + $0x50] sm:$0xf]
    %v4864 = vld [vmem:[#allocation4 + $0x54] sm:$0xf]
    %v4865 = vld [vmem:[#allocation4 + $0x58] sm:$0xf]
    %v4866 = vld [vmem:[#allocation4 + $0x5c] sm:$0xf]
    %v4867 = vld [vmem:[#allocation4 + $0x60] sm:$0xf]
    %v4868 = vld [vmem:[#allocation4 + $0x64] sm:$0xf]
    %v4869 = vld [vmem:[#allocation4 + $0x68] sm:$0xf]
    %v4870 = vld [vmem:[#allocation4 + $0x6c] sm:$0xf]
    %v4871 = vld [vmem:[#allocation4 + $0x70] sm:$0xf]
    %v4872 = vld [vmem:[#allocation4 + $0x74] sm:$0xf]
    %v4873 = vld [vmem:[#allocation4 + $0x78] sm:$0xf]
    %v4874 = vld [vmem:[#allocation4 + $0x7c] sm:$0xf]
    %v4875 = vld [vmem:[#allocation4 + $0x80] sm:$0xf]
    %v4876 = vld [vmem:[#allocation4 + $0x84] sm:$0xf]
    %v4877 = vld [vmem:[#allocation4 + $0x88] sm:$0xf]
    %v4878 = vld [vmem:[#allocation4 + $0x8c] sm:$0xf]
    %v4879 = vld [vmem:[#allocation4 + $0x90] sm:$0xf]
    %v4880 = vld [vmem:[#allocation4 + $0x94] sm:$0xf]
    %v4881 = vld [vmem:[#allocation4 + $0x98] sm:$0xf]
    %v4882 = vld [vmem:[#allocation4 + $0x9c] sm:$0xf]
    %v4883 = vld [vmem:[#allocation4 + $0xa0] sm:$0xf]
    %v4884 = vld [vmem:[#allocation4 + $0xa4] sm:$0xf]
    %v4885 = vld [vmem:[#allocation4 + $0xa8] sm:$0xf]
    %v4886 = vld [vmem:[#allocation4 + $0xac] sm:$0xf]
    %v4887 = vld [vmem:[#allocation4 + $0xb0] sm:$0xf]
    %v4888 = vld [vmem:[#allocation4 + $0xb4] sm:$0xf]
    %v4889 = vld [vmem:[#allocation4 + $0xb8] sm:$0xf]
    %v4890 = vld [vmem:[#allocation4 + $0xbc] sm:$0xf]
    %v4891 = vld [vmem:[#allocation4 + $0xc0] sm:$0xf]
    %v4892 = vld [vmem:[#allocation4 + $0xc4] sm:$0xf]
    %v4893 = vld [vmem:[#allocation4 + $0xc8] sm:$0xf]
    %v4894 = vld [vmem:[#allocation4 + $0xcc] sm:$0xf]
    %v4895 = vld [vmem:[#allocation4 + $0xd0] sm:$0xf]
    %v4896 = vld [vmem:[#allocation4 + $0xd4] sm:$0xf]
    %v4897 = vld [vmem:[#allocation4 + $0xd8] sm:$0xf]
    %v4898 = vld [vmem:[#allocation4 + $0xdc] sm:$0xf]
    %v4899 = vld [vmem:[#allocation4 + $0xe0] sm:$0xf]
    %v4900 = vld [vmem:[#allocation4 + $0xe4] sm:$0xf]
    %v4901 = vld [vmem:[#allocation4 + $0xe8] sm:$0xf]
    %v4902 = vld [vmem:[#allocation4 + $0xec] sm:$0xf]
    %v4903 = vld [vmem:[#allocation4 + $0xf0] sm:$0xf]
    %v4904 = vld [vmem:[#allocation4 + $0xf4] sm:$0xf]
    %v4905 = vld [vmem:[#allocation4 + $0xf8] sm:$0xf]
    %v4906 = vld [vmem:[#allocation4 + $0xfc] sm:$0xf]
    %v4907 = vld [vmem:[#allocation4 + $0x100] sm:$0xf]
    %v4908 = vld [vmem:[#allocation4 + $0x104] sm:$0xf]
    %v4909 = vld [vmem:[#allocation4 + $0x108] sm:$0xf]
    %v4910 = vld [vmem:[#allocation4 + $0x10c] sm:$0xf]
    %v4911 = vld [vmem:[#allocation4 + $0x110] sm:$0xf]
    %v4912 = vld [vmem:[#allocation4 + $0x114] sm:$0xf]
    %v4913 = vld [vmem:[#allocation4 + $0x118] sm:$0xf]
    %v4914 = vld [vmem:[#allocation4 + $0x11c] sm:$0xf]
    %v4915 = vld [vmem:[#allocation4 + $0x120] sm:$0xf]
    %v4916 = vld [vmem:[#allocation4 + $0x124] sm:$0xf]
    %v4917 = vld [vmem:[#allocation4 + $0x128] sm:$0xf]
    %v4918 = vld [vmem:[#allocation4 + $0x12c] sm:$0xf]
    %v4919 = vld [vmem:[#allocation4 + $0x130] sm:$0xf]
    %v4920 = vld [vmem:[#allocation4 + $0x134] sm:$0xf]
    %v4921 = vld [vmem:[#allocation4 + $0x138] sm:$0xf]
    %v4922 = vld [vmem:[#allocation4 + $0x13c] sm:$0xf]
    %v4923 = vld [vmem:[#allocation4 + $0x140] sm:$0xf]
    %v4924 = vld [vmem:[#allocation4 + $0x144] sm:$0xf]
    %v4925 = vld [vmem:[#allocation4 + $0x148] sm:$0xf]
    %v4926 = vld [vmem:[#allocation4 + $0x14c] sm:$0xf]
    %v4927 = vld [vmem:[#allocation4 + $0x150] sm:$0xf]
    %v4928 = vld [vmem:[#allocation4 + $0x154] sm:$0xf]
    %v4929 = vld [vmem:[#allocation4 + $0x158] sm:$0xf]
    %v4930 = vld [vmem:[#allocation4 + $0x15c] sm:$0xf]
    %v4931 = vld [vmem:[#allocation4 + $0x160] sm:$0xf]
    %v4932 = vld [vmem:[#allocation4 + $0x164] sm:$0xf]
    %v4933 = vld [vmem:[#allocation4 + $0x168] sm:$0xf]
    %v4934 = vld [vmem:[#allocation4 + $0x16c] sm:$0xf]
    %v4935 = vld [vmem:[#allocation4 + $0x170] sm:$0xf]
    %v4936 = vld [vmem:[#allocation4 + $0x174] sm:$0xf]
    %v4937 = vld [vmem:[#allocation4 + $0x178] sm:$0xf]
    %v4938 = vld [vmem:[#allocation4 + $0x17c] sm:$0xf]
    %v4939 = vld [vmem:[#allocation4 + $0x180] sm:$0xf]
    %v4940 = vld [vmem:[#allocation4 + $0x184] sm:$0xf]
    %v4941 = vld [vmem:[#allocation4 + $0x188] sm:$0xf]
    %v4942 = vld [vmem:[#allocation4 + $0x18c] sm:$0xf]
    %v4943 = vld [vmem:[#allocation4 + $0x190] sm:$0xf]
    %v4944 = vld [vmem:[#allocation4 + $0x194] sm:$0xf]
    %v4945 = vld [vmem:[#allocation4 + $0x198] sm:$0xf]
    %v4946 = vld [vmem:[#allocation4 + $0x19c] sm:$0xf]
    %v4947 = vld [vmem:[#allocation4 + $0x1a0] sm:$0xf]
    %v4948 = vld [vmem:[#allocation4 + $0x1a4] sm:$0xf]
    %v4949 = vld [vmem:[#allocation4 + $0x1a8] sm:$0xf]
    %v4950 = vld [vmem:[#allocation4 + $0x1ac] sm:$0xf]
    %v4951 = vld [vmem:[#allocation4 + $0x1b0] sm:$0xf]
    %v4952 = vld [vmem:[#allocation4 + $0x1b4] sm:$0xf]
    %v4953 = vld [vmem:[#allocation4 + $0x1b8] sm:$0xf]
    %v4954 = vld [vmem:[#allocation4 + $0x1bc] sm:$0xf]
    %v4955 = vld [vmem:[#allocation4 + $0x1c0] sm:$0xf]
    %v4956 = vld [vmem:[#allocation4 + $0x1c4] sm:$0xf]
    %v4957 = vld [vmem:[#allocation4 + $0x1c8] sm:$0xf]
    %v4958 = vld [vmem:[#allocation4 + $0x1cc] sm:$0xf]
    %v4959 = vld [vmem:[#allocation4 + $0x1d0] sm:$0xf]
    %v4960 = vld [vmem:[#allocation4 + $0x1d4] sm:$0xf]
    %v4961 = vld [vmem:[#allocation4 + $0x1d8] sm:$0xf]
    %v4962 = vld [vmem:[#allocation4 + $0x1dc] sm:$0xf]
    %v4963 = vld [vmem:[#allocation4 + $0x1e0] sm:$0xf]
    %v4964 = vld [vmem:[#allocation4 + $0x1e4] sm:$0xf]
    %v4965 = vld [vmem:[#allocation4 + $0x1e8] sm:$0xf]
    %v4966 = vld [vmem:[#allocation4 + $0x1ec] sm:$0xf]
    %v4967 = vld [vmem:[#allocation4 + $0x1f0] sm:$0xf]
    %v4968 = vld [vmem:[#allocation4 + $0x1f4] sm:$0xf]
    %v4969 = vld [vmem:[#allocation4 + $0x1f8] sm:$0xf]
    %v4970 = vld [vmem:[#allocation4 + $0x1fc] sm:$0xf]
    %v4971 = vld [vmem:[#allocation4 + $0x200] sm:$0xf]
    %v4972 = vld [vmem:[#allocation4 + $0x204] sm:$0xf]
    %v4973 = vld [vmem:[#allocation4 + $0x208] sm:$0xf]
    %v4974 = vld [vmem:[#allocation4 + $0x20c] sm:$0xf]
    %v4975 = vld [vmem:[#allocation4 + $0x210] sm:$0xf]
    %v4976 = vld [vmem:[#allocation4 + $0x214] sm:$0xf]
    %v4977 = vld [vmem:[#allocation4 + $0x218] sm:$0xf]
    %v4978 = vld [vmem:[#allocation4 + $0x21c] sm:$0xf]
    %v4979 = vld [vmem:[#allocation4 + $0x220] sm:$0xf]
    %v4980 = vld [vmem:[#allocation4 + $0x224] sm:$0xf]
    %v4981 = vld [vmem:[#allocation4 + $0x228] sm:$0xf]
    %v4982 = vld [vmem:[#allocation4 + $0x22c] sm:$0xf]
    %v4983 = vld [vmem:[#allocation4 + $0x230] sm:$0xf]
    %v4984 = vld [vmem:[#allocation4 + $0x234] sm:$0xf]
    %v4985 = vld [vmem:[#allocation4 + $0x238] sm:$0xf]
    %v4986 = vld [vmem:[#allocation4 + $0x23c] sm:$0xf]
    %v4987 = vld [vmem:[#allocation4 + $0x240] sm:$0xf]
    %v4988 = vld [vmem:[#allocation4 + $0x244] sm:$0xf]
    %v4989 = vld [vmem:[#allocation4 + $0x248] sm:$0xf]
    %v4990 = vld [vmem:[#allocation4 + $0x24c] sm:$0xf]
    %v4991 = vld [vmem:[#allocation4 + $0x250] sm:$0xf]
    %v4992 = vld [vmem:[#allocation4 + $0x254] sm:$0xf]
    %v4993 = vld [vmem:[#allocation4 + $0x258] sm:$0xf]
    %v4994 = vld [vmem:[#allocation4 + $0x25c] sm:$0xf]
    %v4995 = vld [vmem:[#allocation4 + $0x260] sm:$0xf]
    %v4996 = vld [vmem:[#allocation4 + $0x264] sm:$0xf]
    %v4997 = vld [vmem:[#allocation4 + $0x268] sm:$0xf]
    %v4998 = vld [vmem:[#allocation4 + $0x26c] sm:$0xf]
    %v4999 = vld [vmem:[#allocation4 + $0x270] sm:$0xf]
    %v5000 = vld [vmem:[#allocation4 + $0x274] sm:$0xf]
    %v5001 = vld [vmem:[#allocation4 + $0x278] sm:$0xf]
    %v5002 = vld [vmem:[#allocation4 + $0x27c] sm:$0xf]
    %v5003 = vld [vmem:[#allocation4 + $0x280] sm:$0xf]
    %v5004 = vld [vmem:[#allocation4 + $0x284] sm:$0xf]
    %v5005 = vld [vmem:[#allocation4 + $0x288] sm:$0xf]
    %v5006 = vld [vmem:[#allocation4 + $0x28c] sm:$0xf]
    %v5007 = vld [vmem:[#allocation4 + $0x290] sm:$0xf]
    %v5008 = vld [vmem:[#allocation4 + $0x294] sm:$0xf]
    %v5009 = vld [vmem:[#allocation4 + $0x298] sm:$0xf]
    %v5010 = vld [vmem:[#allocation4 + $0x29c] sm:$0xf]
    %v5011 = vld [vmem:[#allocation4 + $0x2a0] sm:$0xf]
    %v5012 = vld [vmem:[#allocation4 + $0x2a4] sm:$0xf]
    %v5013 = vld [vmem:[#allocation4 + $0x2a8] sm:$0xf]
    %v5014 = vld [vmem:[#allocation4 + $0x2ac] sm:$0xf]
    %v5015 = vld [vmem:[#allocation4 + $0x2b0] sm:$0xf]
    %v5016 = vld [vmem:[#allocation4 + $0x2b4] sm:$0xf]
    %v5017 = vld [vmem:[#allocation4 + $0x2b8] sm:$0xf]
    %v5018 = vld [vmem:[#allocation4 + $0x2bc] sm:$0xf]
    %v5019 = vld [vmem:[#allocation4 + $0x2c0] sm:$0xf]
    %v5020 = vld [vmem:[#allocation4 + $0x2c4] sm:$0xf]
    %v5021 = vld [vmem:[#allocation4 + $0x2c8] sm:$0xf]
    %v5022 = vld [vmem:[#allocation4 + $0x2cc] sm:$0xf]
    %v5023 = vld [vmem:[#allocation4 + $0x2d0] sm:$0xf]
    %v5024 = vld [vmem:[#allocation4 + $0x2d4] sm:$0xf]
    %v5025 = vld [vmem:[#allocation4 + $0x2d8] sm:$0xf]
    %v5026 = vld [vmem:[#allocation4 + $0x2dc] sm:$0xf]
    %v5027 = vld [vmem:[#allocation4 + $0x2e0] sm:$0xf]
    %v5028 = vld [vmem:[#allocation4 + $0x2e4] sm:$0xf]
    %v5029 = vld [vmem:[#allocation4 + $0x2e8] sm:$0xf]
    %v5030 = vld [vmem:[#allocation4 + $0x2ec] sm:$0xf]
    %v5031 = vld [vmem:[#allocation4 + $0x2f0] sm:$0xf]
    %v5032 = vld [vmem:[#allocation4 + $0x2f4] sm:$0xf]
    %v5033 = vld [vmem:[#allocation4 + $0x2f8] sm:$0xf]
    %v5034 = vld [vmem:[#allocation4 + $0x2fc] sm:$0xf]
    %v5035 = vld [vmem:[#allocation4 + $0x300] sm:$0xf]
    %v5036 = vld [vmem:[#allocation4 + $0x304] sm:$0xf]
    %v5037 = vld [vmem:[#allocation4 + $0x308] sm:$0xf]
    %v5038 = vld [vmem:[#allocation4 + $0x30c] sm:$0xf]
    %v5039 = vld [vmem:[#allocation4 + $0x310] sm:$0xf]
    %v5040 = vld [vmem:[#allocation4 + $0x314] sm:$0xf]
    %v5041 = vld [vmem:[#allocation4 + $0x318] sm:$0xf]
    %v5042 = vld [vmem:[#allocation4 + $0x31c] sm:$0xf]
    %v5043 = vld [vmem:[#allocation4 + $0x320] sm:$0xf]
    %v5044 = vld [vmem:[#allocation4 + $0x324] sm:$0xf]
    %v5045 = vld [vmem:[#allocation4 + $0x328] sm:$0xf]
    %v5046 = vld [vmem:[#allocation4 + $0x32c] sm:$0xf]
    %v5047 = vld [vmem:[#allocation4 + $0x330] sm:$0xf]
    %v5048 = vld [vmem:[#allocation4 + $0x334] sm:$0xf]
    %v5049 = vld [vmem:[#allocation4 + $0x338] sm:$0xf]
    %v5050 = vld [vmem:[#allocation4 + $0x33c] sm:$0xf]
    %v5051 = vld [vmem:[#allocation4 + $0x340] sm:$0xf]
    %v5052 = vld [vmem:[#allocation4 + $0x344] sm:$0xf]
    %v5053 = vld [vmem:[#allocation4 + $0x348] sm:$0xf]
    %v5054 = vld [vmem:[#allocation4 + $0x34c] sm:$0xf]
    %v5055 = vld [vmem:[#allocation4 + $0x350] sm:$0xf]
    %v5056 = vld [vmem:[#allocation4 + $0x354] sm:$0xf]
    %v5057 = vld [vmem:[#allocation4 + $0x358] sm:$0xf]
    %v5058 = vld [vmem:[#allocation4 + $0x35c] sm:$0xf]
    %v5059 = vld [vmem:[#allocation4 + $0x360] sm:$0xf]
    %v5060 = vld [vmem:[#allocation4 + $0x364] sm:$0xf]
    %v5061 = vld [vmem:[#allocation4 + $0x368] sm:$0xf]
    %v5062 = vld [vmem:[#allocation4 + $0x36c] sm:$0xf]
    %v5063 = vld [vmem:[#allocation4 + $0x370] sm:$0xf]
    %v5064 = vld [vmem:[#allocation4 + $0x374] sm:$0xf]
    %v5065 = vld [vmem:[#allocation4 + $0x378] sm:$0xf]
    %v5066 = vld [vmem:[#allocation4 + $0x37c] sm:$0xf]
    %v5067 = vld [vmem:[#allocation4 + $0x380] sm:$0xf]
    %v5068 = vld [vmem:[#allocation4 + $0x384] sm:$0xf]
    %v5069 = vld [vmem:[#allocation4 + $0x388] sm:$0xf]
    %v5070 = vld [vmem:[#allocation4 + $0x38c] sm:$0xf]
    %v5071 = vld [vmem:[#allocation4 + $0x390] sm:$0xf]
    %v5072 = vld [vmem:[#allocation4 + $0x394] sm:$0xf]
    %v5073 = vld [vmem:[#allocation4 + $0x398] sm:$0xf]
    %v5074 = vld [vmem:[#allocation4 + $0x39c] sm:$0xf]
    %v5075 = vld [vmem:[#allocation4 + $0x3a0] sm:$0xf]
    %v5076 = vld [vmem:[#allocation4 + $0x3a4] sm:$0xf]
    %v5077 = vld [vmem:[#allocation4 + $0x3a8] sm:$0xf]
    %v5078 = vld [vmem:[#allocation4 + $0x3ac] sm:$0xf]
    %v5079 = vld [vmem:[#allocation4 + $0x3b0] sm:$0xf]
    %v5080 = vld [vmem:[#allocation4 + $0x3b4] sm:$0xf]
    %v5081 = vld [vmem:[#allocation4 + $0x3b8] sm:$0xf]
    %v5082 = vld [vmem:[#allocation4 + $0x3bc] sm:$0xf]
    %v5083 = vld [vmem:[#allocation4 + $0x3c0] sm:$0xf]
    %v5084 = vld [vmem:[#allocation4 + $0x3c4] sm:$0xf]
    %v5085 = vld [vmem:[#allocation4 + $0x3c8] sm:$0xf]
    %v5086 = vld [vmem:[#allocation4 + $0x3cc] sm:$0xf]
    %v5087 = vld [vmem:[#allocation4 + $0x3d0] sm:$0xf]
    %v5088 = vld [vmem:[#allocation4 + $0x3d4] sm:$0xf]
    %v5089 = vld [vmem:[#allocation4 + $0x3d8] sm:$0xf]
    %v5090 = vld [vmem:[#allocation4 + $0x3dc] sm:$0xf]
    %v5091 = vld [vmem:[#allocation4 + $0x3e0] sm:$0xf]
    %v5092 = vld [vmem:[#allocation4 + $0x3e4] sm:$0xf]
    %v5093 = vld [vmem:[#allocation4 + $0x3e8] sm:$0xf]
    %v5094 = vld [vmem:[#allocation4 + $0x3ec] sm:$0xf]
    %v5095 = vld [vmem:[#allocation4 + $0x3f0] sm:$0xf]
    %v5096 = vld [vmem:[#allocation4 + $0x3f4] sm:$0xf]
    %v5097 = vld [vmem:[#allocation4 + $0x3f8] sm:$0xf]
    %v5098 = vld [vmem:[#allocation4 + $0x3fc] sm:$0xf]
    %v5099 = vld [vmem:[#allocation4 + $0x400] sm:$0xf]
    %v5100 = vld [vmem:[#allocation4 + $0x404] sm:$0xf]
    %v5101 = vld [vmem:[#allocation4 + $0x408] sm:$0xf]
    %v5102 = vld [vmem:[#allocation4 + $0x40c] sm:$0xf]
    %v5103 = vld [vmem:[#allocation4 + $0x410] sm:$0xf]
    %v5104 = vld [vmem:[#allocation4 + $0x414] sm:$0xf]
    %v5105 = vld [vmem:[#allocation4 + $0x418] sm:$0xf]
    %v5106 = vld [vmem:[#allocation4 + $0x41c] sm:$0xf]
    %v5107 = vld [vmem:[#allocation4 + $0x420] sm:$0xf]
    %v5108 = vld [vmem:[#allocation4 + $0x424] sm:$0xf]
    %v5109 = vld [vmem:[#allocation4 + $0x428] sm:$0xf]
    %v5110 = vld [vmem:[#allocation4 + $0x42c] sm:$0xf]
    %v5111 = vld [vmem:[#allocation4 + $0x430] sm:$0xf]
    %v5112 = vld [vmem:[#allocation4 + $0x434] sm:$0xf]
    %v5113 = vld [vmem:[#allocation4 + $0x438] sm:$0xf]
    %v5114 = vld [vmem:[#allocation4 + $0x43c] sm:$0xf]
    %v5115 = vld [vmem:[#allocation4 + $0x440] sm:$0xf]
    %v5116 = vld [vmem:[#allocation4 + $0x444] sm:$0xf]
    %v5117 = vld [vmem:[#allocation4 + $0x448] sm:$0xf]
    %v5118 = vld [vmem:[#allocation4 + $0x44c] sm:$0xf]
    %v5119 = vld [vmem:[#allocation4 + $0x450] sm:$0xf]
    %v5120 = vld [vmem:[#allocation4 + $0x454] sm:$0xf]
    %v5121 = vld [vmem:[#allocation4 + $0x458] sm:$0xf]
    %v5122 = vld [vmem:[#allocation4 + $0x45c] sm:$0xf]
    %v5123 = vld [vmem:[#allocation4 + $0x460] sm:$0xf]
    %v5124 = vld [vmem:[#allocation4 + $0x464] sm:$0xf]
    %v5125 = vld [vmem:[#allocation4 + $0x468] sm:$0xf]
    %v5126 = vld [vmem:[#allocation4 + $0x46c] sm:$0xf]
    %v5127 = vld [vmem:[#allocation4 + $0x470] sm:$0xf]
    %v5128 = vld [vmem:[#allocation4 + $0x474] sm:$0xf]
    %v5129 = vld [vmem:[#allocation4 + $0x478] sm:$0xf]
    %v5130 = vld [vmem:[#allocation4 + $0x47c] sm:$0xf]
    %v5131 = vld [vmem:[#allocation4 + $0x480] sm:$0xf]
    %v5132 = vld [vmem:[#allocation4 + $0x484] sm:$0xf]
    %v5133 = vld [vmem:[#allocation4 + $0x488] sm:$0xf]
    %v5134 = vld [vmem:[#allocation4 + $0x48c] sm:$0xf]
    %v5135 = vld [vmem:[#allocation4 + $0x490] sm:$0xf]
    %v5136 = vld [vmem:[#allocation4 + $0x494] sm:$0xf]
    %v5137 = vld [vmem:[#allocation4 + $0x498] sm:$0xf]
    %v5138 = vld [vmem:[#allocation4 + $0x49c] sm:$0xf]
    %v5139 = vld [vmem:[#allocation4 + $0x4a0] sm:$0xf]
    %v5140 = vld [vmem:[#allocation4 + $0x4a4] sm:$0xf]
    %v5141 = vld [vmem:[#allocation4 + $0x4a8] sm:$0xf]
    %v5142 = vld [vmem:[#allocation4 + $0x4ac] sm:$0xf]
    %v5143 = vld [vmem:[#allocation4 + $0x4b0] sm:$0xf]
    %v5144 = vld [vmem:[#allocation4 + $0x4b4] sm:$0xf]
    %v5145 = vld [vmem:[#allocation4 + $0x4b8] sm:$0xf]
    %v5146 = vld [vmem:[#allocation4 + $0x4bc] sm:$0xf]
    %v5147 = vld [vmem:[#allocation4 + $0x4c0] sm:$0xf]
    %v5148 = vld [vmem:[#allocation4 + $0x4c4] sm:$0xf]
    %v5149 = vld [vmem:[#allocation4 + $0x4c8] sm:$0xf]
    %v5150 = vld [vmem:[#allocation4 + $0x4cc] sm:$0xf]
    %v5151 = vld [vmem:[#allocation4 + $0x4d0] sm:$0xf]
    %v5152 = vld [vmem:[#allocation4 + $0x4d4] sm:$0xf]
    %v5153 = vld [vmem:[#allocation4 + $0x4d8] sm:$0xf]
    %v5154 = vld [vmem:[#allocation4 + $0x4dc] sm:$0xf]
    %v5155 = vld [vmem:[#allocation4 + $0x4e0] sm:$0xf]
    %v5156 = vld [vmem:[#allocation4 + $0x4e4] sm:$0xf]
    %v5157 = vld [vmem:[#allocation4 + $0x4e8] sm:$0xf]
    %v5158 = vld [vmem:[#allocation4 + $0x4ec] sm:$0xf]
    %v5159 = vld [vmem:[#allocation4 + $0x4f0] sm:$0xf]
    %v5160 = vld [vmem:[#allocation4 + $0x4f4] sm:$0xf]
    %v5161 = vld [vmem:[#allocation4 + $0x4f8] sm:$0xf]
    %v5162 = vld [vmem:[#allocation4 + $0x4fc] sm:$0xf]
    %v5163 = vld [vmem:[#allocation4 + $0x500] sm:$0xf]
    %v5164 = vld [vmem:[#allocation4 + $0x504] sm:$0xf]
    %v5165 = vld [vmem:[#allocation4 + $0x508] sm:$0xf]
    %v5166 = vld [vmem:[#allocation4 + $0x50c] sm:$0xf]
    %v5167 = vld [vmem:[#allocation4 + $0x510] sm:$0xf]
    %v5168 = vld [vmem:[#allocation4 + $0x514] sm:$0xf]
    %v5169 = vld [vmem:[#allocation4 + $0x518] sm:$0xf]
    %v5170 = vld [vmem:[#allocation4 + $0x51c] sm:$0xf]
    %v5171 = vld [vmem:[#allocation4 + $0x520] sm:$0xf]
    %v5172 = vld [vmem:[#allocation4 + $0x524] sm:$0xf]
    %v5173 = vld [vmem:[#allocation4 + $0x528] sm:$0xf]
    %v5174 = vld [vmem:[#allocation4 + $0x52c] sm:$0xf]
    %v5175 = vld [vmem:[#allocation4 + $0x530] sm:$0xf]
    %v5176 = vld [vmem:[#allocation4 + $0x534] sm:$0xf]
    %v5177 = vld [vmem:[#allocation4 + $0x538] sm:$0xf]
    %v5178 = vld [vmem:[#allocation4 + $0x53c] sm:$0xf]
    %v5179 = vld [vmem:[#allocation4 + $0x540] sm:$0xf]
    %v5180 = vld [vmem:[#allocation4 + $0x544] sm:$0xf]
    %v5181 = vld [vmem:[#allocation4 + $0x548] sm:$0xf]
    %v5182 = vld [vmem:[#allocation4 + $0x54c] sm:$0xf]
    %v5183 = vld [vmem:[#allocation4 + $0x550] sm:$0xf]
    %v5184 = vld [vmem:[#allocation4 + $0x554] sm:$0xf]
    %v5185 = vld [vmem:[#allocation4 + $0x558] sm:$0xf]
    %v5186 = vld [vmem:[#allocation4 + $0x55c] sm:$0xf]
    %v5187 = vld [vmem:[#allocation4 + $0x560] sm:$0xf]
    %v5188 = vld [vmem:[#allocation4 + $0x564] sm:$0xf]
    %v5189 = vld [vmem:[#allocation4 + $0x568] sm:$0xf]
    %v5190 = vld [vmem:[#allocation4 + $0x56c] sm:$0xf]
    %v5191 = vld [vmem:[#allocation4 + $0x570] sm:$0xf]
    %v5192 = vld [vmem:[#allocation4 + $0x574] sm:$0xf]
    %v5193 = vld [vmem:[#allocation4 + $0x578] sm:$0xf]
    %v5194 = vld [vmem:[#allocation4 + $0x57c] sm:$0xf]
    %v5195 = vld [vmem:[#allocation4 + $0x580] sm:$0xf]
    %v5196 = vld [vmem:[#allocation4 + $0x584] sm:$0xf]
    %v5197 = vld [vmem:[#allocation4 + $0x588] sm:$0xf]
    %v5198 = vld [vmem:[#allocation4 + $0x58c] sm:$0xf]
    %v5199 = vld [vmem:[#allocation4 + $0x590] sm:$0xf]
    %v5200 = vld [vmem:[#allocation4 + $0x594] sm:$0xf]
    %v5201 = vld [vmem:[#allocation4 + $0x598] sm:$0xf]
    %v5202 = vld [vmem:[#allocation4 + $0x59c] sm:$0xf]
    %v5203 = vld [vmem:[#allocation4 + $0x5a0] sm:$0xf]
    %v5204 = vld [vmem:[#allocation4 + $0x5a4] sm:$0xf]
    %v5205 = vld [vmem:[#allocation4 + $0x5a8] sm:$0xf]
    %v5206 = vld [vmem:[#allocation4 + $0x5ac] sm:$0xf]
    %v5207 = vld [vmem:[#allocation4 + $0x5b0] sm:$0xf]
    %v5208 = vld [vmem:[#allocation4 + $0x5b4] sm:$0xf]
    %v5209 = vld [vmem:[#allocation4 + $0x5b8] sm:$0xf]
    %v5210 = vld [vmem:[#allocation4 + $0x5bc] sm:$0xf]
    %v5211 = vld [vmem:[#allocation4 + $0x5c0] sm:$0xf]
    %v5212 = vld [vmem:[#allocation4 + $0x5c4] sm:$0xf]
    %v5213 = vld [vmem:[#allocation4 + $0x5c8] sm:$0xf]
    %v5214 = vld [vmem:[#allocation4 + $0x5cc] sm:$0xf]
    %v5215 = vld [vmem:[#allocation4 + $0x5d0] sm:$0xf]
    %v5216 = vld [vmem:[#allocation4 + $0x5d4] sm:$0xf]
    %v5217 = vld [vmem:[#allocation4 + $0x5d8] sm:$0xf]
    %v5218 = vld [vmem:[#allocation4 + $0x5dc] sm:$0xf]
    %v5219 = vld [vmem:[#allocation4 + $0x5e0] sm:$0xf]
    %v5220 = vld [vmem:[#allocation4 + $0x5e4] sm:$0xf]
    %v5221 = vld [vmem:[#allocation4 + $0x5e8] sm:$0xf]
    %v5222 = vld [vmem:[#allocation4 + $0x5ec] sm:$0xf]
    %v5223 = vld [vmem:[#allocation4 + $0x5f0] sm:$0xf]
    %v5224 = vld [vmem:[#allocation4 + $0x5f4] sm:$0xf]
    %v5225 = vld [vmem:[#allocation4 + $0x5f8] sm:$0xf]
    %v5226 = vld [vmem:[#allocation4 + $0x5fc] sm:$0xf]
    %v5227 = vld [vmem:[%s2] sm:$0x1]
    %v5229 = vlaneseq
    %v5230 = vshrl.u32 %v5229, 7
    %v5231 = vsub.s32 0, %v5230
    %v5232 = vrot.slane %v5227, %v5231
    %v5618 = vunpack.c.l.b16 %v4843
    %v5619 = vunpack.c.l.b16 %v4844
    %v5620 = vunpack.c.l.b16 %v4845
    %v5621 = vunpack.c.l.b16 %v4846
    %v5622 = vunpack.c.l.b16 %v4847
    %v5623 = vunpack.c.l.b16 %v4848
    %v5624 = vunpack.c.l.b16 %v4849
    %v5625 = vunpack.c.l.b16 %v4850
    %v5626 = vunpack.c.l.b16 %v4851
    %v5627 = vunpack.c.l.b16 %v4852
    %v5628 = vunpack.c.l.b16 %v4853
    %v5629 = vunpack.c.l.b16 %v4854
    %v5630 = vunpack.c.l.b16 %v4855
    %v5631 = vunpack.c.l.b16 %v4856
    %v5632 = vunpack.c.l.b16 %v4857
    %v5633 = vunpack.c.l.b16 %v4858
    %v5634 = vunpack.c.l.b16 %v4859
    %v5635 = vunpack.c.l.b16 %v4860
    %v5636 = vunpack.c.l.b16 %v4861
    %v5637 = vunpack.c.l.b16 %v4862
    %v5638 = vunpack.c.l.b16 %v4863
    %v5639 = vunpack.c.l.b16 %v4864
    %v5640 = vunpack.c.l.b16 %v4865
    %v5641 = vunpack.c.l.b16 %v4866
    %v5642 = vunpack.c.l.b16 %v4867
    %v5643 = vunpack.c.l.b16 %v4868
    %v5644 = vunpack.c.l.b16 %v4869
    %v5645 = vunpack.c.l.b16 %v4870
    %v5646 = vunpack.c.l.b16 %v4871
    %v5647 = vunpack.c.l.b16 %v4872
    %v5648 = vunpack.c.l.b16 %v4873
    %v5649 = vunpack.c.l.b16 %v4874
    %v5650 = vunpack.c.l.b16 %v4875
    %v5651 = vunpack.c.l.b16 %v4876
    %v5652 = vunpack.c.l.b16 %v4877
    %v5653 = vunpack.c.l.b16 %v4878
    %v5654 = vunpack.c.l.b16 %v4879
    %v5655 = vunpack.c.l.b16 %v4880
    %v5656 = vunpack.c.l.b16 %v4881
    %v5657 = vunpack.c.l.b16 %v4882
    %v5658 = vunpack.c.l.b16 %v4883
    %v5659 = vunpack.c.l.b16 %v4884
    %v5660 = vunpack.c.l.b16 %v4885
    %v5661 = vunpack.c.l.b16 %v4886
    %v5662 = vunpack.c.l.b16 %v4887
    %v5663 = vunpack.c.l.b16 %v4888
    %v5664 = vunpack.c.l.b16 %v4889
    %v5665 = vunpack.c.l.b16 %v4890
    %v5666 = vunpack.c.l.b16 %v4891
    %v5667 = vunpack.c.l.b16 %v4892
    %v5668 = vunpack.c.l.b16 %v4893
    %v5669 = vunpack.c.l.b16 %v4894
    %v5670 = vunpack.c.l.b16 %v4895
    %v5671 = vunpack.c.l.b16 %v4896
    %v5672 = vunpack.c.l.b16 %v4897
    %v5673 = vunpack.c.l.b16 %v4898
    %v5674 = vunpack.c.l.b16 %v4899
    %v5675 = vunpack.c.l.b16 %v4900
    %v5676 = vunpack.c.l.b16 %v4901
    %v5677 = vunpack.c.l.b16 %v4902
    %v5678 = vunpack.c.l.b16 %v4903
    %v5679 = vunpack.c.l.b16 %v4904
    %v5680 = vunpack.c.l.b16 %v4905
    %v5681 = vunpack.c.l.b16 %v4906
    %v5682 = vunpack.c.l.b16 %v4907
    %v5683 = vunpack.c.l.b16 %v4908
    %v5684 = vunpack.c.l.b16 %v4909
    %v5685 = vunpack.c.l.b16 %v4910
    %v5686 = vunpack.c.l.b16 %v4911
    %v5687 = vunpack.c.l.b16 %v4912
    %v5688 = vunpack.c.l.b16 %v4913
    %v5689 = vunpack.c.l.b16 %v4914
    %v5690 = vunpack.c.l.b16 %v4915
    %v5691 = vunpack.c.l.b16 %v4916
    %v5692 = vunpack.c.l.b16 %v4917
    %v5693 = vunpack.c.l.b16 %v4918
    %v5694 = vunpack.c.l.b16 %v4919
    %v5695 = vunpack.c.l.b16 %v4920
    %v5696 = vunpack.c.l.b16 %v4921
    %v5697 = vunpack.c.l.b16 %v4922
    %v5698 = vunpack.c.l.b16 %v4923
    %v5699 = vunpack.c.l.b16 %v4924
    %v5700 = vunpack.c.l.b16 %v4925
    %v5701 = vunpack.c.l.b16 %v4926
    %v5702 = vunpack.c.l.b16 %v4927
    %v5703 = vunpack.c.l.b16 %v4928
    %v5704 = vunpack.c.l.b16 %v4929
    %v5705 = vunpack.c.l.b16 %v4930
    %v5706 = vunpack.c.l.b16 %v4931
    %v5707 = vunpack.c.l.b16 %v4932
    %v5708 = vunpack.c.l.b16 %v4933
    %v5709 = vunpack.c.l.b16 %v4934
    %v5710 = vunpack.c.l.b16 %v4935
    %v5711 = vunpack.c.l.b16 %v4936
    %v5712 = vunpack.c.l.b16 %v4937
    %v5713 = vunpack.c.l.b16 %v4938
    %v5714 = vunpack.c.l.b16 %v4939
    %v5715 = vunpack.c.l.b16 %v4940
    %v5716 = vunpack.c.l.b16 %v4941
    %v5717 = vunpack.c.l.b16 %v4942
    %v5718 = vunpack.c.l.b16 %v4943
    %v5719 = vunpack.c.l.b16 %v4944
    %v5720 = vunpack.c.l.b16 %v4945
    %v5721 = vunpack.c.l.b16 %v4946
    %v5722 = vunpack.c.l.b16 %v4947
    %v5723 = vunpack.c.l.b16 %v4948
    %v5724 = vunpack.c.l.b16 %v4949
    %v5725 = vunpack.c.l.b16 %v4950
    %v5726 = vunpack.c.l.b16 %v4951
    %v5727 = vunpack.c.l.b16 %v4952
    %v5728 = vunpack.c.l.b16 %v4953
    %v5729 = vunpack.c.l.b16 %v4954
    %v5730 = vunpack.c.l.b16 %v4955
    %v5731 = vunpack.c.l.b16 %v4956
    %v5732 = vunpack.c.l.b16 %v4957
    %v5733 = vunpack.c.l.b16 %v4958
    %v5734 = vunpack.c.l.b16 %v4959
    %v5735 = vunpack.c.l.b16 %v4960
    %v5736 = vunpack.c.l.b16 %v4961
    %v5737 = vunpack.c.l.b16 %v4962
    %v5738 = vunpack.c.l.b16 %v4963
    %v5739 = vunpack.c.l.b16 %v4964
    %v5740 = vunpack.c.l.b16 %v4965
    %v5741 = vunpack.c.l.b16 %v4966
    %v5742 = vunpack.c.l.b16 %v4967
    %v5743 = vunpack.c.l.b16 %v4968
    %v5744 = vunpack.c.l.b16 %v4969
    %v5745 = vunpack.c.l.b16 %v4970
    %v5746 = vunpack.c.l.b16 %v4971
    %v5747 = vunpack.c.l.b16 %v4972
    %v5748 = vunpack.c.l.b16 %v4973
    %v5749 = vunpack.c.l.b16 %v4974
    %v5750 = vunpack.c.l.b16 %v4975
    %v5751 = vunpack.c.l.b16 %v4976
    %v5752 = vunpack.c.l.b16 %v4977
    %v5753 = vunpack.c.l.b16 %v4978
    %v5754 = vunpack.c.l.b16 %v4979
    %v5755 = vunpack.c.l.b16 %v4980
    %v5756 = vunpack.c.l.b16 %v4981
    %v5757 = vunpack.c.l.b16 %v4982
    %v5758 = vunpack.c.l.b16 %v4983
    %v5759 = vunpack.c.l.b16 %v4984
    %v5760 = vunpack.c.l.b16 %v4985
    %v5761 = vunpack.c.l.b16 %v4986
    %v5762 = vunpack.c.l.b16 %v4987
    %v5763 = vunpack.c.l.b16 %v4988
    %v5764 = vunpack.c.l.b16 %v4989
    %v5765 = vunpack.c.l.b16 %v4990
    %v5766 = vunpack.c.l.b16 %v4991
    %v5767 = vunpack.c.l.b16 %v4992
    %v5768 = vunpack.c.l.b16 %v4993
    %v5769 = vunpack.c.l.b16 %v4994
    %v5770 = vunpack.c.l.b16 %v4995
    %v5771 = vunpack.c.l.b16 %v4996
    %v5772 = vunpack.c.l.b16 %v4997
    %v5773 = vunpack.c.l.b16 %v4998
    %v5774 = vunpack.c.l.b16 %v4999
    %v5775 = vunpack.c.l.b16 %v5000
    %v5776 = vunpack.c.l.b16 %v5001
    %v5777 = vunpack.c.l.b16 %v5002
    %v5778 = vunpack.c.l.b16 %v5003
    %v5779 = vunpack.c.l.b16 %v5004
    %v5780 = vunpack.c.l.b16 %v5005
    %v5781 = vunpack.c.l.b16 %v5006
    %v5782 = vunpack.c.l.b16 %v5007
    %v5783 = vunpack.c.l.b16 %v5008
    %v5784 = vunpack.c.l.b16 %v5009
    %v5785 = vunpack.c.l.b16 %v5010
    %v5786 = vunpack.c.l.b16 %v5011
    %v5787 = vunpack.c.l.b16 %v5012
    %v5788 = vunpack.c.l.b16 %v5013
    %v5789 = vunpack.c.l.b16 %v5014
    %v5790 = vunpack.c.l.b16 %v5015
    %v5791 = vunpack.c.l.b16 %v5016
    %v5792 = vunpack.c.l.b16 %v5017
    %v5793 = vunpack.c.l.b16 %v5018
    %v5794 = vunpack.c.l.b16 %v5019
    %v5795 = vunpack.c.l.b16 %v5020
    %v5796 = vunpack.c.l.b16 %v5021
    %v5797 = vunpack.c.l.b16 %v5022
    %v5798 = vunpack.c.l.b16 %v5023
    %v5799 = vunpack.c.l.b16 %v5024
    %v5800 = vunpack.c.l.b16 %v5025
    %v5801 = vunpack.c.l.b16 %v5026
    %v5802 = vunpack.c.l.b16 %v5027
    %v5803 = vunpack.c.l.b16 %v5028
    %v5804 = vunpack.c.l.b16 %v5029
    %v5805 = vunpack.c.l.b16 %v5030
    %v5806 = vunpack.c.l.b16 %v5031
    %v5807 = vunpack.c.l.b16 %v5032
    %v5808 = vunpack.c.l.b16 %v5033
    %v5809 = vunpack.c.l.b16 %v5034
    %v5810 = vunpack.c.l.b16 %v5035
    %v5811 = vunpack.c.l.b16 %v5036
    %v5812 = vunpack.c.l.b16 %v5037
    %v5813 = vunpack.c.l.b16 %v5038
    %v5814 = vunpack.c.l.b16 %v5039
    %v5815 = vunpack.c.l.b16 %v5040
    %v5816 = vunpack.c.l.b16 %v5041
    %v5817 = vunpack.c.l.b16 %v5042
    %v5818 = vunpack.c.l.b16 %v5043
    %v5819 = vunpack.c.l.b16 %v5044
    %v5820 = vunpack.c.l.b16 %v5045
    %v5821 = vunpack.c.l.b16 %v5046
    %v5822 = vunpack.c.l.b16 %v5047
    %v5823 = vunpack.c.l.b16 %v5048
    %v5824 = vunpack.c.l.b16 %v5049
    %v5825 = vunpack.c.l.b16 %v5050
    %v5826 = vunpack.c.l.b16 %v5051
    %v5827 = vunpack.c.l.b16 %v5052
    %v5828 = vunpack.c.l.b16 %v5053
    %v5829 = vunpack.c.l.b16 %v5054
    %v5830 = vunpack.c.l.b16 %v5055
    %v5831 = vunpack.c.l.b16 %v5056
    %v5832 = vunpack.c.l.b16 %v5057
    %v5833 = vunpack.c.l.b16 %v5058
    %v5834 = vunpack.c.l.b16 %v5059
    %v5835 = vunpack.c.l.b16 %v5060
    %v5836 = vunpack.c.l.b16 %v5061
    %v5837 = vunpack.c.l.b16 %v5062
    %v5838 = vunpack.c.l.b16 %v5063
    %v5839 = vunpack.c.l.b16 %v5064
    %v5840 = vunpack.c.l.b16 %v5065
    %v5841 = vunpack.c.l.b16 %v5066
    %v5842 = vunpack.c.l.b16 %v5067
    %v5843 = vunpack.c.l.b16 %v5068
    %v5844 = vunpack.c.l.b16 %v5069
    %v5845 = vunpack.c.l.b16 %v5070
    %v5846 = vunpack.c.l.b16 %v5071
    %v5847 = vunpack.c.l.b16 %v5072
    %v5848 = vunpack.c.l.b16 %v5073
    %v5849 = vunpack.c.l.b16 %v5074
    %v5850 = vunpack.c.l.b16 %v5075
    %v5851 = vunpack.c.l.b16 %v5076
    %v5852 = vunpack.c.l.b16 %v5077
    %v5853 = vunpack.c.l.b16 %v5078
    %v5854 = vunpack.c.l.b16 %v5079
    %v5855 = vunpack.c.l.b16 %v5080
    %v5856 = vunpack.c.l.b16 %v5081
    %v5857 = vunpack.c.l.b16 %v5082
    %v5858 = vunpack.c.l.b16 %v5083
    %v5859 = vunpack.c.l.b16 %v5084
    %v5860 = vunpack.c.l.b16 %v5085
    %v5861 = vunpack.c.l.b16 %v5086
    %v5862 = vunpack.c.l.b16 %v5087
    %v5863 = vunpack.c.l.b16 %v5088
    %v5864 = vunpack.c.l.b16 %v5089
    %v5865 = vunpack.c.l.b16 %v5090
    %v5866 = vunpack.c.l.b16 %v5091
    %v5867 = vunpack.c.l.b16 %v5092
    %v5868 = vunpack.c.l.b16 %v5093
    %v5869 = vunpack.c.l.b16 %v5094
    %v5870 = vunpack.c.l.b16 %v5095
    %v5871 = vunpack.c.l.b16 %v5096
    %v5872 = vunpack.c.l.b16 %v5097
    %v5873 = vunpack.c.l.b16 %v5098
    %v5874 = vunpack.c.l.b16 %v5099
    %v5875 = vunpack.c.l.b16 %v5100
    %v5876 = vunpack.c.l.b16 %v5101
    %v5877 = vunpack.c.l.b16 %v5102
    %v5878 = vunpack.c.l.b16 %v5103
    %v5879 = vunpack.c.l.b16 %v5104
    %v5880 = vunpack.c.l.b16 %v5105
    %v5881 = vunpack.c.l.b16 %v5106
    %v5882 = vunpack.c.l.b16 %v5107
    %v5883 = vunpack.c.l.b16 %v5108
    %v5884 = vunpack.c.l.b16 %v5109
    %v5885 = vunpack.c.l.b16 %v5110
    %v5886 = vunpack.c.l.b16 %v5111
    %v5887 = vunpack.c.l.b16 %v5112
    %v5888 = vunpack.c.l.b16 %v5113
    %v5889 = vunpack.c.l.b16 %v5114
    %v5890 = vunpack.c.l.b16 %v5115
    %v5891 = vunpack.c.l.b16 %v5116
    %v5892 = vunpack.c.l.b16 %v5117
    %v5893 = vunpack.c.l.b16 %v5118
    %v5894 = vunpack.c.l.b16 %v5119
    %v5895 = vunpack.c.l.b16 %v5120
    %v5896 = vunpack.c.l.b16 %v5121
    %v5897 = vunpack.c.l.b16 %v5122
    %v5898 = vunpack.c.l.b16 %v5123
    %v5899 = vunpack.c.l.b16 %v5124
    %v5900 = vunpack.c.l.b16 %v5125
    %v5901 = vunpack.c.l.b16 %v5126
    %v5902 = vunpack.c.l.b16 %v5127
    %v5903 = vunpack.c.l.b16 %v5128
    %v5904 = vunpack.c.l.b16 %v5129
    %v5905 = vunpack.c.l.b16 %v5130
    %v5906 = vunpack.c.l.b16 %v5131
    %v5907 = vunpack.c.l.b16 %v5132
    %v5908 = vunpack.c.l.b16 %v5133
    %v5909 = vunpack.c.l.b16 %v5134
    %v5910 = vunpack.c.l.b16 %v5135
    %v5911 = vunpack.c.l.b16 %v5136
    %v5912 = vunpack.c.l.b16 %v5137
    %v5913 = vunpack.c.l.b16 %v5138
    %v5914 = vunpack.c.l.b16 %v5139
    %v5915 = vunpack.c.l.b16 %v5140
    %v5916 = vunpack.c.l.b16 %v5141
    %v5917 = vunpack.c.l.b16 %v5142
    %v5918 = vunpack.c.l.b16 %v5143
    %v5919 = vunpack.c.l.b16 %v5144
    %v5920 = vunpack.c.l.b16 %v5145
    %v5921 = vunpack.c.l.b16 %v5146
    %v5922 = vunpack.c.l.b16 %v5147
    %v5923 = vunpack.c.l.b16 %v5148
    %v5924 = vunpack.c.l.b16 %v5149
    %v5925 = vunpack.c.l.b16 %v5150
    %v5926 = vunpack.c.l.b16 %v5151
    %v5927 = vunpack.c.l.b16 %v5152
    %v5928 = vunpack.c.l.b16 %v5153
    %v5929 = vunpack.c.l.b16 %v5154
    %v5930 = vunpack.c.l.b16 %v5155
    %v5931 = vunpack.c.l.b16 %v5156
    %v5932 = vunpack.c.l.b16 %v5157
    %v5933 = vunpack.c.l.b16 %v5158
    %v5934 = vunpack.c.l.b16 %v5159
    %v5935 = vunpack.c.l.b16 %v5160
    %v5936 = vunpack.c.l.b16 %v5161
    %v5937 = vunpack.c.l.b16 %v5162
    %v5938 = vunpack.c.l.b16 %v5163
    %v5939 = vunpack.c.l.b16 %v5164
    %v5940 = vunpack.c.l.b16 %v5165
    %v5941 = vunpack.c.l.b16 %v5166
    %v5942 = vunpack.c.l.b16 %v5167
    %v5943 = vunpack.c.l.b16 %v5168
    %v5944 = vunpack.c.l.b16 %v5169
    %v5945 = vunpack.c.l.b16 %v5170
    %v5946 = vunpack.c.l.b16 %v5171
    %v5947 = vunpack.c.l.b16 %v5172
    %v5948 = vunpack.c.l.b16 %v5173
    %v5949 = vunpack.c.l.b16 %v5174
    %v5950 = vunpack.c.l.b16 %v5175
    %v5951 = vunpack.c.l.b16 %v5176
    %v5952 = vunpack.c.l.b16 %v5177
    %v5953 = vunpack.c.l.b16 %v5178
    %v5954 = vunpack.c.l.b16 %v5179
    %v5955 = vunpack.c.l.b16 %v5180
    %v5956 = vunpack.c.l.b16 %v5181
    %v5957 = vunpack.c.l.b16 %v5182
    %v5958 = vunpack.c.l.b16 %v5183
    %v5959 = vunpack.c.l.b16 %v5184
    %v5960 = vunpack.c.l.b16 %v5185
    %v5961 = vunpack.c.l.b16 %v5186
    %v5962 = vunpack.c.l.b16 %v5187
    %v5963 = vunpack.c.l.b16 %v5188
    %v5964 = vunpack.c.l.b16 %v5189
    %v5965 = vunpack.c.l.b16 %v5190
    %v5966 = vunpack.c.l.b16 %v5191
    %v5967 = vunpack.c.l.b16 %v5192
    %v5968 = vunpack.c.l.b16 %v5193
    %v5969 = vunpack.c.l.b16 %v5194
    %v5970 = vunpack.c.l.b16 %v5195
    %v5971 = vunpack.c.l.b16 %v5196
    %v5972 = vunpack.c.l.b16 %v5197
    %v5973 = vunpack.c.l.b16 %v5198
    %v5974 = vunpack.c.l.b16 %v5199
    %v5975 = vunpack.c.l.b16 %v5200
    %v5976 = vunpack.c.l.b16 %v5201
    %v5977 = vunpack.c.l.b16 %v5202
    %v5978 = vunpack.c.l.b16 %v5203
    %v5979 = vunpack.c.l.b16 %v5204
    %v5980 = vunpack.c.l.b16 %v5205
    %v5981 = vunpack.c.l.b16 %v5206
    %v5982 = vunpack.c.l.b16 %v5207
    %v5983 = vunpack.c.l.b16 %v5208
    %v5984 = vunpack.c.l.b16 %v5209
    %v5985 = vunpack.c.l.b16 %v5210
    %v5986 = vunpack.c.l.b16 %v5211
    %v5987 = vunpack.c.l.b16 %v5212
    %v5988 = vunpack.c.l.b16 %v5213
    %v5989 = vunpack.c.l.b16 %v5214
    %v5990 = vunpack.c.l.b16 %v5215
    %v5991 = vunpack.c.l.b16 %v5216
    %v5992 = vunpack.c.l.b16 %v5217
    %v5993 = vunpack.c.l.b16 %v5218
    %v5994 = vunpack.c.l.b16 %v5219
    %v5995 = vunpack.c.l.b16 %v5220
    %v5996 = vunpack.c.l.b16 %v5221
    %v5997 = vunpack.c.l.b16 %v5222
    %v5998 = vunpack.c.l.b16 %v5223
    %v5999 = vunpack.c.l.b16 %v5224
    %v6000 = vunpack.c.l.b16 %v5225
    %v6001 = vunpack.c.l.b16 %v5226
    %v6002 = vpack.c.b16 %v5619, %v5618
    %v6003 = vpack.c.b16 %v5621, %v5620
    %v6004 = vpack.c.b16 %v5623, %v5622
    %v6005 = vpack.c.b16 %v5625, %v5624
    %v6006 = vpack.c.b16 %v5627, %v5626
    %v6007 = vpack.c.b16 %v5629, %v5628
    %v6008 = vpack.c.b16 %v5631, %v5630
    %v6009 = vpack.c.b16 %v5633, %v5632
    %v6010 = vpack.c.b16 %v5635, %v5634
    %v6011 = vpack.c.b16 %v5637, %v5636
    %v6012 = vpack.c.b16 %v5639, %v5638
    %v6013 = vpack.c.b16 %v5641, %v5640
    %v6014 = vpack.c.b16 %v5643, %v5642
    %v6015 = vpack.c.b16 %v5645, %v5644
    %v6016 = vpack.c.b16 %v5647, %v5646
    %v6017 = vpack.c.b16 %v5649, %v5648
    %v6018 = vpack.c.b16 %v5651, %v5650
    %v6019 = vpack.c.b16 %v5653, %v5652
    %v6020 = vpack.c.b16 %v5655, %v5654
    %v6021 = vpack.c.b16 %v5657, %v5656
    %v6022 = vpack.c.b16 %v5659, %v5658
    %v6023 = vpack.c.b16 %v5661, %v5660
    %v6024 = vpack.c.b16 %v5663, %v5662
    %v6025 = vpack.c.b16 %v5665, %v5664
    %v6026 = vpack.c.b16 %v5667, %v5666
    %v6027 = vpack.c.b16 %v5669, %v5668
    %v6028 = vpack.c.b16 %v5671, %v5670
    %v6029 = vpack.c.b16 %v5673, %v5672
    %v6030 = vpack.c.b16 %v5675, %v5674
    %v6031 = vpack.c.b16 %v5677, %v5676
    %v6032 = vpack.c.b16 %v5679, %v5678
    %v6033 = vpack.c.b16 %v5681, %v5680
    %v6034 = vpack.c.b16 %v5683, %v5682
    %v6035 = vpack.c.b16 %v5685, %v5684
    %v6036 = vpack.c.b16 %v5687, %v5686
    %v6037 = vpack.c.b16 %v5689, %v5688
    %v6038 = vpack.c.b16 %v5691, %v5690
    %v6039 = vpack.c.b16 %v5693, %v5692
    %v6040 = vpack.c.b16 %v5695, %v5694
    %v6041 = vpack.c.b16 %v5697, %v5696
    %v6042 = vpack.c.b16 %v5699, %v5698
    %v6043 = vpack.c.b16 %v5701, %v5700
    %v6044 = vpack.c.b16 %v5703, %v5702
    %v6045 = vpack.c.b16 %v5705, %v5704
    %v6046 = vpack.c.b16 %v5707, %v5706
    %v6047 = vpack.c.b16 %v5709, %v5708
    %v6048 = vpack.c.b16 %v5711, %v5710
    %v6049 = vpack.c.b16 %v5713, %v5712
    %v6050 = vpack.c.b16 %v5715, %v5714
    %v6051 = vpack.c.b16 %v5717, %v5716
    %v6052 = vpack.c.b16 %v5719, %v5718
    %v6053 = vpack.c.b16 %v5721, %v5720
    %v6054 = vpack.c.b16 %v5723, %v5722
    %v6055 = vpack.c.b16 %v5725, %v5724
    %v6056 = vpack.c.b16 %v5727, %v5726
    %v6057 = vpack.c.b16 %v5729, %v5728
    %v6058 = vpack.c.b16 %v5731, %v5730
    %v6059 = vpack.c.b16 %v5733, %v5732
    %v6060 = vpack.c.b16 %v5735, %v5734
    %v6061 = vpack.c.b16 %v5737, %v5736
    %v6062 = vpack.c.b16 %v5739, %v5738
    %v6063 = vpack.c.b16 %v5741, %v5740
    %v6064 = vpack.c.b16 %v5743, %v5742
    %v6065 = vpack.c.b16 %v5745, %v5744
    %v6066 = vpack.c.b16 %v5747, %v5746
    %v6067 = vpack.c.b16 %v5749, %v5748
    %v6068 = vpack.c.b16 %v5751, %v5750
    %v6069 = vpack.c.b16 %v5753, %v5752
    %v6070 = vpack.c.b16 %v5755, %v5754
    %v6071 = vpack.c.b16 %v5757, %v5756
    %v6072 = vpack.c.b16 %v5759, %v5758
    %v6073 = vpack.c.b16 %v5761, %v5760
    %v6074 = vpack.c.b16 %v5763, %v5762
    %v6075 = vpack.c.b16 %v5765, %v5764
    %v6076 = vpack.c.b16 %v5767, %v5766
    %v6077 = vpack.c.b16 %v5769, %v5768
    %v6078 = vpack.c.b16 %v5771, %v5770
    %v6079 = vpack.c.b16 %v5773, %v5772
    %v6080 = vpack.c.b16 %v5775, %v5774
    %v6081 = vpack.c.b16 %v5777, %v5776
    %v6082 = vpack.c.b16 %v5779, %v5778
    %v6083 = vpack.c.b16 %v5781, %v5780
    %v6084 = vpack.c.b16 %v5783, %v5782
    %v6085 = vpack.c.b16 %v5785, %v5784
    %v6086 = vpack.c.b16 %v5787, %v5786
    %v6087 = vpack.c.b16 %v5789, %v5788
    %v6088 = vpack.c.b16 %v5791, %v5790
    %v6089 = vpack.c.b16 %v5793, %v5792
    %v6090 = vpack.c.b16 %v5795, %v5794
    %v6091 = vpack.c.b16 %v5797, %v5796
    %v6092 = vpack.c.b16 %v5799, %v5798
    %v6093 = vpack.c.b16 %v5801, %v5800
    %v6094 = vpack.c.b16 %v5803, %v5802
    %v6095 = vpack.c.b16 %v5805, %v5804
    %v6096 = vpack.c.b16 %v5807, %v5806
    %v6097 = vpack.c.b16 %v5809, %v5808
    %v6098 = vpack.c.b16 %v5811, %v5810
    %v6099 = vpack.c.b16 %v5813, %v5812
    %v6100 = vpack.c.b16 %v5815, %v5814
    %v6101 = vpack.c.b16 %v5817, %v5816
    %v6102 = vpack.c.b16 %v5819, %v5818
    %v6103 = vpack.c.b16 %v5821, %v5820
    %v6104 = vpack.c.b16 %v5823, %v5822
    %v6105 = vpack.c.b16 %v5825, %v5824
    %v6106 = vpack.c.b16 %v5827, %v5826
    %v6107 = vpack.c.b16 %v5829, %v5828
    %v6108 = vpack.c.b16 %v5831, %v5830
    %v6109 = vpack.c.b16 %v5833, %v5832
    %v6110 = vpack.c.b16 %v5835, %v5834
    %v6111 = vpack.c.b16 %v5837, %v5836
    %v6112 = vpack.c.b16 %v5839, %v5838
    %v6113 = vpack.c.b16 %v5841, %v5840
    %v6114 = vpack.c.b16 %v5843, %v5842
    %v6115 = vpack.c.b16 %v5845, %v5844
    %v6116 = vpack.c.b16 %v5847, %v5846
    %v6117 = vpack.c.b16 %v5849, %v5848
    %v6118 = vpack.c.b16 %v5851, %v5850
    %v6119 = vpack.c.b16 %v5853, %v5852
    %v6120 = vpack.c.b16 %v5855, %v5854
    %v6121 = vpack.c.b16 %v5857, %v5856
    %v6122 = vpack.c.b16 %v5859, %v5858
    %v6123 = vpack.c.b16 %v5861, %v5860
    %v6124 = vpack.c.b16 %v5863, %v5862
    %v6125 = vpack.c.b16 %v5865, %v5864
    %v6126 = vpack.c.b16 %v5867, %v5866
    %v6127 = vpack.c.b16 %v5869, %v5868
    %v6128 = vpack.c.b16 %v5871, %v5870
    %v6129 = vpack.c.b16 %v5873, %v5872
    %v6130 = vpack.c.b16 %v5875, %v5874
    %v6131 = vpack.c.b16 %v5877, %v5876
    %v6132 = vpack.c.b16 %v5879, %v5878
    %v6133 = vpack.c.b16 %v5881, %v5880
    %v6134 = vpack.c.b16 %v5883, %v5882
    %v6135 = vpack.c.b16 %v5885, %v5884
    %v6136 = vpack.c.b16 %v5887, %v5886
    %v6137 = vpack.c.b16 %v5889, %v5888
    %v6138 = vpack.c.b16 %v5891, %v5890
    %v6139 = vpack.c.b16 %v5893, %v5892
    %v6140 = vpack.c.b16 %v5895, %v5894
    %v6141 = vpack.c.b16 %v5897, %v5896
    %v6142 = vpack.c.b16 %v5899, %v5898
    %v6143 = vpack.c.b16 %v5901, %v5900
    %v6144 = vpack.c.b16 %v5903, %v5902
    %v6145 = vpack.c.b16 %v5905, %v5904
    %v6146 = vpack.c.b16 %v5907, %v5906
    %v6147 = vpack.c.b16 %v5909, %v5908
    %v6148 = vpack.c.b16 %v5911, %v5910
    %v6149 = vpack.c.b16 %v5913, %v5912
    %v6150 = vpack.c.b16 %v5915, %v5914
    %v6151 = vpack.c.b16 %v5917, %v5916
    %v6152 = vpack.c.b16 %v5919, %v5918
    %v6153 = vpack.c.b16 %v5921, %v5920
    %v6154 = vpack.c.b16 %v5923, %v5922
    %v6155 = vpack.c.b16 %v5925, %v5924
    %v6156 = vpack.c.b16 %v5927, %v5926
    %v6157 = vpack.c.b16 %v5929, %v5928
    %v6158 = vpack.c.b16 %v5931, %v5930
    %v6159 = vpack.c.b16 %v5933, %v5932
    %v6160 = vpack.c.b16 %v5935, %v5934
    %v6161 = vpack.c.b16 %v5937, %v5936
    %v6162 = vpack.c.b16 %v5939, %v5938
    %v6163 = vpack.c.b16 %v5941, %v5940
    %v6164 = vpack.c.b16 %v5943, %v5942
    %v6165 = vpack.c.b16 %v5945, %v5944
    %v6166 = vpack.c.b16 %v5947, %v5946
    %v6167 = vpack.c.b16 %v5949, %v5948
    %v6168 = vpack.c.b16 %v5951, %v5950
    %v6169 = vpack.c.b16 %v5953, %v5952
    %v6170 = vpack.c.b16 %v5955, %v5954
    %v6171 = vpack.c.b16 %v5957, %v5956
    %v6172 = vpack.c.b16 %v5959, %v5958
    %v6173 = vpack.c.b16 %v5961, %v5960
    %v6174 = vpack.c.b16 %v5963, %v5962
    %v6175 = vpack.c.b16 %v5965, %v5964
    %v6176 = vpack.c.b16 %v5967, %v5966
    %v6177 = vpack.c.b16 %v5969, %v5968
    %v6178 = vpack.c.b16 %v5971, %v5970
    %v6179 = vpack.c.b16 %v5973, %v5972
    %v6180 = vpack.c.b16 %v5975, %v5974
    %v6181 = vpack.c.b16 %v5977, %v5976
    %v6182 = vpack.c.b16 %v5979, %v5978
    %v6183 = vpack.c.b16 %v5981, %v5980
    %v6184 = vpack.c.b16 %v5983, %v5982
    %v6185 = vpack.c.b16 %v5985, %v5984
    %v6186 = vpack.c.b16 %v5987, %v5986
    %v6187 = vpack.c.b16 %v5989, %v5988
    %v6188 = vpack.c.b16 %v5991, %v5990
    %v6189 = vpack.c.b16 %v5993, %v5992
    %v6190 = vpack.c.b16 %v5995, %v5994
    %v6191 = vpack.c.b16 %v5997, %v5996
    %v6192 = vpack.c.b16 %v5999, %v5998
    %v6193 = vpack.c.b16 %v6001, %v6000
    %6386 = vmatprep.subr.bf16.mxu0 0
    %6387 = vmatpush1.bf16.msra.mxu0 %v6009
    %6388 = vmatprep.subr.bf16.mxu0 0
    %6389 = vmatpush1.bf16.msra.mxu0 %v6008
    %6390 = vmatprep.subr.bf16.mxu0 0
    %6391 = vmatpush1.bf16.msra.mxu0 %v6007
    %6392 = vmatprep.subr.bf16.mxu0 0
    %6393 = vmatpush1.bf16.msra.mxu0 %v6006
    %6394 = vmatprep.subr.bf16.mxu0 0
    %6395 = vmatpush1.bf16.msra.mxu0 %v6005
    %6396 = vmatprep.subr.bf16.mxu0 0
    %6397 = vmatpush1.bf16.msra.mxu0 %v6004
    %6398 = vmatprep.subr.bf16.mxu0 0
    %6399 = vmatpush1.bf16.msra.mxu0 %v6003
    %6400 = vmatprep.subr.bf16.mxu0 0
    %6401 = vmatpush1.bf16.msra.mxu0 %v6002
    %6402 = vmatprep.subr.bf16.mxu0 0
    %6403 = vmatpush2.bf16.msra.mxu0 %v6017
    %6404 = vmatprep.subr.bf16.mxu0 0
    %6405 = vmatpush2.bf16.msra.mxu0 %v6016
    %6406 = vmatprep.subr.bf16.mxu0 0
    %6407 = vmatpush2.bf16.msra.mxu0 %v6015
    %6408 = vmatprep.subr.bf16.mxu0 0
    %6409 = vmatpush2.bf16.msra.mxu0 %v6014
    %6410 = vmatprep.subr.bf16.mxu0 0
    %6411 = vmatpush2.bf16.msra.mxu0 %v6013
    %6412 = vmatprep.subr.bf16.mxu0 0
    %6413 = vmatpush2.bf16.msra.mxu0 %v6012
    %6414 = vmatprep.subr.bf16.mxu0 0
    %6415 = vmatpush2.bf16.msra.mxu0 %v6011
    %6416 = vmatprep.subr.bf16.mxu0 0
    %6417 = vmatpush2.bf16.msra.mxu0 %v6010
    %6418 = vmatprep.mubr.bf16.mxu0 %v4652
    %6419 = vmatmul.mubr.bf16.gmra.mxu0 %v4651
    %v6420 = vpop.f32.mrf.mxu0
    %v6421 = vadd.f32 %v5232, %v6420
    %v6422 = vpop.f32.mrf.mxu0
    %v6423 = vpop.f32.mrf.mxu0
    %v6424 = vadd.f32 %v5232, %v6423
    %v6425 = vpop.f32.mrf.mxu0
    %6426 = vmatprep.mubr.bf16.mxu0 %v4676
    %6427 = vmatmul.mubr.bf16.gmra.mxu0 %v4675
    %v6428 = vpop.f32.mrf.mxu0
    %v6429 = vadd.f32 %v5232, %v6428
    %v6430 = vpop.f32.mrf.mxu0
    %v6431 = vpop.f32.mrf.mxu0
    %v6432 = vadd.f32 %v5232, %v6431
    %v6433 = vpop.f32.mrf.mxu0
    %6434 = vmatprep.mubr.bf16.mxu0 %v4700
    %6435 = vmatmul.mubr.bf16.gmra.mxu0 %v4699
    %v6436 = vpop.f32.mrf.mxu0
    %v6437 = vadd.f32 %v5232, %v6436
    %v6438 = vpop.f32.mrf.mxu0
    %v6439 = vpop.f32.mrf.mxu0
    %v6440 = vadd.f32 %v5232, %v6439
    %v6441 = vpop.f32.mrf.mxu0
    %6442 = vmatprep.mubr.bf16.mxu0 %v4724
    %6443 = vmatmul.mubr.bf16.gmra.mxu0 %v4723
    %v6444 = vpop.f32.mrf.mxu0
    %v6445 = vadd.f32 %v5232, %v6444
    %v6446 = vpop.f32.mrf.mxu0
    %v6447 = vpop.f32.mrf.mxu0
    %v6448 = vadd.f32 %v5232, %v6447
    %v6449 = vpop.f32.mrf.mxu0
    %6450 = vmatprep.mubr.bf16.mxu0 %v4748
    %6451 = vmatmul.mubr.bf16.gmra.mxu0 %v4747
    %v6452 = vpop.f32.mrf.mxu0
    %v6453 = vadd.f32 %v5232, %v6452
    %v6454 = vpop.f32.mrf.mxu0
    %v6455 = vpop.f32.mrf.mxu0
    %v6456 = vadd.f32 %v5232, %v6455
    %v6457 = vpop.f32.mrf.mxu0
    %6458 = vmatprep.mubr.bf16.mxu0 %v4772
    %6459 = vmatmul.mubr.bf16.gmra.mxu0 %v4771
    %v6460 = vpop.f32.mrf.mxu0
    %v6461 = vadd.f32 %v5232, %v6460
    %v6462 = vpop.f32.mrf.mxu0
    %v6463 = vpop.f32.mrf.mxu0
    %v6464 = vadd.f32 %v5232, %v6463
    %v6465 = vpop.f32.mrf.mxu0
    %6466 = vmatprep.mubr.bf16.mxu0 %v4796
    %6467 = vmatmul.mubr.bf16.gmra.mxu0 %v4795
    %v6468 = vpop.f32.mrf.mxu0
    %v6469 = vadd.f32 %v5232, %v6468
    %v6470 = vpop.f32.mrf.mxu0
    %v6471 = vpop.f32.mrf.mxu0
    %v6472 = vadd.f32 %v5232, %v6471
    %v6473 = vpop.f32.mrf.mxu0
    %6474 = vmatprep.mubr.bf16.mxu0 %v4820
    %6475 = vmatmul.mubr.bf16.gmra.mxu0 %v4819
    %v6476 = vpop.f32.mrf.mxu0
    %v6477 = vadd.f32 %v5232, %v6476
    %v6478 = vpop.f32.mrf.mxu0
    %v6479 = vpop.f32.mrf.mxu0
    %v6480 = vadd.f32 %v5232, %v6479
    %v6481 = vpop.f32.mrf.mxu0
    %6482 = vdwg.mxu0
    %6483 = vmatprep.subr.bf16.mxu0 0
    %6484 = vmatpush1.bf16.msra.mxu0 %v6025
    %6485 = vmatprep.subr.bf16.mxu0 0
    %6486 = vmatpush1.bf16.msra.mxu0 %v6024
    %6487 = vmatprep.subr.bf16.mxu0 0
    %6488 = vmatpush1.bf16.msra.mxu0 %v6023
    %6489 = vmatprep.subr.bf16.mxu0 0
    %6490 = vmatpush1.bf16.msra.mxu0 %v6022
    %6491 = vmatprep.subr.bf16.mxu0 0
    %6492 = vmatpush1.bf16.msra.mxu0 %v6021
    %6493 = vmatprep.subr.bf16.mxu0 0
    %6494 = vmatpush1.bf16.msra.mxu0 %v6020
    %6495 = vmatprep.subr.bf16.mxu0 0
    %6496 = vmatpush1.bf16.msra.mxu0 %v6019
    %6497 = vmatprep.subr.bf16.mxu0 0
    %6498 = vmatpush1.bf16.msra.mxu0 %v6018
    %6499 = vmatprep.subr.bf16.mxu0 0
    %6500 = vmatpush2.bf16.msra.mxu0 %v6033
    %6501 = vmatprep.subr.bf16.mxu0 0
    %6502 = vmatpush2.bf16.msra.mxu0 %v6032
    %6503 = vmatprep.subr.bf16.mxu0 0
    %6504 = vmatpush2.bf16.msra.mxu0 %v6031
    %6505 = vmatprep.subr.bf16.mxu0 0
    %6506 = vmatpush2.bf16.msra.mxu0 %v6030
    %6507 = vmatprep.subr.bf16.mxu0 0
    %6508 = vmatpush2.bf16.msra.mxu0 %v6029
    %6509 = vmatprep.subr.bf16.mxu0 0
    %6510 = vmatpush2.bf16.msra.mxu0 %v6028
    %6511 = vmatprep.subr.bf16.mxu0 0
    %6512 = vmatpush2.bf16.msra.mxu0 %v6027
    %6513 = vmatprep.subr.bf16.mxu0 0
    %6514 = vmatpush2.bf16.msra.mxu0 %v6026
    %6515 = vmatprep.mubr.bf16.mxu0 %v4654
    %6516 = vmatmul.mubr.bf16.gmra.mxu0 %v4653
    %v6517 = vpop.f32.mrf.mxu0
    %v6518 = vadd.f32 %v6421, %v6517
    %v6519 = vpop.f32.mrf.mxu0
    %v6520 = vpop.f32.mrf.mxu0
    %v6521 = vadd.f32 %v6424, %v6520
    %v6522 = vpop.f32.mrf.mxu0
    %6523 = vmatprep.mubr.bf16.mxu0 %v4678
    %6524 = vmatmul.mubr.bf16.gmra.mxu0 %v4677
    %v6525 = vpop.f32.mrf.mxu0
    %v6526 = vadd.f32 %v6429, %v6525
    %v6527 = vpop.f32.mrf.mxu0
    %v6528 = vpop.f32.mrf.mxu0
    %v6529 = vadd.f32 %v6432, %v6528
    %v6530 = vpop.f32.mrf.mxu0
    %6531 = vmatprep.mubr.bf16.mxu0 %v4702
    %6532 = vmatmul.mubr.bf16.gmra.mxu0 %v4701
    %v6533 = vpop.f32.mrf.mxu0
    %v6534 = vadd.f32 %v6437, %v6533
    %v6535 = vpop.f32.mrf.mxu0
    %v6536 = vpop.f32.mrf.mxu0
    %v6537 = vadd.f32 %v6440, %v6536
    %v6538 = vpop.f32.mrf.mxu0
    %6539 = vmatprep.mubr.bf16.mxu0 %v4726
    %6540 = vmatmul.mubr.bf16.gmra.mxu0 %v4725
    %v6541 = vpop.f32.mrf.mxu0
    %v6542 = vadd.f32 %v6445, %v6541
    %v6543 = vpop.f32.mrf.mxu0
    %v6544 = vpop.f32.mrf.mxu0
    %v6545 = vadd.f32 %v6448, %v6544
    %v6546 = vpop.f32.mrf.mxu0
    %6547 = vmatprep.mubr.bf16.mxu0 %v4750
    %6548 = vmatmul.mubr.bf16.gmra.mxu0 %v4749
    %v6549 = vpop.f32.mrf.mxu0
    %v6550 = vadd.f32 %v6453, %v6549
    %v6551 = vpop.f32.mrf.mxu0
    %v6552 = vpop.f32.mrf.mxu0
    %v6553 = vadd.f32 %v6456, %v6552
    %v6554 = vpop.f32.mrf.mxu0
    %6555 = vmatprep.mubr.bf16.mxu0 %v4774
    %6556 = vmatmul.mubr.bf16.gmra.mxu0 %v4773
    %v6557 = vpop.f32.mrf.mxu0
    %v6558 = vadd.f32 %v6461, %v6557
    %v6559 = vpop.f32.mrf.mxu0
    %v6560 = vpop.f32.mrf.mxu0
    %v6561 = vadd.f32 %v6464, %v6560
    %v6562 = vpop.f32.mrf.mxu0
    %6563 = vmatprep.mubr.bf16.mxu0 %v4798
    %6564 = vmatmul.mubr.bf16.gmra.mxu0 %v4797
    %v6565 = vpop.f32.mrf.mxu0
    %v6566 = vadd.f32 %v6469, %v6565
    %v6567 = vpop.f32.mrf.mxu0
    %v6568 = vpop.f32.mrf.mxu0
    %v6569 = vadd.f32 %v6472, %v6568
    %v6570 = vpop.f32.mrf.mxu0
    %6571 = vmatprep.mubr.bf16.mxu0 %v4822
    %6572 = vmatmul.mubr.bf16.gmra.mxu0 %v4821
    %v6573 = vpop.f32.mrf.mxu0
    %v6574 = vadd.f32 %v6477, %v6573
    %v6575 = vpop.f32.mrf.mxu0
    %v6576 = vpop.f32.mrf.mxu0
    %v6577 = vadd.f32 %v6480, %v6576
    %v6578 = vpop.f32.mrf.mxu0
    %6579 = vdwg.mxu0
    %6580 = vmatprep.subr.bf16.mxu0 0
    %6581 = vmatpush1.bf16.msra.mxu0 %v6041
    %6582 = vmatprep.subr.bf16.mxu0 0
    %6583 = vmatpush1.bf16.msra.mxu0 %v6040
    %6584 = vmatprep.subr.bf16.mxu0 0
    %6585 = vmatpush1.bf16.msra.mxu0 %v6039
    %6586 = vmatprep.subr.bf16.mxu0 0
    %6587 = vmatpush1.bf16.msra.mxu0 %v6038
    %6588 = vmatprep.subr.bf16.mxu0 0
    %6589 = vmatpush1.bf16.msra.mxu0 %v6037
    %6590 = vmatprep.subr.bf16.mxu0 0
    %6591 = vmatpush1.bf16.msra.mxu0 %v6036
    %6592 = vmatprep.subr.bf16.mxu0 0
    %6593 = vmatpush1.bf16.msra.mxu0 %v6035
    %6594 = vmatprep.subr.bf16.mxu0 0
    %6595 = vmatpush1.bf16.msra.mxu0 %v6034
    %6596 = vmatprep.subr.bf16.mxu0 0
    %6597 = vmatpush2.bf16.msra.mxu0 %v6049
    %6598 = vmatprep.subr.bf16.mxu0 0
    %6599 = vmatpush2.bf16.msra.mxu0 %v6048
    %6600 = vmatprep.subr.bf16.mxu0 0
    %6601 = vmatpush2.bf16.msra.mxu0 %v6047
    %6602 = vmatprep.subr.bf16.mxu0 0
    %6603 = vmatpush2.bf16.msra.mxu0 %v6046
    %6604 = vmatprep.subr.bf16.mxu0 0
    %6605 = vmatpush2.bf16.msra.mxu0 %v6045
    %6606 = vmatprep.subr.bf16.mxu0 0
    %6607 = vmatpush2.bf16.msra.mxu0 %v6044
    %6608 = vmatprep.subr.bf16.mxu0 0
    %6609 = vmatpush2.bf16.msra.mxu0 %v6043
    %6610 = vmatprep.subr.bf16.mxu0 0
    %6611 = vmatpush2.bf16.msra.mxu0 %v6042
    %6612 = vmatprep.mubr.bf16.mxu0 %v4656
    %6613 = vmatmul.mubr.bf16.gmra.mxu0 %v4655
    %v6614 = vpop.f32.mrf.mxu0
    %v6615 = vadd.f32 %v6518, %v6614
    %v6616 = vpop.f32.mrf.mxu0
    %v6617 = vpop.f32.mrf.mxu0
    %v6618 = vadd.f32 %v6521, %v6617
    %v6619 = vpop.f32.mrf.mxu0
    %6620 = vmatprep.mubr.bf16.mxu0 %v4680
    %6621 = vmatmul.mubr.bf16.gmra.mxu0 %v4679
    %v6622 = vpop.f32.mrf.mxu0
    %v6623 = vadd.f32 %v6526, %v6622
    %v6624 = vpop.f32.mrf.mxu0
    %v6625 = vpop.f32.mrf.mxu0
    %v6626 = vadd.f32 %v6529, %v6625
    %v6627 = vpop.f32.mrf.mxu0
    %6628 = vmatprep.mubr.bf16.mxu0 %v4704
    %6629 = vmatmul.mubr.bf16.gmra.mxu0 %v4703
    %v6630 = vpop.f32.mrf.mxu0
    %v6631 = vadd.f32 %v6534, %v6630
    %v6632 = vpop.f32.mrf.mxu0
    %v6633 = vpop.f32.mrf.mxu0
    %v6634 = vadd.f32 %v6537, %v6633
    %v6635 = vpop.f32.mrf.mxu0
    %6636 = vmatprep.mubr.bf16.mxu0 %v4728
    %6637 = vmatmul.mubr.bf16.gmra.mxu0 %v4727
    %v6638 = vpop.f32.mrf.mxu0
    %v6639 = vadd.f32 %v6542, %v6638
    %v6640 = vpop.f32.mrf.mxu0
    %v6641 = vpop.f32.mrf.mxu0
    %v6642 = vadd.f32 %v6545, %v6641
    %v6643 = vpop.f32.mrf.mxu0
    %6644 = vmatprep.mubr.bf16.mxu0 %v4752
    %6645 = vmatmul.mubr.bf16.gmra.mxu0 %v4751
    %v6646 = vpop.f32.mrf.mxu0
    %v6647 = vadd.f32 %v6550, %v6646
    %v6648 = vpop.f32.mrf.mxu0
    %v6649 = vpop.f32.mrf.mxu0
    %v6650 = vadd.f32 %v6553, %v6649
    %v6651 = vpop.f32.mrf.mxu0
    %6652 = vmatprep.mubr.bf16.mxu0 %v4776
    %6653 = vmatmul.mubr.bf16.gmra.mxu0 %v4775
    %v6654 = vpop.f32.mrf.mxu0
    %v6655 = vadd.f32 %v6558, %v6654
    %v6656 = vpop.f32.mrf.mxu0
    %v6657 = vpop.f32.mrf.mxu0
    %v6658 = vadd.f32 %v6561, %v6657
    %v6659 = vpop.f32.mrf.mxu0
    %6660 = vmatprep.mubr.bf16.mxu0 %v4800
    %6661 = vmatmul.mubr.bf16.gmra.mxu0 %v4799
    %v6662 = vpop.f32.mrf.mxu0
    %v6663 = vadd.f32 %v6566, %v6662
    %v6664 = vpop.f32.mrf.mxu0
    %v6665 = vpop.f32.mrf.mxu0
    %v6666 = vadd.f32 %v6569, %v6665
    %v6667 = vpop.f32.mrf.mxu0
    %6668 = vmatprep.mubr.bf16.mxu0 %v4824
    %6669 = vmatmul.mubr.bf16.gmra.mxu0 %v4823
    %v6670 = vpop.f32.mrf.mxu0
    %v6671 = vadd.f32 %v6574, %v6670
    %v6672 = vpop.f32.mrf.mxu0
    %v6673 = vpop.f32.mrf.mxu0
    %v6674 = vadd.f32 %v6577, %v6673
    %v6675 = vpop.f32.mrf.mxu0
    %6676 = vdwg.mxu0
    %6677 = vmatprep.subr.bf16.mxu0 0
    %6678 = vmatpush1.bf16.msra.mxu0 %v6057
    %6679 = vmatprep.subr.bf16.mxu0 0
    %6680 = vmatpush1.bf16.msra.mxu0 %v6056
    %6681 = vmatprep.subr.bf16.mxu0 0
    %6682 = vmatpush1.bf16.msra.mxu0 %v6055
    %6683 = vmatprep.subr.bf16.mxu0 0
    %6684 = vmatpush1.bf16.msra.mxu0 %v6054
    %6685 = vmatprep.subr.bf16.mxu0 0
    %6686 = vmatpush1.bf16.msra.mxu0 %v6053
    %6687 = vmatprep.subr.bf16.mxu0 0
    %6688 = vmatpush1.bf16.msra.mxu0 %v6052
    %6689 = vmatprep.subr.bf16.mxu0 0
    %6690 = vmatpush1.bf16.msra.mxu0 %v6051
    %6691 = vmatprep.subr.bf16.mxu0 0
    %6692 = vmatpush1.bf16.msra.mxu0 %v6050
    %6693 = vmatprep.subr.bf16.mxu0 0
    %6694 = vmatpush2.bf16.msra.mxu0 %v6065
    %6695 = vmatprep.subr.bf16.mxu0 0
    %6696 = vmatpush2.bf16.msra.mxu0 %v6064
    %6697 = vmatprep.subr.bf16.mxu0 0
    %6698 = vmatpush2.bf16.msra.mxu0 %v6063
    %6699 = vmatprep.subr.bf16.mxu0 0
    %6700 = vmatpush2.bf16.msra.mxu0 %v6062
    %6701 = vmatprep.subr.bf16.mxu0 0
    %6702 = vmatpush2.bf16.msra.mxu0 %v6061
    %6703 = vmatprep.subr.bf16.mxu0 0
    %6704 = vmatpush2.bf16.msra.mxu0 %v6060
    %6705 = vmatprep.subr.bf16.mxu0 0
    %6706 = vmatpush2.bf16.msra.mxu0 %v6059
    %6707 = vmatprep.subr.bf16.mxu0 0
    %6708 = vmatpush2.bf16.msra.mxu0 %v6058
    %6709 = vmatprep.mubr.bf16.mxu0 %v4658
    %6710 = vmatmul.mubr.bf16.gmra.mxu0 %v4657
    %v6711 = vpop.f32.mrf.mxu0
    %v6712 = vadd.f32 %v6615, %v6711
    %v6713 = vpop.f32.mrf.mxu0
    %v6714 = vpop.f32.mrf.mxu0
    %v6715 = vadd.f32 %v6618, %v6714
    %v6716 = vpop.f32.mrf.mxu0
    %6717 = vmatprep.mubr.bf16.mxu0 %v4682
    %6718 = vmatmul.mubr.bf16.gmra.mxu0 %v4681
    %v6719 = vpop.f32.mrf.mxu0
    %v6720 = vadd.f32 %v6623, %v6719
    %v6721 = vpop.f32.mrf.mxu0
    %v6722 = vpop.f32.mrf.mxu0
    %v6723 = vadd.f32 %v6626, %v6722
    %v6724 = vpop.f32.mrf.mxu0
    %6725 = vmatprep.mubr.bf16.mxu0 %v4706
    %6726 = vmatmul.mubr.bf16.gmra.mxu0 %v4705
    %v6727 = vpop.f32.mrf.mxu0
    %v6728 = vadd.f32 %v6631, %v6727
    %v6729 = vpop.f32.mrf.mxu0
    %v6730 = vpop.f32.mrf.mxu0
    %v6731 = vadd.f32 %v6634, %v6730
    %v6732 = vpop.f32.mrf.mxu0
    %6733 = vmatprep.mubr.bf16.mxu0 %v4730
    %6734 = vmatmul.mubr.bf16.gmra.mxu0 %v4729
    %v6735 = vpop.f32.mrf.mxu0
    %v6736 = vadd.f32 %v6639, %v6735
    %v6737 = vpop.f32.mrf.mxu0
    %v6738 = vpop.f32.mrf.mxu0
    %v6739 = vadd.f32 %v6642, %v6738
    %v6740 = vpop.f32.mrf.mxu0
    %6741 = vmatprep.mubr.bf16.mxu0 %v4754
    %6742 = vmatmul.mubr.bf16.gmra.mxu0 %v4753
    %v6743 = vpop.f32.mrf.mxu0
    %v6744 = vadd.f32 %v6647, %v6743
    %v6745 = vpop.f32.mrf.mxu0
    %v6746 = vpop.f32.mrf.mxu0
    %v6747 = vadd.f32 %v6650, %v6746
    %v6748 = vpop.f32.mrf.mxu0
    %6749 = vmatprep.mubr.bf16.mxu0 %v4778
    %6750 = vmatmul.mubr.bf16.gmra.mxu0 %v4777
    %v6751 = vpop.f32.mrf.mxu0
    %v6752 = vadd.f32 %v6655, %v6751
    %v6753 = vpop.f32.mrf.mxu0
    %v6754 = vpop.f32.mrf.mxu0
    %v6755 = vadd.f32 %v6658, %v6754
    %v6756 = vpop.f32.mrf.mxu0
    %6757 = vmatprep.mubr.bf16.mxu0 %v4802
    %6758 = vmatmul.mubr.bf16.gmra.mxu0 %v4801
    %v6759 = vpop.f32.mrf.mxu0
    %v6760 = vadd.f32 %v6663, %v6759
    %v6761 = vpop.f32.mrf.mxu0
    %v6762 = vpop.f32.mrf.mxu0
    %v6763 = vadd.f32 %v6666, %v6762
    %v6764 = vpop.f32.mrf.mxu0
    %6765 = vmatprep.mubr.bf16.mxu0 %v4826
    %6766 = vmatmul.mubr.bf16.gmra.mxu0 %v4825
    %v6767 = vpop.f32.mrf.mxu0
    %v6768 = vadd.f32 %v6671, %v6767
    %v6769 = vpop.f32.mrf.mxu0
    %v6770 = vpop.f32.mrf.mxu0
    %v6771 = vadd.f32 %v6674, %v6770
    %v6772 = vpop.f32.mrf.mxu0
    %6773 = vdwg.mxu0
    %6774 = vmatprep.subr.bf16.mxu0 0
    %6775 = vmatpush1.bf16.msra.mxu0 %v6073
    %6776 = vmatprep.subr.bf16.mxu0 0
    %6777 = vmatpush1.bf16.msra.mxu0 %v6072
    %6778 = vmatprep.subr.bf16.mxu0 0
    %6779 = vmatpush1.bf16.msra.mxu0 %v6071
    %6780 = vmatprep.subr.bf16.mxu0 0
    %6781 = vmatpush1.bf16.msra.mxu0 %v6070
    %6782 = vmatprep.subr.bf16.mxu0 0
    %6783 = vmatpush1.bf16.msra.mxu0 %v6069
    %6784 = vmatprep.subr.bf16.mxu0 0
    %6785 = vmatpush1.bf16.msra.mxu0 %v6068
    %6786 = vmatprep.subr.bf16.mxu0 0
    %6787 = vmatpush1.bf16.msra.mxu0 %v6067
    %6788 = vmatprep.subr.bf16.mxu0 0
    %6789 = vmatpush1.bf16.msra.mxu0 %v6066
    %6790 = vmatprep.subr.bf16.mxu0 0
    %6791 = vmatpush2.bf16.msra.mxu0 %v6081
    %6792 = vmatprep.subr.bf16.mxu0 0
    %6793 = vmatpush2.bf16.msra.mxu0 %v6080
    %6794 = vmatprep.subr.bf16.mxu0 0
    %6795 = vmatpush2.bf16.msra.mxu0 %v6079
    %6796 = vmatprep.subr.bf16.mxu0 0
    %6797 = vmatpush2.bf16.msra.mxu0 %v6078
    %6798 = vmatprep.subr.bf16.mxu0 0
    %6799 = vmatpush2.bf16.msra.mxu0 %v6077
    %6800 = vmatprep.subr.bf16.mxu0 0
    %6801 = vmatpush2.bf16.msra.mxu0 %v6076
    %6802 = vmatprep.subr.bf16.mxu0 0
    %6803 = vmatpush2.bf16.msra.mxu0 %v6075
    %6804 = vmatprep.subr.bf16.mxu0 0
    %6805 = vmatpush2.bf16.msra.mxu0 %v6074
    %6806 = vmatprep.mubr.bf16.mxu0 %v4660
    %6807 = vmatmul.mubr.bf16.gmra.mxu0 %v4659
    %v6808 = vpop.f32.mrf.mxu0
    %v6809 = vadd.f32 %v6712, %v6808
    %v6810 = vpop.f32.mrf.mxu0
    %v6811 = vpop.f32.mrf.mxu0
    %v6812 = vadd.f32 %v6715, %v6811
    %v6813 = vpop.f32.mrf.mxu0
    %6814 = vmatprep.mubr.bf16.mxu0 %v4684
    %6815 = vmatmul.mubr.bf16.gmra.mxu0 %v4683
    %v6816 = vpop.f32.mrf.mxu0
    %v6817 = vadd.f32 %v6720, %v6816
    %v6818 = vpop.f32.mrf.mxu0
    %v6819 = vpop.f32.mrf.mxu0
    %v6820 = vadd.f32 %v6723, %v6819
    %v6821 = vpop.f32.mrf.mxu0
    %6822 = vmatprep.mubr.bf16.mxu0 %v4708
    %6823 = vmatmul.mubr.bf16.gmra.mxu0 %v4707
    %v6824 = vpop.f32.mrf.mxu0
    %v6825 = vadd.f32 %v6728, %v6824
    %v6826 = vpop.f32.mrf.mxu0
    %v6827 = vpop.f32.mrf.mxu0
    %v6828 = vadd.f32 %v6731, %v6827
    %v6829 = vpop.f32.mrf.mxu0
    %6830 = vmatprep.mubr.bf16.mxu0 %v4732
    %6831 = vmatmul.mubr.bf16.gmra.mxu0 %v4731
    %v6832 = vpop.f32.mrf.mxu0
    %v6833 = vadd.f32 %v6736, %v6832
    %v6834 = vpop.f32.mrf.mxu0
    %v6835 = vpop.f32.mrf.mxu0
    %v6836 = vadd.f32 %v6739, %v6835
    %v6837 = vpop.f32.mrf.mxu0
    %6838 = vmatprep.mubr.bf16.mxu0 %v4756
    %6839 = vmatmul.mubr.bf16.gmra.mxu0 %v4755
    %v6840 = vpop.f32.mrf.mxu0
    %v6841 = vadd.f32 %v6744, %v6840
    %v6842 = vpop.f32.mrf.mxu0
    %v6843 = vpop.f32.mrf.mxu0
    %v6844 = vadd.f32 %v6747, %v6843
    %v6845 = vpop.f32.mrf.mxu0
    %6846 = vmatprep.mubr.bf16.mxu0 %v4780
    %6847 = vmatmul.mubr.bf16.gmra.mxu0 %v4779
    %v6848 = vpop.f32.mrf.mxu0
    %v6849 = vadd.f32 %v6752, %v6848
    %v6850 = vpop.f32.mrf.mxu0
    %v6851 = vpop.f32.mrf.mxu0
    %v6852 = vadd.f32 %v6755, %v6851
    %v6853 = vpop.f32.mrf.mxu0
    %6854 = vmatprep.mubr.bf16.mxu0 %v4804
    %6855 = vmatmul.mubr.bf16.gmra.mxu0 %v4803
    %v6856 = vpop.f32.mrf.mxu0
    %v6857 = vadd.f32 %v6760, %v6856
    %v6858 = vpop.f32.mrf.mxu0
    %v6859 = vpop.f32.mrf.mxu0
    %v6860 = vadd.f32 %v6763, %v6859
    %v6861 = vpop.f32.mrf.mxu0
    %6862 = vmatprep.mubr.bf16.mxu0 %v4828
    %6863 = vmatmul.mubr.bf16.gmra.mxu0 %v4827
    %v6864 = vpop.f32.mrf.mxu0
    %v6865 = vadd.f32 %v6768, %v6864
    %v6866 = vpop.f32.mrf.mxu0
    %v6867 = vpop.f32.mrf.mxu0
    %v6868 = vadd.f32 %v6771, %v6867
    %v6869 = vpop.f32.mrf.mxu0
    %6870 = vdwg.mxu0
    %6871 = vmatprep.subr.bf16.mxu0 0
    %6872 = vmatpush1.bf16.msra.mxu0 %v6089
    %6873 = vmatprep.subr.bf16.mxu0 0
    %6874 = vmatpush1.bf16.msra.mxu0 %v6088
    %6875 = vmatprep.subr.bf16.mxu0 0
    %6876 = vmatpush1.bf16.msra.mxu0 %v6087
    %6877 = vmatprep.subr.bf16.mxu0 0
    %6878 = vmatpush1.bf16.msra.mxu0 %v6086
    %6879 = vmatprep.subr.bf16.mxu0 0
    %6880 = vmatpush1.bf16.msra.mxu0 %v6085
    %6881 = vmatprep.subr.bf16.mxu0 0
    %6882 = vmatpush1.bf16.msra.mxu0 %v6084
    %6883 = vmatprep.subr.bf16.mxu0 0
    %6884 = vmatpush1.bf16.msra.mxu0 %v6083
    %6885 = vmatprep.subr.bf16.mxu0 0
    %6886 = vmatpush1.bf16.msra.mxu0 %v6082
    %6887 = vmatprep.subr.bf16.mxu0 0
    %6888 = vmatpush2.bf16.msra.mxu0 %v6097
    %6889 = vmatprep.subr.bf16.mxu0 0
    %6890 = vmatpush2.bf16.msra.mxu0 %v6096
    %6891 = vmatprep.subr.bf16.mxu0 0
    %6892 = vmatpush2.bf16.msra.mxu0 %v6095
    %6893 = vmatprep.subr.bf16.mxu0 0
    %6894 = vmatpush2.bf16.msra.mxu0 %v6094
    %6895 = vmatprep.subr.bf16.mxu0 0
    %6896 = vmatpush2.bf16.msra.mxu0 %v6093
    %6897 = vmatprep.subr.bf16.mxu0 0
    %6898 = vmatpush2.bf16.msra.mxu0 %v6092
    %6899 = vmatprep.subr.bf16.mxu0 0
    %6900 = vmatpush2.bf16.msra.mxu0 %v6091
    %6901 = vmatprep.subr.bf16.mxu0 0
    %6902 = vmatpush2.bf16.msra.mxu0 %v6090
    %6903 = vmatprep.mubr.bf16.mxu0 %v4662
    %6904 = vmatmul.mubr.bf16.gmra.mxu0 %v4661
    %v6905 = vpop.f32.mrf.mxu0
    %v6906 = vadd.f32 %v6809, %v6905
    %v6907 = vpop.f32.mrf.mxu0
    %v6908 = vpop.f32.mrf.mxu0
    %v6909 = vadd.f32 %v6812, %v6908
    %v6910 = vpop.f32.mrf.mxu0
    %6911 = vmatprep.mubr.bf16.mxu0 %v4686
    %6912 = vmatmul.mubr.bf16.gmra.mxu0 %v4685
    %v6913 = vpop.f32.mrf.mxu0
    %v6914 = vadd.f32 %v6817, %v6913
    %v6915 = vpop.f32.mrf.mxu0
    %v6916 = vpop.f32.mrf.mxu0
    %v6917 = vadd.f32 %v6820, %v6916
    %v6918 = vpop.f32.mrf.mxu0
    %6919 = vmatprep.mubr.bf16.mxu0 %v4710
    %6920 = vmatmul.mubr.bf16.gmra.mxu0 %v4709
    %v6921 = vpop.f32.mrf.mxu0
    %v6922 = vadd.f32 %v6825, %v6921
    %v6923 = vpop.f32.mrf.mxu0
    %v6924 = vpop.f32.mrf.mxu0
    %v6925 = vadd.f32 %v6828, %v6924
    %v6926 = vpop.f32.mrf.mxu0
    %6927 = vmatprep.mubr.bf16.mxu0 %v4734
    %6928 = vmatmul.mubr.bf16.gmra.mxu0 %v4733
    %v6929 = vpop.f32.mrf.mxu0
    %v6930 = vadd.f32 %v6833, %v6929
    %v6931 = vpop.f32.mrf.mxu0
    %v6932 = vpop.f32.mrf.mxu0
    %v6933 = vadd.f32 %v6836, %v6932
    %v6934 = vpop.f32.mrf.mxu0
    %6935 = vmatprep.mubr.bf16.mxu0 %v4758
    %6936 = vmatmul.mubr.bf16.gmra.mxu0 %v4757
    %v6937 = vpop.f32.mrf.mxu0
    %v6938 = vadd.f32 %v6841, %v6937
    %v6939 = vpop.f32.mrf.mxu0
    %v6940 = vpop.f32.mrf.mxu0
    %v6941 = vadd.f32 %v6844, %v6940
    %v6942 = vpop.f32.mrf.mxu0
    %6943 = vmatprep.mubr.bf16.mxu0 %v4782
    %6944 = vmatmul.mubr.bf16.gmra.mxu0 %v4781
    %v6945 = vpop.f32.mrf.mxu0
    %v6946 = vadd.f32 %v6849, %v6945
    %v6947 = vpop.f32.mrf.mxu0
    %v6948 = vpop.f32.mrf.mxu0
    %v6949 = vadd.f32 %v6852, %v6948
    %v6950 = vpop.f32.mrf.mxu0
    %6951 = vmatprep.mubr.bf16.mxu0 %v4806
    %6952 = vmatmul.mubr.bf16.gmra.mxu0 %v4805
    %v6953 = vpop.f32.mrf.mxu0
    %v6954 = vadd.f32 %v6857, %v6953
    %v6955 = vpop.f32.mrf.mxu0
    %v6956 = vpop.f32.mrf.mxu0
    %v6957 = vadd.f32 %v6860, %v6956
    %v6958 = vpop.f32.mrf.mxu0
    %6959 = vmatprep.mubr.bf16.mxu0 %v4830
    %6960 = vmatmul.mubr.bf16.gmra.mxu0 %v4829
    %v6961 = vpop.f32.mrf.mxu0
    %v6962 = vadd.f32 %v6865, %v6961
    %v6963 = vpop.f32.mrf.mxu0
    %v6964 = vpop.f32.mrf.mxu0
    %v6965 = vadd.f32 %v6868, %v6964
    %v6966 = vpop.f32.mrf.mxu0
    %6967 = vdwg.mxu0
    %6968 = vmatprep.subr.bf16.mxu0 0
    %6969 = vmatpush1.bf16.msra.mxu0 %v6105
    %6970 = vmatprep.subr.bf16.mxu0 0
    %6971 = vmatpush1.bf16.msra.mxu0 %v6104
    %6972 = vmatprep.subr.bf16.mxu0 0
    %6973 = vmatpush1.bf16.msra.mxu0 %v6103
    %6974 = vmatprep.subr.bf16.mxu0 0
    %6975 = vmatpush1.bf16.msra.mxu0 %v6102
    %6976 = vmatprep.subr.bf16.mxu0 0
    %6977 = vmatpush1.bf16.msra.mxu0 %v6101
    %6978 = vmatprep.subr.bf16.mxu0 0
    %6979 = vmatpush1.bf16.msra.mxu0 %v6100
    %6980 = vmatprep.subr.bf16.mxu0 0
    %6981 = vmatpush1.bf16.msra.mxu0 %v6099
    %6982 = vmatprep.subr.bf16.mxu0 0
    %6983 = vmatpush1.bf16.msra.mxu0 %v6098
    %6984 = vmatprep.subr.bf16.mxu0 0
    %6985 = vmatpush2.bf16.msra.mxu0 %v6113
    %6986 = vmatprep.subr.bf16.mxu0 0
    %6987 = vmatpush2.bf16.msra.mxu0 %v6112
    %6988 = vmatprep.subr.bf16.mxu0 0
    %6989 = vmatpush2.bf16.msra.mxu0 %v6111
    %6990 = vmatprep.subr.bf16.mxu0 0
    %6991 = vmatpush2.bf16.msra.mxu0 %v6110
    %6992 = vmatprep.subr.bf16.mxu0 0
    %6993 = vmatpush2.bf16.msra.mxu0 %v6109
    %6994 = vmatprep.subr.bf16.mxu0 0
    %6995 = vmatpush2.bf16.msra.mxu0 %v6108
    %6996 = vmatprep.subr.bf16.mxu0 0
    %6997 = vmatpush2.bf16.msra.mxu0 %v6107
    %6998 = vmatprep.subr.bf16.mxu0 0
    %6999 = vmatpush2.bf16.msra.mxu0 %v6106
    %7000 = vmatprep.mubr.bf16.mxu0 %v4664
    %7001 = vmatmul.mubr.bf16.gmra.mxu0 %v4663
    %v7002 = vpop.f32.mrf.mxu0
    %v7003 = vadd.f32 %v6906, %v7002
    %v7004 = vpop.f32.mrf.mxu0
    %v7005 = vpop.f32.mrf.mxu0
    %v7006 = vadd.f32 %v6909, %v7005
    %v7007 = vpop.f32.mrf.mxu0
    %7008 = vmatprep.mubr.bf16.mxu0 %v4688
    %7009 = vmatmul.mubr.bf16.gmra.mxu0 %v4687
    %v7010 = vpop.f32.mrf.mxu0
    %v7011 = vadd.f32 %v6914, %v7010
    %v7012 = vpop.f32.mrf.mxu0
    %v7013 = vpop.f32.mrf.mxu0
    %v7014 = vadd.f32 %v6917, %v7013
    %v7015 = vpop.f32.mrf.mxu0
    %7016 = vmatprep.mubr.bf16.mxu0 %v4712
    %7017 = vmatmul.mubr.bf16.gmra.mxu0 %v4711
    %v7018 = vpop.f32.mrf.mxu0
    %v7019 = vadd.f32 %v6922, %v7018
    %v7020 = vpop.f32.mrf.mxu0
    %v7021 = vpop.f32.mrf.mxu0
    %v7022 = vadd.f32 %v6925, %v7021
    %v7023 = vpop.f32.mrf.mxu0
    %7024 = vmatprep.mubr.bf16.mxu0 %v4736
    %7025 = vmatmul.mubr.bf16.gmra.mxu0 %v4735
    %v7026 = vpop.f32.mrf.mxu0
    %v7027 = vadd.f32 %v6930, %v7026
    %v7028 = vpop.f32.mrf.mxu0
    %v7029 = vpop.f32.mrf.mxu0
    %v7030 = vadd.f32 %v6933, %v7029
    %v7031 = vpop.f32.mrf.mxu0
    %7032 = vmatprep.mubr.bf16.mxu0 %v4760
    %7033 = vmatmul.mubr.bf16.gmra.mxu0 %v4759
    %v7034 = vpop.f32.mrf.mxu0
    %v7035 = vadd.f32 %v6938, %v7034
    %v7036 = vpop.f32.mrf.mxu0
    %v7037 = vpop.f32.mrf.mxu0
    %v7038 = vadd.f32 %v6941, %v7037
    %v7039 = vpop.f32.mrf.mxu0
    %7040 = vmatprep.mubr.bf16.mxu0 %v4784
    %7041 = vmatmul.mubr.bf16.gmra.mxu0 %v4783
    %v7042 = vpop.f32.mrf.mxu0
    %v7043 = vadd.f32 %v6946, %v7042
    %v7044 = vpop.f32.mrf.mxu0
    %v7045 = vpop.f32.mrf.mxu0
    %v7046 = vadd.f32 %v6949, %v7045
    %v7047 = vpop.f32.mrf.mxu0
    %7048 = vmatprep.mubr.bf16.mxu0 %v4808
    %7049 = vmatmul.mubr.bf16.gmra.mxu0 %v4807
    %v7050 = vpop.f32.mrf.mxu0
    %v7051 = vadd.f32 %v6954, %v7050
    %v7052 = vpop.f32.mrf.mxu0
    %v7053 = vpop.f32.mrf.mxu0
    %v7054 = vadd.f32 %v6957, %v7053
    %v7055 = vpop.f32.mrf.mxu0
    %7056 = vmatprep.mubr.bf16.mxu0 %v4832
    %7057 = vmatmul.mubr.bf16.gmra.mxu0 %v4831
    %v7058 = vpop.f32.mrf.mxu0
    %v7059 = vadd.f32 %v6962, %v7058
    %v7060 = vpop.f32.mrf.mxu0
    %v7061 = vpop.f32.mrf.mxu0
    %v7062 = vadd.f32 %v6965, %v7061
    %v7063 = vpop.f32.mrf.mxu0
    %7064 = vdwg.mxu0
    %7065 = vmatprep.subr.bf16.mxu0 0
    %7066 = vmatpush1.bf16.msra.mxu0 %v6121
    %7067 = vmatprep.subr.bf16.mxu0 0
    %7068 = vmatpush1.bf16.msra.mxu0 %v6120
    %7069 = vmatprep.subr.bf16.mxu0 0
    %7070 = vmatpush1.bf16.msra.mxu0 %v6119
    %7071 = vmatprep.subr.bf16.mxu0 0
    %7072 = vmatpush1.bf16.msra.mxu0 %v6118
    %7073 = vmatprep.subr.bf16.mxu0 0
    %7074 = vmatpush1.bf16.msra.mxu0 %v6117
    %7075 = vmatprep.subr.bf16.mxu0 0
    %7076 = vmatpush1.bf16.msra.mxu0 %v6116
    %7077 = vmatprep.subr.bf16.mxu0 0
    %7078 = vmatpush1.bf16.msra.mxu0 %v6115
    %7079 = vmatprep.subr.bf16.mxu0 0
    %7080 = vmatpush1.bf16.msra.mxu0 %v6114
    %7081 = vmatprep.subr.bf16.mxu0 0
    %7082 = vmatpush2.bf16.msra.mxu0 %v6129
    %7083 = vmatprep.subr.bf16.mxu0 0
    %7084 = vmatpush2.bf16.msra.mxu0 %v6128
    %7085 = vmatprep.subr.bf16.mxu0 0
    %7086 = vmatpush2.bf16.msra.mxu0 %v6127
    %7087 = vmatprep.subr.bf16.mxu0 0
    %7088 = vmatpush2.bf16.msra.mxu0 %v6126
    %7089 = vmatprep.subr.bf16.mxu0 0
    %7090 = vmatpush2.bf16.msra.mxu0 %v6125
    %7091 = vmatprep.subr.bf16.mxu0 0
    %7092 = vmatpush2.bf16.msra.mxu0 %v6124
    %7093 = vmatprep.subr.bf16.mxu0 0
    %7094 = vmatpush2.bf16.msra.mxu0 %v6123
    %7095 = vmatprep.subr.bf16.mxu0 0
    %7096 = vmatpush2.bf16.msra.mxu0 %v6122
    %7097 = vmatprep.mubr.bf16.mxu0 %v4666
    %7098 = vmatmul.mubr.bf16.gmra.mxu0 %v4665
    %v7099 = vpop.f32.mrf.mxu0
    %v7100 = vadd.f32 %v7003, %v7099
    %v7101 = vpop.f32.mrf.mxu0
    %v7102 = vpop.f32.mrf.mxu0
    %v7103 = vadd.f32 %v7006, %v7102
    %v7104 = vpop.f32.mrf.mxu0
    %7105 = vmatprep.mubr.bf16.mxu0 %v4690
    %7106 = vmatmul.mubr.bf16.gmra.mxu0 %v4689
    %v7107 = vpop.f32.mrf.mxu0
    %v7108 = vadd.f32 %v7011, %v7107
    %v7109 = vpop.f32.mrf.mxu0
    %v7110 = vpop.f32.mrf.mxu0
    %v7111 = vadd.f32 %v7014, %v7110
    %v7112 = vpop.f32.mrf.mxu0
    %7113 = vmatprep.mubr.bf16.mxu0 %v4714
    %7114 = vmatmul.mubr.bf16.gmra.mxu0 %v4713
    %v7115 = vpop.f32.mrf.mxu0
    %v7116 = vadd.f32 %v7019, %v7115
    %v7117 = vpop.f32.mrf.mxu0
    %v7118 = vpop.f32.mrf.mxu0
    %v7119 = vadd.f32 %v7022, %v7118
    %v7120 = vpop.f32.mrf.mxu0
    %7121 = vmatprep.mubr.bf16.mxu0 %v4738
    %7122 = vmatmul.mubr.bf16.gmra.mxu0 %v4737
    %v7123 = vpop.f32.mrf.mxu0
    %v7124 = vadd.f32 %v7027, %v7123
    %v7125 = vpop.f32.mrf.mxu0
    %v7126 = vpop.f32.mrf.mxu0
    %v7127 = vadd.f32 %v7030, %v7126
    %v7128 = vpop.f32.mrf.mxu0
    %7129 = vmatprep.mubr.bf16.mxu0 %v4762
    %7130 = vmatmul.mubr.bf16.gmra.mxu0 %v4761
    %v7131 = vpop.f32.mrf.mxu0
    %v7132 = vadd.f32 %v7035, %v7131
    %v7133 = vpop.f32.mrf.mxu0
    %v7134 = vpop.f32.mrf.mxu0
    %v7135 = vadd.f32 %v7038, %v7134
    %v7136 = vpop.f32.mrf.mxu0
    %7137 = vmatprep.mubr.bf16.mxu0 %v4786
    %7138 = vmatmul.mubr.bf16.gmra.mxu0 %v4785
    %v7139 = vpop.f32.mrf.mxu0
    %v7140 = vadd.f32 %v7043, %v7139
    %v7141 = vpop.f32.mrf.mxu0
    %v7142 = vpop.f32.mrf.mxu0
    %v7143 = vadd.f32 %v7046, %v7142
    %v7144 = vpop.f32.mrf.mxu0
    %7145 = vmatprep.mubr.bf16.mxu0 %v4810
    %7146 = vmatmul.mubr.bf16.gmra.mxu0 %v4809
    %v7147 = vpop.f32.mrf.mxu0
    %v7148 = vadd.f32 %v7051, %v7147
    %v7149 = vpop.f32.mrf.mxu0
    %v7150 = vpop.f32.mrf.mxu0
    %v7151 = vadd.f32 %v7054, %v7150
    %v7152 = vpop.f32.mrf.mxu0
    %7153 = vmatprep.mubr.bf16.mxu0 %v4834
    %7154 = vmatmul.mubr.bf16.gmra.mxu0 %v4833
    %v7155 = vpop.f32.mrf.mxu0
    %v7156 = vadd.f32 %v7059, %v7155
    %v7157 = vpop.f32.mrf.mxu0
    %v7158 = vpop.f32.mrf.mxu0
    %v7159 = vadd.f32 %v7062, %v7158
    %v7160 = vpop.f32.mrf.mxu0
    %7161 = vdwg.mxu0
    %7162 = vmatprep.subr.bf16.mxu0 0
    %7163 = vmatpush1.bf16.msra.mxu0 %v6137
    %7164 = vmatprep.subr.bf16.mxu0 0
    %7165 = vmatpush1.bf16.msra.mxu0 %v6136
    %7166 = vmatprep.subr.bf16.mxu0 0
    %7167 = vmatpush1.bf16.msra.mxu0 %v6135
    %7168 = vmatprep.subr.bf16.mxu0 0
    %7169 = vmatpush1.bf16.msra.mxu0 %v6134
    %7170 = vmatprep.subr.bf16.mxu0 0
    %7171 = vmatpush1.bf16.msra.mxu0 %v6133
    %7172 = vmatprep.subr.bf16.mxu0 0
    %7173 = vmatpush1.bf16.msra.mxu0 %v6132
    %7174 = vmatprep.subr.bf16.mxu0 0
    %7175 = vmatpush1.bf16.msra.mxu0 %v6131
    %7176 = vmatprep.subr.bf16.mxu0 0
    %7177 = vmatpush1.bf16.msra.mxu0 %v6130
    %7178 = vmatprep.subr.bf16.mxu0 0
    %7179 = vmatpush2.bf16.msra.mxu0 %v6145
    %7180 = vmatprep.subr.bf16.mxu0 0
    %7181 = vmatpush2.bf16.msra.mxu0 %v6144
    %7182 = vmatprep.subr.bf16.mxu0 0
    %7183 = vmatpush2.bf16.msra.mxu0 %v6143
    %7184 = vmatprep.subr.bf16.mxu0 0
    %7185 = vmatpush2.bf16.msra.mxu0 %v6142
    %7186 = vmatprep.subr.bf16.mxu0 0
    %7187 = vmatpush2.bf16.msra.mxu0 %v6141
    %7188 = vmatprep.subr.bf16.mxu0 0
    %7189 = vmatpush2.bf16.msra.mxu0 %v6140
    %7190 = vmatprep.subr.bf16.mxu0 0
    %7191 = vmatpush2.bf16.msra.mxu0 %v6139
    %7192 = vmatprep.subr.bf16.mxu0 0
    %7193 = vmatpush2.bf16.msra.mxu0 %v6138
    %7194 = vmatprep.mubr.bf16.mxu0 %v4668
    %7195 = vmatmul.mubr.bf16.gmra.mxu0 %v4667
    %v7196 = vpop.f32.mrf.mxu0
    %v7197 = vadd.f32 %v7100, %v7196
    %v7198 = vpop.f32.mrf.mxu0
    %v7199 = vpop.f32.mrf.mxu0
    %v7200 = vadd.f32 %v7103, %v7199
    %v7201 = vpop.f32.mrf.mxu0
    %7202 = vmatprep.mubr.bf16.mxu0 %v4692
    %7203 = vmatmul.mubr.bf16.gmra.mxu0 %v4691
    %v7204 = vpop.f32.mrf.mxu0
    %v7205 = vadd.f32 %v7108, %v7204
    %v7206 = vpop.f32.mrf.mxu0
    %v7207 = vpop.f32.mrf.mxu0
    %v7208 = vadd.f32 %v7111, %v7207
    %v7209 = vpop.f32.mrf.mxu0
    %7210 = vmatprep.mubr.bf16.mxu0 %v4716
    %7211 = vmatmul.mubr.bf16.gmra.mxu0 %v4715
    %v7212 = vpop.f32.mrf.mxu0
    %v7213 = vadd.f32 %v7116, %v7212
    %v7214 = vpop.f32.mrf.mxu0
    %v7215 = vpop.f32.mrf.mxu0
    %v7216 = vadd.f32 %v7119, %v7215
    %v7217 = vpop.f32.mrf.mxu0
    %7218 = vmatprep.mubr.bf16.mxu0 %v4740
    %7219 = vmatmul.mubr.bf16.gmra.mxu0 %v4739
    %v7220 = vpop.f32.mrf.mxu0
    %v7221 = vadd.f32 %v7124, %v7220
    %v7222 = vpop.f32.mrf.mxu0
    %v7223 = vpop.f32.mrf.mxu0
    %v7224 = vadd.f32 %v7127, %v7223
    %v7225 = vpop.f32.mrf.mxu0
    %7226 = vmatprep.mubr.bf16.mxu0 %v4764
    %7227 = vmatmul.mubr.bf16.gmra.mxu0 %v4763
    %v7228 = vpop.f32.mrf.mxu0
    %v7229 = vadd.f32 %v7132, %v7228
    %v7230 = vpop.f32.mrf.mxu0
    %v7231 = vpop.f32.mrf.mxu0
    %v7232 = vadd.f32 %v7135, %v7231
    %v7233 = vpop.f32.mrf.mxu0
    %7234 = vmatprep.mubr.bf16.mxu0 %v4788
    %7235 = vmatmul.mubr.bf16.gmra.mxu0 %v4787
    %v7236 = vpop.f32.mrf.mxu0
    %v7237 = vadd.f32 %v7140, %v7236
    %v7238 = vpop.f32.mrf.mxu0
    %v7239 = vpop.f32.mrf.mxu0
    %v7240 = vadd.f32 %v7143, %v7239
    %v7241 = vpop.f32.mrf.mxu0
    %7242 = vmatprep.mubr.bf16.mxu0 %v4812
    %7243 = vmatmul.mubr.bf16.gmra.mxu0 %v4811
    %v7244 = vpop.f32.mrf.mxu0
    %v7245 = vadd.f32 %v7148, %v7244
    %v7246 = vpop.f32.mrf.mxu0
    %v7247 = vpop.f32.mrf.mxu0
    %v7248 = vadd.f32 %v7151, %v7247
    %v7249 = vpop.f32.mrf.mxu0
    %7250 = vmatprep.mubr.bf16.mxu0 %v4836
    %7251 = vmatmul.mubr.bf16.gmra.mxu0 %v4835
    %v7252 = vpop.f32.mrf.mxu0
    %v7253 = vadd.f32 %v7156, %v7252
    %v7254 = vpop.f32.mrf.mxu0
    %v7255 = vpop.f32.mrf.mxu0
    %v7256 = vadd.f32 %v7159, %v7255
    %v7257 = vpop.f32.mrf.mxu0
    %7258 = vdwg.mxu0
    %7259 = vmatprep.subr.bf16.mxu0 0
    %7260 = vmatpush1.bf16.msra.mxu0 %v6153
    %7261 = vmatprep.subr.bf16.mxu0 0
    %7262 = vmatpush1.bf16.msra.mxu0 %v6152
    %7263 = vmatprep.subr.bf16.mxu0 0
    %7264 = vmatpush1.bf16.msra.mxu0 %v6151
    %7265 = vmatprep.subr.bf16.mxu0 0
    %7266 = vmatpush1.bf16.msra.mxu0 %v6150
    %7267 = vmatprep.subr.bf16.mxu0 0
    %7268 = vmatpush1.bf16.msra.mxu0 %v6149
    %7269 = vmatprep.subr.bf16.mxu0 0
    %7270 = vmatpush1.bf16.msra.mxu0 %v6148
    %7271 = vmatprep.subr.bf16.mxu0 0
    %7272 = vmatpush1.bf16.msra.mxu0 %v6147
    %7273 = vmatprep.subr.bf16.mxu0 0
    %7274 = vmatpush1.bf16.msra.mxu0 %v6146
    %7275 = vmatprep.subr.bf16.mxu0 0
    %7276 = vmatpush2.bf16.msra.mxu0 %v6161
    %7277 = vmatprep.subr.bf16.mxu0 0
    %7278 = vmatpush2.bf16.msra.mxu0 %v6160
    %7279 = vmatprep.subr.bf16.mxu0 0
    %7280 = vmatpush2.bf16.msra.mxu0 %v6159
    %7281 = vmatprep.subr.bf16.mxu0 0
    %7282 = vmatpush2.bf16.msra.mxu0 %v6158
    %7283 = vmatprep.subr.bf16.mxu0 0
    %7284 = vmatpush2.bf16.msra.mxu0 %v6157
    %7285 = vmatprep.subr.bf16.mxu0 0
    %7286 = vmatpush2.bf16.msra.mxu0 %v6156
    %7287 = vmatprep.subr.bf16.mxu0 0
    %7288 = vmatpush2.bf16.msra.mxu0 %v6155
    %7289 = vmatprep.subr.bf16.mxu0 0
    %7290 = vmatpush2.bf16.msra.mxu0 %v6154
    %7291 = vmatprep.mubr.bf16.mxu0 %v4670
    %7292 = vmatmul.mubr.bf16.gmra.mxu0 %v4669
    %v7293 = vpop.f32.mrf.mxu0
    %v7294 = vadd.f32 %v7197, %v7293
    %v7295 = vpop.f32.mrf.mxu0
    %v7296 = vpop.f32.mrf.mxu0
    %v7297 = vadd.f32 %v7200, %v7296
    %v7298 = vpop.f32.mrf.mxu0
    %7299 = vmatprep.mubr.bf16.mxu0 %v4694
    %7300 = vmatmul.mubr.bf16.gmra.mxu0 %v4693
    %v7301 = vpop.f32.mrf.mxu0
    %v7302 = vadd.f32 %v7205, %v7301
    %v7303 = vpop.f32.mrf.mxu0
    %v7304 = vpop.f32.mrf.mxu0
    %v7305 = vadd.f32 %v7208, %v7304
    %v7306 = vpop.f32.mrf.mxu0
    %7307 = vmatprep.mubr.bf16.mxu0 %v4718
    %7308 = vmatmul.mubr.bf16.gmra.mxu0 %v4717
    %v7309 = vpop.f32.mrf.mxu0
    %v7310 = vadd.f32 %v7213, %v7309
    %v7311 = vpop.f32.mrf.mxu0
    %v7312 = vpop.f32.mrf.mxu0
    %v7313 = vadd.f32 %v7216, %v7312
    %v7314 = vpop.f32.mrf.mxu0
    %7315 = vmatprep.mubr.bf16.mxu0 %v4742
    %7316 = vmatmul.mubr.bf16.gmra.mxu0 %v4741
    %v7317 = vpop.f32.mrf.mxu0
    %v7318 = vadd.f32 %v7221, %v7317
    %v7319 = vpop.f32.mrf.mxu0
    %v7320 = vpop.f32.mrf.mxu0
    %v7321 = vadd.f32 %v7224, %v7320
    %v7322 = vpop.f32.mrf.mxu0
    %7323 = vmatprep.mubr.bf16.mxu0 %v4766
    %7324 = vmatmul.mubr.bf16.gmra.mxu0 %v4765
    %v7325 = vpop.f32.mrf.mxu0
    %v7326 = vadd.f32 %v7229, %v7325
    %v7327 = vpop.f32.mrf.mxu0
    %v7328 = vpop.f32.mrf.mxu0
    %v7329 = vadd.f32 %v7232, %v7328
    %v7330 = vpop.f32.mrf.mxu0
    %7331 = vmatprep.mubr.bf16.mxu0 %v4790
    %7332 = vmatmul.mubr.bf16.gmra.mxu0 %v4789
    %v7333 = vpop.f32.mrf.mxu0
    %v7334 = vadd.f32 %v7237, %v7333
    %v7335 = vpop.f32.mrf.mxu0
    %v7336 = vpop.f32.mrf.mxu0
    %v7337 = vadd.f32 %v7240, %v7336
    %v7338 = vpop.f32.mrf.mxu0
    %7339 = vmatprep.mubr.bf16.mxu0 %v4814
    %7340 = vmatmul.mubr.bf16.gmra.mxu0 %v4813
    %v7341 = vpop.f32.mrf.mxu0
    %v7342 = vadd.f32 %v7245, %v7341
    %v7343 = vpop.f32.mrf.mxu0
    %v7344 = vpop.f32.mrf.mxu0
    %v7345 = vadd.f32 %v7248, %v7344
    %v7346 = vpop.f32.mrf.mxu0
    %7347 = vmatprep.mubr.bf16.mxu0 %v4838
    %7348 = vmatmul.mubr.bf16.gmra.mxu0 %v4837
    %v7349 = vpop.f32.mrf.mxu0
    %v7350 = vadd.f32 %v7253, %v7349
    %v7351 = vpop.f32.mrf.mxu0
    %v7352 = vpop.f32.mrf.mxu0
    %v7353 = vadd.f32 %v7256, %v7352
    %v7354 = vpop.f32.mrf.mxu0
    %7355 = vdwg.mxu0
    %7356 = vmatprep.subr.bf16.mxu0 0
    %7357 = vmatpush1.bf16.msra.mxu0 %v6169
    %7358 = vmatprep.subr.bf16.mxu0 0
    %7359 = vmatpush1.bf16.msra.mxu0 %v6168
    %7360 = vmatprep.subr.bf16.mxu0 0
    %7361 = vmatpush1.bf16.msra.mxu0 %v6167
    %7362 = vmatprep.subr.bf16.mxu0 0
    %7363 = vmatpush1.bf16.msra.mxu0 %v6166
    %7364 = vmatprep.subr.bf16.mxu0 0
    %7365 = vmatpush1.bf16.msra.mxu0 %v6165
    %7366 = vmatprep.subr.bf16.mxu0 0
    %7367 = vmatpush1.bf16.msra.mxu0 %v6164
    %7368 = vmatprep.subr.bf16.mxu0 0
    %7369 = vmatpush1.bf16.msra.mxu0 %v6163
    %7370 = vmatprep.subr.bf16.mxu0 0
    %7371 = vmatpush1.bf16.msra.mxu0 %v6162
    %7372 = vmatprep.subr.bf16.mxu0 0
    %7373 = vmatpush2.bf16.msra.mxu0 %v6177
    %7374 = vmatprep.subr.bf16.mxu0 0
    %7375 = vmatpush2.bf16.msra.mxu0 %v6176
    %7376 = vmatprep.subr.bf16.mxu0 0
    %7377 = vmatpush2.bf16.msra.mxu0 %v6175
    %7378 = vmatprep.subr.bf16.mxu0 0
    %7379 = vmatpush2.bf16.msra.mxu0 %v6174
    %7380 = vmatprep.subr.bf16.mxu0 0
    %7381 = vmatpush2.bf16.msra.mxu0 %v6173
    %7382 = vmatprep.subr.bf16.mxu0 0
    %7383 = vmatpush2.bf16.msra.mxu0 %v6172
    %7384 = vmatprep.subr.bf16.mxu0 0
    %7385 = vmatpush2.bf16.msra.mxu0 %v6171
    %7386 = vmatprep.subr.bf16.mxu0 0
    %7387 = vmatpush2.bf16.msra.mxu0 %v6170
    %7388 = vmatprep.mubr.bf16.mxu0 %v4672
    %7389 = vmatmul.mubr.bf16.gmra.mxu0 %v4671
    %v7390 = vpop.f32.mrf.mxu0
    %v7391 = vadd.f32 %v7294, %v7390
    %v7392 = vpop.f32.mrf.mxu0
    %v7393 = vpop.f32.mrf.mxu0
    %v7394 = vadd.f32 %v7297, %v7393
    %v7395 = vpop.f32.mrf.mxu0
    %7396 = vmatprep.mubr.bf16.mxu0 %v4696
    %7397 = vmatmul.mubr.bf16.gmra.mxu0 %v4695
    %v7398 = vpop.f32.mrf.mxu0
    %v7399 = vadd.f32 %v7302, %v7398
    %v7400 = vpop.f32.mrf.mxu0
    %v7401 = vpop.f32.mrf.mxu0
    %v7402 = vadd.f32 %v7305, %v7401
    %v7403 = vpop.f32.mrf.mxu0
    %7404 = vmatprep.mubr.bf16.mxu0 %v4720
    %7405 = vmatmul.mubr.bf16.gmra.mxu0 %v4719
    %v7406 = vpop.f32.mrf.mxu0
    %v7407 = vadd.f32 %v7310, %v7406
    %v7408 = vpop.f32.mrf.mxu0
    %v7409 = vpop.f32.mrf.mxu0
    %v7410 = vadd.f32 %v7313, %v7409
    %v7411 = vpop.f32.mrf.mxu0
    %7412 = vmatprep.mubr.bf16.mxu0 %v4744
    %7413 = vmatmul.mubr.bf16.gmra.mxu0 %v4743
    %v7414 = vpop.f32.mrf.mxu0
    %v7415 = vadd.f32 %v7318, %v7414
    %v7416 = vpop.f32.mrf.mxu0
    %v7417 = vpop.f32.mrf.mxu0
    %v7418 = vadd.f32 %v7321, %v7417
    %v7419 = vpop.f32.mrf.mxu0
    %7420 = vmatprep.mubr.bf16.mxu0 %v4768
    %7421 = vmatmul.mubr.bf16.gmra.mxu0 %v4767
    %v7422 = vpop.f32.mrf.mxu0
    %v7423 = vadd.f32 %v7326, %v7422
    %v7424 = vpop.f32.mrf.mxu0
    %v7425 = vpop.f32.mrf.mxu0
    %v7426 = vadd.f32 %v7329, %v7425
    %v7427 = vpop.f32.mrf.mxu0
    %7428 = vmatprep.mubr.bf16.mxu0 %v4792
    %7429 = vmatmul.mubr.bf16.gmra.mxu0 %v4791
    %v7430 = vpop.f32.mrf.mxu0
    %v7431 = vadd.f32 %v7334, %v7430
    %v7432 = vpop.f32.mrf.mxu0
    %v7433 = vpop.f32.mrf.mxu0
    %v7434 = vadd.f32 %v7337, %v7433
    %v7435 = vpop.f32.mrf.mxu0
    %7436 = vmatprep.mubr.bf16.mxu0 %v4816
    %7437 = vmatmul.mubr.bf16.gmra.mxu0 %v4815
    %v7438 = vpop.f32.mrf.mxu0
    %v7439 = vadd.f32 %v7342, %v7438
    %v7440 = vpop.f32.mrf.mxu0
    %v7441 = vpop.f32.mrf.mxu0
    %v7442 = vadd.f32 %v7345, %v7441
    %v7443 = vpop.f32.mrf.mxu0
    %7444 = vmatprep.mubr.bf16.mxu0 %v4840
    %7445 = vmatmul.mubr.bf16.gmra.mxu0 %v4839
    %v7446 = vpop.f32.mrf.mxu0
    %v7447 = vadd.f32 %v7350, %v7446
    %v7448 = vpop.f32.mrf.mxu0
    %v7449 = vpop.f32.mrf.mxu0
    %v7450 = vadd.f32 %v7353, %v7449
    %v7451 = vpop.f32.mrf.mxu0
    %7452 = vdwg.mxu0
    %7453 = vmatprep.subr.bf16.mxu0 0
    %7454 = vmatpush1.bf16.msra.mxu0 %v6185
    %7455 = vmatprep.subr.bf16.mxu0 0
    %7456 = vmatpush1.bf16.msra.mxu0 %v6184
    %7457 = vmatprep.subr.bf16.mxu0 0
    %7458 = vmatpush1.bf16.msra.mxu0 %v6183
    %7459 = vmatprep.subr.bf16.mxu0 0
    %7460 = vmatpush1.bf16.msra.mxu0 %v6182
    %7461 = vmatprep.subr.bf16.mxu0 0
    %7462 = vmatpush1.bf16.msra.mxu0 %v6181
    %7463 = vmatprep.subr.bf16.mxu0 0
    %7464 = vmatpush1.bf16.msra.mxu0 %v6180
    %7465 = vmatprep.subr.bf16.mxu0 0
    %7466 = vmatpush1.bf16.msra.mxu0 %v6179
    %7467 = vmatprep.subr.bf16.mxu0 0
    %7468 = vmatpush1.bf16.msra.mxu0 %v6178
    %7469 = vmatprep.subr.bf16.mxu0 0
    %7470 = vmatpush2.bf16.msra.mxu0 %v6193
    %7471 = vmatprep.subr.bf16.mxu0 0
    %7472 = vmatpush2.bf16.msra.mxu0 %v6192
    %7473 = vmatprep.subr.bf16.mxu0 0
    %7474 = vmatpush2.bf16.msra.mxu0 %v6191
    %7475 = vmatprep.subr.bf16.mxu0 0
    %7476 = vmatpush2.bf16.msra.mxu0 %v6190
    %7477 = vmatprep.subr.bf16.mxu0 0
    %7478 = vmatpush2.bf16.msra.mxu0 %v6189
    %7479 = vmatprep.subr.bf16.mxu0 0
    %7480 = vmatpush2.bf16.msra.mxu0 %v6188
    %7481 = vmatprep.subr.bf16.mxu0 0
    %7482 = vmatpush2.bf16.msra.mxu0 %v6187
    %7483 = vmatprep.subr.bf16.mxu0 0
    %7484 = vmatpush2.bf16.msra.mxu0 %v6186
    %7485 = vmatprep.mubr.bf16.mxu0 %v4674
    %7486 = vmatmul.mubr.bf16.gmra.mxu0 %v4673
    %v7487 = vpop.f32.mrf.mxu0
    %v7488 = vadd.f32 %v7391, %v7487
    %v7489 = vpop.f32.mrf.mxu0
    %v7490 = vpop.f32.mrf.mxu0
    %v7491 = vadd.f32 %v7394, %v7490
    %v7492 = vpop.f32.mrf.mxu0
    %7493 = vmatprep.mubr.bf16.mxu0 %v4698
    %7494 = vmatmul.mubr.bf16.gmra.mxu0 %v4697
    %v7495 = vpop.f32.mrf.mxu0
    %v7496 = vadd.f32 %v7399, %v7495
    %v7497 = vpop.f32.mrf.mxu0
    %v7498 = vpop.f32.mrf.mxu0
    %v7499 = vadd.f32 %v7402, %v7498
    %v7500 = vpop.f32.mrf.mxu0
    %7501 = vmatprep.mubr.bf16.mxu0 %v4722
    %7502 = vmatmul.mubr.bf16.gmra.mxu0 %v4721
    %v7503 = vpop.f32.mrf.mxu0
    %v7504 = vadd.f32 %v7407, %v7503
    %v7505 = vpop.f32.mrf.mxu0
    %v7506 = vpop.f32.mrf.mxu0
    %v7507 = vadd.f32 %v7410, %v7506
    %v7508 = vpop.f32.mrf.mxu0
    %7509 = vmatprep.mubr.bf16.mxu0 %v4746
    %7510 = vmatmul.mubr.bf16.gmra.mxu0 %v4745
    %v7511 = vpop.f32.mrf.mxu0
    %v7512 = vadd.f32 %v7415, %v7511
    %v7513 = vpop.f32.mrf.mxu0
    %v7514 = vpop.f32.mrf.mxu0
    %v7515 = vadd.f32 %v7418, %v7514
    %v7516 = vpop.f32.mrf.mxu0
    %7517 = vmatprep.mubr.bf16.mxu0 %v4770
    %7518 = vmatmul.mubr.bf16.gmra.mxu0 %v4769
    %v7519 = vpop.f32.mrf.mxu0
    %v7520 = vadd.f32 %v7423, %v7519
    %v7521 = vpop.f32.mrf.mxu0
    %v7522 = vpop.f32.mrf.mxu0
    %v7523 = vadd.f32 %v7426, %v7522
    %v7524 = vpop.f32.mrf.mxu0
    %7525 = vmatprep.mubr.bf16.mxu0 %v4794
    %7526 = vmatmul.mubr.bf16.gmra.mxu0 %v4793
    %v7527 = vpop.f32.mrf.mxu0
    %v7528 = vadd.f32 %v7431, %v7527
    %v7529 = vpop.f32.mrf.mxu0
    %v7530 = vpop.f32.mrf.mxu0
    %v7531 = vadd.f32 %v7434, %v7530
    %v7532 = vpop.f32.mrf.mxu0
    %7533 = vmatprep.mubr.bf16.mxu0 %v4818
    %7534 = vmatmul.mubr.bf16.gmra.mxu0 %v4817
    %v7535 = vpop.f32.mrf.mxu0
    %v7536 = vadd.f32 %v7439, %v7535
    %v7537 = vpop.f32.mrf.mxu0
    %v7538 = vpop.f32.mrf.mxu0
    %v7539 = vadd.f32 %v7442, %v7538
    %v7540 = vpop.f32.mrf.mxu0
    %7541 = vmatprep.mubr.bf16.mxu0 %v4842
    %7542 = vmatmul.mubr.bf16.gmra.mxu0 %v4841
    %v7543 = vpop.f32.mrf.mxu0
    %v7544 = vadd.f32 %v7447, %v7543
    %v7545 = vpop.f32.mrf.mxu0
    %v7546 = vpop.f32.mrf.mxu0
    %v7547 = vadd.f32 %v7450, %v7546
    %v7548 = vpop.f32.mrf.mxu0
    %7549 = vdwg.mxu0
    %v7550 = vxor.u32 %v7488, 2147483648
    %v7551 = vxor.u32 %v7491, 2147483648
    %v7552 = vxor.u32 %v7496, 2147483648
    %v7553 = vxor.u32 %v7499, 2147483648
    %v7554 = vxor.u32 %v7504, 2147483648
    %v7555 = vxor.u32 %v7507, 2147483648
    %v7556 = vxor.u32 %v7512, 2147483648
    %v7557 = vxor.u32 %v7515, 2147483648
    %v7558 = vxor.u32 %v7520, 2147483648
    %v7559 = vxor.u32 %v7523, 2147483648
    %v7560 = vxor.u32 %v7528, 2147483648
    %v7561 = vxor.u32 %v7531, 2147483648
    %v7562 = vxor.u32 %v7536, 2147483648
    %v7563 = vxor.u32 %v7539, 2147483648
    %v7564 = vxor.u32 %v7544, 2147483648
    %v7565 = vxor.u32 %v7547, 2147483648
    %v7566 = vmul.f32 %v7550, 1.442695
    %v7567 = vpow.pop %v7566
    %v7568 = vmul.f32 %v7551, 1.442695
    %v7569 = vpow.pop %v7568
    %v7570 = vmul.f32 %v7552, 1.442695
    %v7571 = vpow.pop %v7570
    %v7572 = vmul.f32 %v7553, 1.442695
    %v7573 = vpow.pop %v7572
    %v7574 = vmul.f32 %v7554, 1.442695
    %v7575 = vpow.pop %v7574
    %v7576 = vmul.f32 %v7555, 1.442695
    %v7577 = vpow.pop %v7576
    %v7578 = vmul.f32 %v7556, 1.442695
    %v7579 = vpow.pop %v7578
    %v7580 = vmul.f32 %v7557, 1.442695
    %v7581 = vpow.pop %v7580
    %v7582 = vmul.f32 %v7558, 1.442695
    %v7583 = vpow.pop %v7582
    %v7584 = vmul.f32 %v7559, 1.442695
    %v7585 = vpow.pop %v7584
    %v7586 = vmul.f32 %v7560, 1.442695
    %v7587 = vpow.pop %v7586
    %v7588 = vmul.f32 %v7561, 1.442695
    %v7589 = vpow.pop %v7588
    %v7590 = vmul.f32 %v7562, 1.442695
    %v7591 = vpow.pop %v7590
    %v7592 = vmul.f32 %v7563, 1.442695
    %v7593 = vpow.pop %v7592
    %v7594 = vmul.f32 %v7564, 1.442695
    %v7595 = vpow.pop %v7594
    %v7596 = vmul.f32 %v7565, 1.442695
    %v7597 = vpow.pop %v7596
    %v7598 = vadd.f32 %v7567, 1.0
    %v7599 = vadd.f32 %v7569, 1.0
    %v7600 = vadd.f32 %v7571, 1.0
    %v7601 = vadd.f32 %v7573, 1.0
    %v7602 = vadd.f32 %v7575, 1.0
    %v7603 = vadd.f32 %v7577, 1.0
    %v7604 = vadd.f32 %v7579, 1.0
    %v7605 = vadd.f32 %v7581, 1.0
    %v7606 = vadd.f32 %v7583, 1.0
    %v7607 = vadd.f32 %v7585, 1.0
    %v7608 = vadd.f32 %v7587, 1.0
    %v7609 = vadd.f32 %v7589, 1.0
    %v7610 = vadd.f32 %v7591, 1.0
    %v7611 = vadd.f32 %v7593, 1.0
    %v7612 = vadd.f32 %v7595, 1.0
    %v7613 = vadd.f32 %v7597, 1.0
    %v7614 = vrcp.pop %v7598
    %v7615 = vmul.f32 1.0, %v7614
    %v7616 = vrcp.pop %v7599
    %v7617 = vmul.f32 1.0, %v7616
    %v7618 = vrcp.pop %v7600
    %v7619 = vmul.f32 1.0, %v7618
    %v7620 = vrcp.pop %v7601
    %v7621 = vmul.f32 1.0, %v7620
    %v7622 = vrcp.pop %v7602
    %v7623 = vmul.f32 1.0, %v7622
    %v7624 = vrcp.pop %v7603
    %v7625 = vmul.f32 1.0, %v7624
    %v7626 = vrcp.pop %v7604
    %v7627 = vmul.f32 1.0, %v7626
    %v7628 = vrcp.pop %v7605
    %v7629 = vmul.f32 1.0, %v7628
    %v7630 = vrcp.pop %v7606
    %v7631 = vmul.f32 1.0, %v7630
    %v7632 = vrcp.pop %v7607
    %v7633 = vmul.f32 1.0, %v7632
    %v7634 = vrcp.pop %v7608
    %v7635 = vmul.f32 1.0, %v7634
    %v7636 = vrcp.pop %v7609
    %v7637 = vmul.f32 1.0, %v7636
    %v7638 = vrcp.pop %v7610
    %v7639 = vmul.f32 1.0, %v7638
    %v7640 = vrcp.pop %v7611
    %v7641 = vmul.f32 1.0, %v7640
    %v7642 = vrcp.pop %v7612
    %v7643 = vmul.f32 1.0, %v7642
    %v7644 = vrcp.pop %v7613
    %v7645 = vmul.f32 1.0, %v7644
    %7646 = vst [vmem:[#allocation6] sm:$0xff] %v7615
    %7647 = vst [vmem:[#allocation6 + $0x8] sm:$0xff] %v7617
    %7648 = vst [vmem:[#allocation6 + $0x10] sm:$0xff] %v7619
    %7649 = vst [vmem:[#allocation6 + $0x18] sm:$0xff] %v7621
    %7650 = vst [vmem:[#allocation6 + $0x20] sm:$0xff] %v7623
    %7651 = vst [vmem:[#allocation6 + $0x28] sm:$0xff] %v7625
    %7652 = vst [vmem:[#allocation6 + $0x30] sm:$0xff] %v7627
    %7653 = vst [vmem:[#allocation6 + $0x38] sm:$0xff] %v7629
    %7654 = vst [vmem:[#allocation6 + $0x40] sm:$0xff] %v7631
    %7655 = vst [vmem:[#allocation6 + $0x48] sm:$0xff] %v7633
    %7656 = vst [vmem:[#allocation6 + $0x50] sm:$0xff] %v7635
    %7657 = vst [vmem:[#allocation6 + $0x58] sm:$0xff] %v7637
    %7658 = vst [vmem:[#allocation6 + $0x60] sm:$0xff] %v7639
    %7659 = vst [vmem:[#allocation6 + $0x68] sm:$0xff] %v7641
    %7660 = vst [vmem:[#allocation6 + $0x70] sm:$0xff] %v7643
    %7661 = vst [vmem:[#allocation6 + $0x78] sm:$0xff] %v7645
    // Predicated region
    $region22: #{fusionnet_forward.1} parent=1 // pred_check
      _
    $region23: #{fusionnet_forward.1} parent=1 // pred_check_branch
      %7663 = sbr.rel (0) target = $region25
    $region24: #{fusionnet_forward.1} parent=1 // pred_region
      // Predicated region
      $region26: #{fusionnet_forward.1} parent=24 // pred_check
        _
      $region27: #{fusionnet_forward.1} parent=24 // pred_check_branch
        %7665 = sbr.rel (0) target = $region29
      $region28: #{fusionnet_forward.1} parent=24 // pred_region
        // Predicated region
        $region30: #{fusionnet_forward.1} parent=28 // pred_check
          _
        $region31: #{fusionnet_forward.1} parent=28 // pred_check_branch
          %7667 = sbr.rel target = $region33
        $region32: #{fusionnet_forward.1} parent=28 // pred_region
          // Predicated region
          $region45: #{fusionnet_forward.1} parent=32 // pred_check
            _
          $region46: #{fusionnet_forward.1} parent=32 // pred_check_branch
            %7683 = sbr.rel (0) target = $region48
          $region47: #{fusionnet_forward.1} parent=32 // pred_region
            %s7685 = ssub.s32 4, 1
            loop: start=0, step=1, limit=1
            $region49: #{fusionnet_forward.1} parent=47 // loop_pre_header
              _
            $region50: #{fusionnet_forward.1} parent=47 // loop_header
              %s7687 = sphi 0, %s7691
              %p7688 = scmp.ge.s32.totalorder %s7687, 1
              %s7692 = sphi [#allocation6], [#allocation6]
              %s7693 = sphi %s3, %s3
            $region51: #{fusionnet_forward.1} parent=47 // loop_header_branch
              %7690 = sbr.rel (%p7688) target = $region55
            $region52: #{fusionnet_forward.1} parent=47 // loop_body
              %v7694 = vld [vmem:[%s7692] sm:%s7685]
              %7695 = vst [vmem:[%s7693] sm:%s7685] %v7694
            $region53: #{fusionnet_forward.1} parent=47 // loop_footer
              %s7691 = sadd.s32 1, %s7687
            $region54: #{fusionnet_forward.1} parent=47 // loop_footer_branch
              %7686 = sbr.rel target = $region50
            $region55: #{fusionnet_forward.1} parent=47 // loop_exit
              _
          $region48: #{fusionnet_forward.1} parent=32 // pred_fallthru
            _
        $region33: #{fusionnet_forward.1} parent=28 // pred_fallthru
          _
        // Predicated region
        $region34: #{fusionnet_forward.1} parent=28 // pred_check
          _
        $region35: #{fusionnet_forward.1} parent=28 // pred_check_branch
          %7669 = sbr.rel (0) target = $region37
        $region36: #{fusionnet_forward.1} parent=28 // pred_region
          %s7671 = ssub.s32 4, 1
          loop: start=0, step=1, limit=1
          $region38: #{fusionnet_forward.1} parent=36 // loop_pre_header
            _
          $region39: #{fusionnet_forward.1} parent=36 // loop_header
            %s7673 = sphi 0, %s7677
            %p7674 = scmp.ge.s32.totalorder %s7673, 1
            %s7678 = sphi [#allocation6], [#allocation6]
            %s7679 = sphi %s3, %s3
          $region40: #{fusionnet_forward.1} parent=36 // loop_header_branch
            %7676 = sbr.rel (%p7674) target = $region44
          $region41: #{fusionnet_forward.1} parent=36 // loop_body
            %v7680 = vld [vmem:[%s7678] sm:%s7671]
            %7681 = vst [vmem:[%s7679] sm:%s7671] %v7680
          $region42: #{fusionnet_forward.1} parent=36 // loop_footer
            %s7677 = sadd.s32 1, %s7673
          $region43: #{fusionnet_forward.1} parent=36 // loop_footer_branch
            %7672 = sbr.rel target = $region39
          $region44: #{fusionnet_forward.1} parent=36 // loop_exit
            _
        $region37: #{fusionnet_forward.1} parent=28 // pred_fallthru
          _
      $region29: #{fusionnet_forward.1} parent=24 // pred_fallthru
        _
      %7696 = vnop
    $region25: #{fusionnet_forward.1} parent=1 // pred_fallthru
      _
    // Predicated region
    $region56: #{fusionnet_forward.1} parent=1 // pred_check
      _
    $region57: #{fusionnet_forward.1} parent=1 // pred_check_branch
      %7698 = sbr.rel (0) target = $region59
    $region58: #{fusionnet_forward.1} parent=1 // pred_region
      _
    $region59: #{fusionnet_forward.1} parent=1 // pred_fallthru
      _
    %7699 = vsyncpa [#allocation3], 1
    %7700 = vsyncpa [#allocation5], 1

</llo_original>
